<compile_context>
chip_gen: v5e
topology: v5e:2x2
jax: 0.10.0
libtpu: 0.0.40
codegen_flags: <defaults>
</compile_context>

<pallas_src>
import math

import jax
import jax.numpy as jnp
import numpy as np
from jax.experimental import pallas as pl
from jax.experimental.pallas import tpu as pltpu

# ----------------------------- configuration -----------------------------
B = 2          # batch
T = 8          # text sequence length
D = 128        # language hidden dim
D_VIS = 128    # visual hidden dim
H = 4          # attention heads (both blocks)
DH = 32        # head dim (H * DH == D)
T_IMG = 2      # number of media
N_VIS = 4      # visual tokens per media
M = T_IMG * N_VIS
BT = B * T     # flattened text rows
BM = B * M     # flattened media rows
XATTN_FF = 4 * D   # GatedCrossAttention FeedForward inner dim (ff_mult=4)
MLP_FF = 2 * D     # decoder SwiGLU inner dim
EPS_LN = 1e-5
EPS_RMS = 1e-6
NEG_INF = -1e30
BF = jnp.bfloat16

assert H * DH == D
assert BM == BT  # mask packing below stacks the (BT,BM) and (BT,BT) biases into one buffer

# weight-slab A column offsets: every (D, n) weight, bf16, sliced at 128-lane multiples
XWQ = 0                      # xattn W_q  (softmax scale folded in)          width D
XWKV = XWQ + D               # xattn W_k | W_v                               width 2D
XWO = XWKV + 2 * D           # xattn W_o  (tanh(attn_gate) folded in)        width D
XWFF1 = XWO + D              # xattn FF first linear                         width XATTN_FF
ROPE_P = XWFF1 + XATTN_FF    # ±1 block-diag rotate-half permutation         width D
DWQKV = ROPE_P + D           # decoder W_q*scale | W_k | W_v                 width 3D
DWO = DWQKV + 3 * D          # decoder W_o                                   width D
DWGU = DWO + D               # decoder W_gate | W_up                         width 2*MLP_FF
SLAB_A_COLS = DWGU + 2 * MLP_FF

# weight-slab B row offsets: every (n, D) weight, bf16, sliced at 8-sublane multiples
XWFF2 = 0                    # xattn FF second linear (tanh(ff_gate) folded) height XATTN_FF
DWD = XWFF2 + XATTN_FF       # decoder down projection                       height MLP_FF
SLAB_B_ROWS = DWD + MLP_FF

# packed norm-parameter rows inside the (8, D) norms buffer
LN1G, LN1B, LN2G, LN2B, RMS1, RMS2 = 0, 1, 2, 3, 4, 5


# ----------------------------- kernel helpers -----------------------------
def _mm(a, b):
    """MXU matmul, f32 accumulation (operands already bf16)."""
    return jnp.dot(a, b, preferred_element_type=jnp.float32)


def _qk(q, k):
    """(R, DH) x (S, DH) -> (R, S) scores, contracting the head dim (bf16 in, f32 out)."""
    return jax.lax.dot_general(q, k, (((1,), (1,)), ((), ())),
                               preferred_element_type=jnp.float32)


# ----------------------------- fused Pallas kernel -----------------------------
def flamingo_layer_kernel(lang_ref, vis_ref, masks_ref, cs_ref, norms_ref,
                          wa_ref, wb_ref, out_ref):
    """Whole FlamingoLayer forward on the flattened (B*T, D) residual stream."""
    x = lang_ref[...]                                   # (BT, D)  f32 residual stream
    vis = vis_ref[...].astype(BF)                       # (BM, D_VIS) cast once for the MXU
    xbias = masks_ref[0:BT, :]                          # (BT, BM)  0 / -1e30 cross-attn bias
    dbias = masks_ref[BT:2 * BT, :]                     # (BT, BT)  0 / -1e30 causal+pad bias
    mkeep = masks_ref[2 * BT:3 * BT, 0:1]               # (BT, 1)   0 for rows with no media yet
    cos = cs_ref[0:BT, :]                               # (BT, D)   pre-tiled per batch/head
    sin = cs_ref[BT:2 * BT, :]

    def layer_norm(v, g_row, b_row):
        mu = jnp.mean(v, axis=-1, keepdims=True)
        var = jnp.mean((v - mu) ** 2, axis=-1, keepdims=True)
        return ((v - mu) * jax.lax.rsqrt(var + EPS_LN)
                * norms_ref[g_row:g_row + 1, :] + norms_ref[b_row:b_row + 1, :]).astype(BF)

    def rms_norm(v, g_row):
        return (v * jax.lax.rsqrt(jnp.mean(v * v, axis=-1, keepdims=True) + EPS_RMS)
                * norms_ref[g_row:g_row + 1, :]).astype(BF)

    def heads_attend(q, k, v, bias, wo_col):
        """Per-head softmax attention accumulated straight through W_O (no concatenation)."""
        acc = jnp.zeros((BT, D), jnp.float32)
        for h in range(H):
            sl = slice(h * DH, (h + 1) * DH)
            s = _qk(q[:, sl], k[:, sl]) + bias          # scale already folded into W_q
            s = s - jnp.max(s, axis=-1, keepdims=True)
            p = jnp.exp(s)
            p = (p * pl.reciprocal(jnp.sum(p, axis=-1, keepdims=True), approx=True)).astype(BF)
            ph = _mm(p, v[:, sl]).astype(BF)                           # (BT, DH)
            acc = acc + _mm(ph, wa_ref[sl, wo_col:wo_col + D])         # (BT, D) fold through W_O
        return acc

    # ===================== GatedCrossAttentionBlock =====================
    # masked cross-attention (tanh(attn_gate) is folded into W_O host-side)
    xn = layer_norm(x, LN1G, LN1B)
    q = _mm(xn, wa_ref[:, XWQ:XWQ + D]).astype(BF)                     # (BT, D)
    kv = _mm(vis, wa_ref[:, XWKV:XWKV + 2 * D])                        # (BM, 2D) fused K|V
    k = kv[:, :D].astype(BF)
    v = kv[:, D:].astype(BF)
    x = x + mkeep * heads_attend(q, k, v, xbias, XWO)                  # zero rows with no media

    # gated FeedForward: LN -> Linear -> GELU -> Linear (tanh(ff_gate) folded into W_ff2)
    xn2 = layer_norm(x, LN2G, LN2B)
    hff = jax.nn.gelu(_mm(xn2, wa_ref[:, XWFF1:XWFF1 + XATTN_FF])).astype(BF)
    x = x + _mm(hff, wb_ref[XWFF2:XWFF2 + XATTN_FF, :])

    # ========== Decoder layer: RMSNorm -> RoPE causal attn -> RMSNorm -> SwiGLU ==========
    h1 = rms_norm(x, RMS1)
    qkv = _mm(h1, wa_ref[:, DWQKV:DWQKV + 3 * D])                      # (BT, 3D) fused Q|K|V
    rope_p = wa_ref[:, ROPE_P:ROPE_P + D]                              # ±1 rotate-half perm (MXU)
    qr = qkv[:, :D].astype(BF)
    kr = qkv[:, D:2 * D].astype(BF)
    vv = qkv[:, 2 * D:].astype(BF)
    qr = (qr * cos + _mm(qr, rope_p) * sin).astype(BF)                 # rotate-half via matmul
    kr = (kr * cos + _mm(kr, rope_p) * sin).astype(BF)
    x = x + heads_attend(qr, kr, vv, dbias, DWO)

    h2 = rms_norm(x, RMS2)
    gu = _mm(h2, wa_ref[:, DWGU:DWGU + 2 * MLP_FF])                    # (BT, 2*MLP_FF) gate|up
    act = (jax.nn.silu(gu[:, :MLP_FF]) * gu[:, MLP_FF:]).astype(BF)
    out_ref[...] = x + _mm(act, wb_ref[DWD:DWD + MLP_FF, :])


# ----------------------------- host-side packing -----------------------------
def rope_tables():
    inv_freq = 1.0 / (10000.0 ** (jnp.arange(0, DH, 2, dtype=jnp.float32) / DH))
    pos = jnp.arange(T, dtype=jnp.float32)
    freqs = pos[:, None] * inv_freq[None, :]
    emb = jnp.concatenate([freqs, freqs], axis=-1)         # (T, DH)
    return jnp.cos(emb), jnp.sin(emb)


def rope_perm():
    """±1 block-diagonal (D, D) permutation P so that (t @ P) == rotate_half(t) per head."""
    p = np.zeros((D, D), np.float32)
    half = DH // 2
    for h in range(H):
        base = h * DH
        for j in range(half):
            p[base + half + j, base + j] = -1.0    # out[:, base+j]      = -t[:, base+half+j]
            p[base + j, base + half + j] = 1.0     # out[:, base+half+j] =  t[:, base+j]
    return jnp.asarray(p, jnp.float32)


def pack_weights(params):
    """Fold gates/softmax scale into the weights and pack everything into two bf16 slabs."""
    px, pd = params["xattn"], params["decoder"]
    scale = DH ** -0.5
    attn_g = jnp.tanh(px["attn_gate"].astype(jnp.float32))   # (1,1) scalar gates
    ff_g = jnp.tanh(px["ff_gate"].astype(jnp.float32))
    f32 = lambda w: w.astype(jnp.float32)

    slab_a = jnp.concatenate([
        f32(px["wq"]) * scale,                                # XWQ   (scale folded into q)
        f32(px["wk"]), f32(px["wv"]),                         # XWKV
        f32(px["wo"]) * attn_g,                               # XWO   (tanh(attn_gate) folded)
        f32(px["wff1"]),                                      # XWFF1
        rope_perm(),                                          # ROPE_P
        f32(pd["wq"]) * scale, f32(pd["wk"]), f32(pd["wv"]),  # DWQKV (scale folded into q)
        f32(pd["wo"]),                                        # DWO
        f32(pd["wg"]), f32(pd["wu"]),                         # DWGU
    ], axis=1).astype(BF)
    assert slab_a.shape == (D, SLAB_A_COLS)

    slab_b = jnp.concatenate([
        f32(px["wff2"]) * ff_g,                               # XWFF2 (tanh(ff_gate) folded)
        f32(pd["wd"]),                                        # DWD
    ], axis=0).astype(BF)
    assert slab_b.shape == (SLAB_B_ROWS, D)

    norms = jnp.concatenate([px["ln1_g"], px["ln1_b"], px["ln2_g"], px["ln2_b"],
                             pd["rms1"], pd["rms2"],
                             jnp.zeros((2, D), jnp.float32)], axis=0)   # (8, D)
    return slab_a, slab_b, norms


def build_masks(attention_mask, media_locations):
    """Pack both attention biases and the no-media row mask into one (3*BT, BM) buffer."""
    tt = jnp.cumsum(media_locations.astype(jnp.int32), axis=-1).reshape(BT)    # media seen so far
    media_t = jnp.repeat(jnp.arange(1, T_IMG + 1, dtype=jnp.int32), N_VIS)     # (M,), 1-based
    rowb = jnp.arange(BT) // T
    colb = jnp.arange(BM) // M
    attend = (rowb[:, None] == colb[None, :]) & (tt[:, None] == jnp.tile(media_t, B)[None, :])
    xbias = jnp.where(attend, 0.0, NEG_INF).astype(jnp.float32)                # (BT, BM)

    r = jnp.arange(BT)
    c = jnp.arange(BT)
    keep = ((r[:, None] // T) == (c[None, :] // T)) \
        & ((c[None, :] % T) <= (r[:, None] % T)) \
        & (attention_mask.astype(jnp.float32).reshape(BT)[None, :] > 0.5)
    dbias = jnp.where(keep, 0.0, NEG_INF).astype(jnp.float32)                  # (BT, BT)

    mkeep = jnp.broadcast_to((tt > 0).astype(jnp.float32)[:, None], (BT, BM))  # (BT, BM)
    return jnp.concatenate([xbias, dbias, mkeep], axis=0)                      # (3*BT, BM)


# ----------------------------- wrapper -----------------------------
def flamingo_layer_forward(lang_x, attention_mask, vis_x, media_locations, params):
    """FlamingoLayer.forward: gated cross-attention conditioning, then decoder layer.

    (HF decoder layers return a tuple; here we return the hidden states only.)
    """
    slab_a, slab_b, norms = pack_weights(params)
    masks = build_masks(attention_mask, media_locations)
    cos, sin = rope_tables()
    cos_sin = jnp.concatenate([jnp.tile(cos, (B, H)), jnp.tile(sin, (B, H))], axis=0)  # (2BT, D)

    inputs = (lang_x.reshape(BT, D),
              vis_x.reshape(BM, D_VIS).astype(jnp.float32),
              masks, cos_sin, norms, slab_a, slab_b)

    vmem = pl.BlockSpec(memory_space=pltpu.MemorySpace.VMEM)
    out = pl.pallas_call(
        flamingo_layer_kernel,
        out_shape=jax.ShapeDtypeStruct((BT, D), jnp.float32),
        in_specs=[vmem] * len(inputs),
        out_specs=vmem,
    )(*inputs)
    return out.reshape(B, T, D)


# ----------------------------- pure-JAX reference -----------------------------
def ref_gated_xattn(x, vis, text_time, media_time, p):
    mu = x.mean(-1, keepdims=True)
    var = ((x - mu) ** 2).mean(-1, keepdims=True)
    xn = (x - mu) * jax.lax.rsqrt(var + EPS_LN) * p["ln1_g"] + p["ln1_b"]
    q = xn @ p["wq"]
    k = vis @ p["wk"]
    v = vis @ p["wv"]
    qh = q.reshape(B, T, H, DH).transpose(0, 2, 1, 3)
    kh = k.reshape(B, M, H, DH).transpose(0, 2, 1, 3)
    vh = v.reshape(B, M, H, DH).transpose(0, 2, 1, 3)
    s = jnp.einsum("bhtd,bhsd->bhts", qh * DH ** -0.5, kh)
    attend = (text_time == media_time)[:, None]                       # (B,1,T,M)
    s = jnp.where(attend, s, NEG_INF)
    s = s - s.max(-1, keepdims=True)
    pr = jnp.exp(s)
    pr = pr / pr.sum(-1, keepdims=True)
    pr = jnp.where((text_time == 0)[:, None], 0.0, pr)
    o = jnp.einsum("bhts,bhsd->bhtd", pr, vh).transpose(0, 2, 1, 3).reshape(B, T, H * DH)
    x = x + jnp.tanh(p["attn_gate"]) * (o @ p["wo"])
    mu2 = x.mean(-1, keepdims=True)
    var2 = ((x - mu2) ** 2).mean(-1, keepdims=True)
    xn2 = (x - mu2) * jax.lax.rsqrt(var2 + EPS_LN) * p["ln2_g"] + p["ln2_b"]
    ff = jax.nn.gelu(xn2 @ p["wff1"]) @ p["wff2"]
    return x + jnp.tanh(p["ff_gate"]) * ff


def ref_decoder(x, attention_mask, cos, sin, p):
    am = attention_mask.astype(jnp.float32).reshape(B, 1, T)
    h = x * jax.lax.rsqrt(jnp.mean(x * x, -1, keepdims=True) + EPS_RMS) * p["rms1"]

    def split(t):
        return t.reshape(B, T, H, DH).transpose(0, 2, 1, 3)

    qh, kh, vh = split(h @ p["wq"]), split(h @ p["wk"]), split(h @ p["wv"])

    def rope(t):
        t1, t2 = t[..., : DH // 2], t[..., DH // 2:]
        rt = jnp.concatenate([-t2, t1], axis=-1)
        return t * cos[None, None] + rt * sin[None, None]

    qh, kh = rope(qh), rope(kh)
    s = jnp.einsum("bhtd,bhsd->bhts", qh, kh) * DH ** -0.5
    causal = jnp.tril(jnp.ones((T, T), bool))
    keep = causal[None, None] & (am[:, :, None, :] > 0.5)
    s = jnp.where(keep, s, NEG_INF)
    s = s - s.max(-1, keepdims=True)
    pr = jnp.exp(s)
    pr = pr / pr.sum(-1, keepdims=True)
    o = jnp.einsum("bhts,bhsd->bhtd", pr, vh).transpose(0, 2, 1, 3).reshape(B, T, D)
    x = x + o @ p["wo"]
    h2 = x * jax.lax.rsqrt(jnp.mean(x * x, -1, keepdims=True) + EPS_RMS) * p["rms2"]
    mlp = (jax.nn.silu(h2 @ p["wg"]) * (h2 @ p["wu"])) @ p["wd"]
    return x + mlp


def ref_flamingo_layer(lang_x, attention_mask, vis_x, media_locations, params):
    vis = vis_x.reshape(B, M, D_VIS)
    text_time = jnp.cumsum(media_locations.astype(jnp.int32), axis=-1)[:, :, None]
    media_time = jnp.repeat(jnp.arange(1, T_IMG + 1, dtype=jnp.int32), N_VIS)[None, None, :]
    x = ref_gated_xattn(lang_x, vis, text_time, media_time, params["xattn"])
    cos, sin = rope_tables()
    return ref_decoder(x, attention_mask, cos, sin, params["decoder"])


# ----------------------------- parameter init -----------------------------
def init_params(key):
    ks = jax.random.split(key, 13)
    s = 0.02
    bf = jnp.bfloat16   # matmul weights stored bf16 (MXU-native); norm/gate params stay f32

    def w(k, shape):
        return (s * jax.random.normal(k, shape, jnp.float32)).astype(bf)

    xattn = dict(
        ln1_g=jnp.ones((1, D), jnp.float32), ln1_b=jnp.zeros((1, D), jnp.float32),
        wq=w(ks[0], (D, H * DH)),
        wk=w(ks[1], (D_VIS, H * DH)),
        wv=w(ks[2], (D_VIS, H * DH)),
        wo=w(ks[3], (H * DH, D)),
        attn_gate=jnp.full((1, 1), 0.5, jnp.float32),   # PyTorch init is 0.0 (identity); 0.5 exercises compute
        ln2_g=jnp.ones((1, D), jnp.float32), ln2_b=jnp.zeros((1, D), jnp.float32),
        wff1=w(ks[4], (D, XATTN_FF)),
        wff2=w(ks[5], (XATTN_FF, D)),
        ff_gate=jnp.full((1, 1), 0.5, jnp.float32),
    )
    dec = dict(
        rms1=jnp.ones((1, D), jnp.float32),
        wq=w(ks[6], (D, D)),
        wk=w(ks[7], (D, D)),
        wv=w(ks[8], (D, D)),
        wo=w(ks[9], (D, D)),
        rms2=jnp.ones((1, D), jnp.float32),
        wg=w(ks[10], (D, MLP_FF)),
        wu=w(ks[11], (D, MLP_FF)),
        wd=w(ks[12], (MLP_FF, D)),
    )
    return dict(xattn=xattn, decoder=dec)


# ----------------------------- main -----------------------------
if __name__ == "__main__":
    key = jax.random.PRNGKey(0)
    k_lang, k_vis, k_par = jax.random.split(key, 3)

    lang_x = jax.random.normal(k_lang, (B, T, D), jnp.float32)
    vis_x = jax.random.normal(k_vis, (B, T_IMG, N_VIS, D_VIS), jnp.float32)
    media_locations = jnp.zeros((B, T), jnp.bool_).at[:, 0].set(True).at[:, 4].set(True)
    attention_mask = jnp.ones((B, T), jnp.float32)
    params = init_params(k_par)

    out = flamingo_layer_forward(lang_x, attention_mask, vis_x, media_locations, params)
    out = jax.block_until_ready(out)

    assert out.shape == (B, T, D)
    assert bool(jnp.all(jnp.isfinite(out)))

    ref = ref_flamingo_layer(lang_x, attention_mask, vis_x, media_locations, params)
    np.testing.assert_allclose(np.asarray(out), np.asarray(ref), rtol=5e-2, atol=5e-2)

    print("KERNEL_OK")
</pallas_src>

<mosaic_0001>
module attributes {stable_mosaic.version = 11 : i64} {
  func.func @flamingo_layer_kernel(%arg0: memref<16x128xf32, #tpu.memory_space<vmem>>, %arg1: memref<16x128xf32, #tpu.memory_space<vmem>>, %arg2: memref<48x16xf32, #tpu.memory_space<vmem>>, %arg3: memref<32x128xf32, #tpu.memory_space<vmem>>, %arg4: memref<8x128xf32, #tpu.memory_space<vmem>>, %arg5: memref<128x2176xbf16, #tpu.memory_space<vmem>>, %arg6: memref<768x128xbf16, #tpu.memory_space<vmem>>, %arg7: memref<16x128xf32, #tpu.memory_space<vmem>>) attributes {dimension_semantics = [], scalar_prefetch = 0 : i64, scratch_operands = 0 : i64, tpu.core_type = #tpu.core_type<tc>} {
    %c0 = arith.constant 0 : index
    %c0_0 = arith.constant 0 : index
    %0 = vector.load %arg0[%c0, %c0_0] : memref<16x128xf32, #tpu.memory_space<vmem>>, vector<16x128xf32>
    %c0_1 = arith.constant 0 : index
    %c0_2 = arith.constant 0 : index
    %1 = vector.load %arg1[%c0_1, %c0_2] : memref<16x128xf32, #tpu.memory_space<vmem>>, vector<16x128xf32>
    %2 = arith.truncf %1 : vector<16x128xf32> to vector<16x128xbf16>
    %c0_3 = arith.constant 0 : index
    %c0_4 = arith.constant 0 : index
    %3 = vector.load %arg2[%c0_3, %c0_4] : memref<48x16xf32, #tpu.memory_space<vmem>>, vector<16x16xf32>
    %c16 = arith.constant 16 : index
    %c0_5 = arith.constant 0 : index
    %4 = vector.load %arg2[%c16, %c0_5] : memref<48x16xf32, #tpu.memory_space<vmem>>, vector<16x16xf32>
    %c32 = arith.constant 32 : index
    %c0_6 = arith.constant 0 : index
    %5 = vector.load %arg2[%c32, %c0_6] : memref<48x16xf32, #tpu.memory_space<vmem>>, vector<16x1xf32>
    %c0_7 = arith.constant 0 : index
    %c0_8 = arith.constant 0 : index
    %6 = vector.load %arg3[%c0_7, %c0_8] : memref<32x128xf32, #tpu.memory_space<vmem>>, vector<16x128xf32>
    %c16_9 = arith.constant 16 : index
    %c0_10 = arith.constant 0 : index
    %7 = vector.load %arg3[%c16_9, %c0_10] : memref<32x128xf32, #tpu.memory_space<vmem>>, vector<16x128xf32>
    %cst = arith.constant dense<0.000000e+00> : vector<16xf32>
    %8 = vector.multi_reduction <add>, %0, %cst [1] : vector<16x128xf32> to vector<16xf32>
    %9 = vector.shape_cast %8 : vector<16xf32> to vector<16x1xf32>
    %cst_11 = arith.constant 1.280000e+02 : f32
    %10 = vector.broadcast %cst_11 : f32 to vector<16x1xf32>
    %11 = arith.divf %9, %10 : vector<16x1xf32>
    %12 = vector.broadcast %11 : vector<16x1xf32> to vector<16x128xf32>
    %13 = arith.subf %0, %12 : vector<16x128xf32>
    %14 = arith.mulf %13, %13 : vector<16x128xf32>
    %cst_12 = arith.constant dense<0.000000e+00> : vector<16xf32>
    %15 = vector.multi_reduction <add>, %14, %cst_12 [1] : vector<16x128xf32> to vector<16xf32>
    %16 = vector.shape_cast %15 : vector<16xf32> to vector<16x1xf32>
    %cst_13 = arith.constant 1.280000e+02 : f32
    %17 = vector.broadcast %cst_13 : f32 to vector<16x1xf32>
    %18 = arith.divf %16, %17 : vector<16x1xf32>
    %19 = vector.broadcast %11 : vector<16x1xf32> to vector<16x128xf32>
    %20 = arith.subf %0, %19 : vector<16x128xf32>
    %cst_14 = arith.constant 9.99999974E-6 : f32
    %21 = vector.broadcast %cst_14 : f32 to vector<16x1xf32>
    %22 = arith.addf %18, %21 : vector<16x1xf32>
    %23 = math.rsqrt %22 : vector<16x1xf32>
    %24 = vector.broadcast %23 : vector<16x1xf32> to vector<16x128xf32>
    %25 = arith.mulf %20, %24 : vector<16x128xf32>
    %c0_15 = arith.constant 0 : index
    %c0_16 = arith.constant 0 : index
    %26 = vector.load %arg4[%c0_15, %c0_16] : memref<8x128xf32, #tpu.memory_space<vmem>>, vector<1x128xf32>
    %27 = vector.broadcast %26 : vector<1x128xf32> to vector<16x128xf32>
    %28 = arith.mulf %25, %27 : vector<16x128xf32>
    %c1 = arith.constant 1 : index
    %c0_17 = arith.constant 0 : index
    %29 = vector.load %arg4[%c1, %c0_17] : memref<8x128xf32, #tpu.memory_space<vmem>>, vector<1x128xf32>
    %30 = vector.broadcast %29 : vector<1x128xf32> to vector<16x128xf32>
    %31 = arith.addf %28, %30 : vector<16x128xf32>
    %32 = arith.truncf %31 : vector<16x128xf32> to vector<16x128xbf16>
    %c0_18 = arith.constant 0 : index
    %c0_19 = arith.constant 0 : index
    %33 = vector.load %arg5[%c0_18, %c0_19] : memref<128x2176xbf16, #tpu.memory_space<vmem>>, vector<128x128xbf16>
    %cst_20 = arith.constant dense<0.000000e+00> : vector<16x128xf32>
    %34 = tpu.matmul %32, %33, %cst_20 {dimension_numbers = #tpu.dot_dimension_numbers<[1], [0], [0], [1], [0, 0, 1, 1], [], []>} : vector<16x128xbf16>, vector<128x128xbf16>, vector<16x128xf32> -> vector<16x128xf32>
    %35 = arith.truncf %34 : vector<16x128xf32> to vector<16x128xbf16>
    %c0_21 = arith.constant 0 : index
    %c128 = arith.constant 128 : index
    %36 = vector.load %arg5[%c0_21, %c128] : memref<128x2176xbf16, #tpu.memory_space<vmem>>, vector<128x256xbf16>
    %cst_22 = arith.constant dense<0.000000e+00> : vector<16x256xf32>
    %37 = tpu.matmul %2, %36, %cst_22 {dimension_numbers = #tpu.dot_dimension_numbers<[1], [0], [0], [1], [0, 0, 1, 1], [], []>} : vector<16x128xbf16>, vector<128x256xbf16>, vector<16x256xf32> -> vector<16x256xf32>
    %38 = vector.extract_strided_slice %37 {offsets = [0, 0], sizes = [16, 128], strides = [1, 1]} : vector<16x256xf32> to vector<16x128xf32>
    %39 = arith.truncf %38 : vector<16x128xf32> to vector<16x128xbf16>
    %40 = vector.extract_strided_slice %37 {offsets = [0, 128], sizes = [16, 128], strides = [1, 1]} : vector<16x256xf32> to vector<16x128xf32>
    %41 = arith.truncf %40 : vector<16x128xf32> to vector<16x128xbf16>
    %cst_23 = arith.constant 0.000000e+00 : f32
    %42 = vector.broadcast %cst_23 : f32 to vector<16x128xf32>
    %43 = vector.extract_strided_slice %35 {offsets = [0, 0], sizes = [16, 32], strides = [1, 1]} : vector<16x128xbf16> to vector<16x32xbf16>
    %44 = vector.extract_strided_slice %39 {offsets = [0, 0], sizes = [16, 32], strides = [1, 1]} : vector<16x128xbf16> to vector<16x32xbf16>
    %cst_24 = arith.constant dense<0.000000e+00> : vector<16x16xf32>
    %45 = tpu.matmul %43, %44, %cst_24 {dimension_numbers = #tpu.dot_dimension_numbers<[1], [1], [0], [0], [0, 0, 1, 0], [], []>} : vector<16x32xbf16>, vector<16x32xbf16>, vector<16x16xf32> -> vector<16x16xf32>
    %46 = arith.addf %45, %3 : vector<16x16xf32>
    %cst_25 = arith.constant dense<0xFF800000> : vector<16xf32>
    %47 = vector.multi_reduction <maximumf>, %46, %cst_25 [1] : vector<16x16xf32> to vector<16xf32>
    %48 = vector.shape_cast %47 : vector<16xf32> to vector<16x1xf32>
    %49 = vector.broadcast %48 : vector<16x1xf32> to vector<16x16xf32>
    %50 = arith.subf %46, %49 : vector<16x16xf32>
    %51 = math.exp %50 : vector<16x16xf32>
    %cst_26 = arith.constant dense<0.000000e+00> : vector<16xf32>
    %52 = vector.multi_reduction <add>, %51, %cst_26 [1] : vector<16x16xf32> to vector<16xf32>
    %53 = vector.shape_cast %52 : vector<16xf32> to vector<16x1xf32>
    %54 = tpu.reciprocal %53 {approx = true} : vector<16x1xf32> -> vector<16x1xf32>
    %55 = vector.broadcast %54 : vector<16x1xf32> to vector<16x16xf32>
    %56 = arith.mulf %51, %55 : vector<16x16xf32>
    %57 = arith.truncf %56 : vector<16x16xf32> to vector<16x16xbf16>
    %58 = vector.extract_strided_slice %41 {offsets = [0, 0], sizes = [16, 32], strides = [1, 1]} : vector<16x128xbf16> to vector<16x32xbf16>
    %cst_27 = arith.constant dense<0.000000e+00> : vector<16x32xf32>
    %59 = tpu.matmul %57, %58, %cst_27 {dimension_numbers = #tpu.dot_dimension_numbers<[1], [0], [0], [1], [0, 0, 1, 1], [], []>} : vector<16x16xbf16>, vector<16x32xbf16>, vector<16x32xf32> -> vector<16x32xf32>
    %60 = arith.truncf %59 : vector<16x32xf32> to vector<16x32xbf16>
    %c0_28 = arith.constant 0 : index
    %c384 = arith.constant 384 : index
    %61 = vector.load %arg5[%c0_28, %c384] : memref<128x2176xbf16, #tpu.memory_space<vmem>>, vector<32x128xbf16>
    %cst_29 = arith.constant dense<0.000000e+00> : vector<16x128xf32>
    %62 = tpu.matmul %60, %61, %cst_29 {dimension_numbers = #tpu.dot_dimension_numbers<[1], [0], [0], [1], [0, 0, 1, 1], [], []>} : vector<16x32xbf16>, vector<32x128xbf16>, vector<16x128xf32> -> vector<16x128xf32>
    %63 = arith.addf %42, %62 : vector<16x128xf32>
    %64 = vector.extract_strided_slice %35 {offsets = [0, 32], sizes = [16, 32], strides = [1, 1]} : vector<16x128xbf16> to vector<16x32xbf16>
    %65 = vector.extract_strided_slice %39 {offsets = [0, 32], sizes = [16, 32], strides = [1, 1]} : vector<16x128xbf16> to vector<16x32xbf16>
    %cst_30 = arith.constant dense<0.000000e+00> : vector<16x16xf32>
    %66 = tpu.matmul %64, %65, %cst_30 {dimension_numbers = #tpu.dot_dimension_numbers<[1], [1], [0], [0], [0, 0, 1, 0], [], []>} : vector<16x32xbf16>, vector<16x32xbf16>, vector<16x16xf32> -> vector<16x16xf32>
    %67 = arith.addf %66, %3 : vector<16x16xf32>
    %cst_31 = arith.constant dense<0xFF800000> : vector<16xf32>
    %68 = vector.multi_reduction <maximumf>, %67, %cst_31 [1] : vector<16x16xf32> to vector<16xf32>
    %69 = vector.shape_cast %68 : vector<16xf32> to vector<16x1xf32>
    %70 = vector.broadcast %69 : vector<16x1xf32> to vector<16x16xf32>
    %71 = arith.subf %67, %70 : vector<16x16xf32>
    %72 = math.exp %71 : vector<16x16xf32>
    %cst_32 = arith.constant dense<0.000000e+00> : vector<16xf32>
    %73 = vector.multi_reduction <add>, %72, %cst_32 [1] : vector<16x16xf32> to vector<16xf32>
    %74 = vector.shape_cast %73 : vector<16xf32> to vector<16x1xf32>
    %75 = tpu.reciprocal %74 {approx = true} : vector<16x1xf32> -> vector<16x1xf32>
    %76 = vector.broadcast %75 : vector<16x1xf32> to vector<16x16xf32>
    %77 = arith.mulf %72, %76 : vector<16x16xf32>
    %78 = arith.truncf %77 : vector<16x16xf32> to vector<16x16xbf16>
    %79 = vector.extract_strided_slice %41 {offsets = [0, 32], sizes = [16, 32], strides = [1, 1]} : vector<16x128xbf16> to vector<16x32xbf16>
    %cst_33 = arith.constant dense<0.000000e+00> : vector<16x32xf32>
    %80 = tpu.matmul %78, %79, %cst_33 {dimension_numbers = #tpu.dot_dimension_numbers<[1], [0], [0], [1], [0, 0, 1, 1], [], []>} : vector<16x16xbf16>, vector<16x32xbf16>, vector<16x32xf32> -> vector<16x32xf32>
    %81 = arith.truncf %80 : vector<16x32xf32> to vector<16x32xbf16>
    %c32_34 = arith.constant 32 : index
    %c384_35 = arith.constant 384 : index
    %82 = vector.load %arg5[%c32_34, %c384_35] : memref<128x2176xbf16, #tpu.memory_space<vmem>>, vector<32x128xbf16>
    %cst_36 = arith.constant dense<0.000000e+00> : vector<16x128xf32>
    %83 = tpu.matmul %81, %82, %cst_36 {dimension_numbers = #tpu.dot_dimension_numbers<[1], [0], [0], [1], [0, 0, 1, 1], [], []>} : vector<16x32xbf16>, vector<32x128xbf16>, vector<16x128xf32> -> vector<16x128xf32>
    %84 = arith.addf %63, %83 : vector<16x128xf32>
    %85 = vector.extract_strided_slice %35 {offsets = [0, 64], sizes = [16, 32], strides = [1, 1]} : vector<16x128xbf16> to vector<16x32xbf16>
    %86 = vector.extract_strided_slice %39 {offsets = [0, 64], sizes = [16, 32], strides = [1, 1]} : vector<16x128xbf16> to vector<16x32xbf16>
    %cst_37 = arith.constant dense<0.000000e+00> : vector<16x16xf32>
    %87 = tpu.matmul %85, %86, %cst_37 {dimension_numbers = #tpu.dot_dimension_numbers<[1], [1], [0], [0], [0, 0, 1, 0], [], []>} : vector<16x32xbf16>, vector<16x32xbf16>, vector<16x16xf32> -> vector<16x16xf32>
    %88 = arith.addf %87, %3 : vector<16x16xf32>
    %cst_38 = arith.constant dense<0xFF800000> : vector<16xf32>
    %89 = vector.multi_reduction <maximumf>, %88, %cst_38 [1] : vector<16x16xf32> to vector<16xf32>
    %90 = vector.shape_cast %89 : vector<16xf32> to vector<16x1xf32>
    %91 = vector.broadcast %90 : vector<16x1xf32> to vector<16x16xf32>
    %92 = arith.subf %88, %91 : vector<16x16xf32>
    %93 = math.exp %92 : vector<16x16xf32>
    %cst_39 = arith.constant dense<0.000000e+00> : vector<16xf32>
    %94 = vector.multi_reduction <add>, %93, %cst_39 [1] : vector<16x16xf32> to vector<16xf32>
    %95 = vector.shape_cast %94 : vector<16xf32> to vector<16x1xf32>
    %96 = tpu.reciprocal %95 {approx = true} : vector<16x1xf32> -> vector<16x1xf32>
    %97 = vector.broadcast %96 : vector<16x1xf32> to vector<16x16xf32>
    %98 = arith.mulf %93, %97 : vector<16x16xf32>
    %99 = arith.truncf %98 : vector<16x16xf32> to vector<16x16xbf16>
    %100 = vector.extract_strided_slice %41 {offsets = [0, 64], sizes = [16, 32], strides = [1, 1]} : vector<16x128xbf16> to vector<16x32xbf16>
    %cst_40 = arith.constant dense<0.000000e+00> : vector<16x32xf32>
    %101 = tpu.matmul %99, %100, %cst_40 {dimension_numbers = #tpu.dot_dimension_numbers<[1], [0], [0], [1], [0, 0, 1, 1], [], []>} : vector<16x16xbf16>, vector<16x32xbf16>, vector<16x32xf32> -> vector<16x32xf32>
    %102 = arith.truncf %101 : vector<16x32xf32> to vector<16x32xbf16>
    %c64 = arith.constant 64 : index
    %c384_41 = arith.constant 384 : index
    %103 = vector.load %arg5[%c64, %c384_41] : memref<128x2176xbf16, #tpu.memory_space<vmem>>, vector<32x128xbf16>
    %cst_42 = arith.constant dense<0.000000e+00> : vector<16x128xf32>
    %104 = tpu.matmul %102, %103, %cst_42 {dimension_numbers = #tpu.dot_dimension_numbers<[1], [0], [0], [1], [0, 0, 1, 1], [], []>} : vector<16x32xbf16>, vector<32x128xbf16>, vector<16x128xf32> -> vector<16x128xf32>
    %105 = arith.addf %84, %104 : vector<16x128xf32>
    %106 = vector.extract_strided_slice %35 {offsets = [0, 96], sizes = [16, 32], strides = [1, 1]} : vector<16x128xbf16> to vector<16x32xbf16>
    %107 = vector.extract_strided_slice %39 {offsets = [0, 96], sizes = [16, 32], strides = [1, 1]} : vector<16x128xbf16> to vector<16x32xbf16>
    %cst_43 = arith.constant dense<0.000000e+00> : vector<16x16xf32>
    %108 = tpu.matmul %106, %107, %cst_43 {dimension_numbers = #tpu.dot_dimension_numbers<[1], [1], [0], [0], [0, 0, 1, 0], [], []>} : vector<16x32xbf16>, vector<16x32xbf16>, vector<16x16xf32> -> vector<16x16xf32>
    %109 = arith.addf %108, %3 : vector<16x16xf32>
    %cst_44 = arith.constant dense<0xFF800000> : vector<16xf32>
    %110 = vector.multi_reduction <maximumf>, %109, %cst_44 [1] : vector<16x16xf32> to vector<16xf32>
    %111 = vector.shape_cast %110 : vector<16xf32> to vector<16x1xf32>
    %112 = vector.broadcast %111 : vector<16x1xf32> to vector<16x16xf32>
    %113 = arith.subf %109, %112 : vector<16x16xf32>
    %114 = math.exp %113 : vector<16x16xf32>
    %cst_45 = arith.constant dense<0.000000e+00> : vector<16xf32>
    %115 = vector.multi_reduction <add>, %114, %cst_45 [1] : vector<16x16xf32> to vector<16xf32>
    %116 = vector.shape_cast %115 : vector<16xf32> to vector<16x1xf32>
    %117 = tpu.reciprocal %116 {approx = true} : vector<16x1xf32> -> vector<16x1xf32>
    %118 = vector.broadcast %117 : vector<16x1xf32> to vector<16x16xf32>
    %119 = arith.mulf %114, %118 : vector<16x16xf32>
    %120 = arith.truncf %119 : vector<16x16xf32> to vector<16x16xbf16>
    %121 = vector.extract_strided_slice %41 {offsets = [0, 96], sizes = [16, 32], strides = [1, 1]} : vector<16x128xbf16> to vector<16x32xbf16>
    %cst_46 = arith.constant dense<0.000000e+00> : vector<16x32xf32>
    %122 = tpu.matmul %120, %121, %cst_46 {dimension_numbers = #tpu.dot_dimension_numbers<[1], [0], [0], [1], [0, 0, 1, 1], [], []>} : vector<16x16xbf16>, vector<16x32xbf16>, vector<16x32xf32> -> vector<16x32xf32>
    %123 = arith.truncf %122 : vector<16x32xf32> to vector<16x32xbf16>
    %c96 = arith.constant 96 : index
    %c384_47 = arith.constant 384 : index
    %124 = vector.load %arg5[%c96, %c384_47] : memref<128x2176xbf16, #tpu.memory_space<vmem>>, vector<32x128xbf16>
    %cst_48 = arith.constant dense<0.000000e+00> : vector<16x128xf32>
    %125 = tpu.matmul %123, %124, %cst_48 {dimension_numbers = #tpu.dot_dimension_numbers<[1], [0], [0], [1], [0, 0, 1, 1], [], []>} : vector<16x32xbf16>, vector<32x128xbf16>, vector<16x128xf32> -> vector<16x128xf32>
    %126 = arith.addf %105, %125 : vector<16x128xf32>
    %127 = vector.broadcast %5 : vector<16x1xf32> to vector<16x128xf32>
    %128 = arith.mulf %127, %126 : vector<16x128xf32>
    %129 = arith.addf %0, %128 : vector<16x128xf32>
    %cst_49 = arith.constant dense<0.000000e+00> : vector<16xf32>
    %130 = vector.multi_reduction <add>, %129, %cst_49 [1] : vector<16x128xf32> to vector<16xf32>
    %131 = vector.shape_cast %130 : vector<16xf32> to vector<16x1xf32>
    %cst_50 = arith.constant 1.280000e+02 : f32
    %132 = vector.broadcast %cst_50 : f32 to vector<16x1xf32>
    %133 = arith.divf %131, %132 : vector<16x1xf32>
    %134 = vector.broadcast %133 : vector<16x1xf32> to vector<16x128xf32>
    %135 = arith.subf %129, %134 : vector<16x128xf32>
    %136 = arith.mulf %135, %135 : vector<16x128xf32>
    %cst_51 = arith.constant dense<0.000000e+00> : vector<16xf32>
    %137 = vector.multi_reduction <add>, %136, %cst_51 [1] : vector<16x128xf32> to vector<16xf32>
    %138 = vector.shape_cast %137 : vector<16xf32> to vector<16x1xf32>
    %cst_52 = arith.constant 1.280000e+02 : f32
    %139 = vector.broadcast %cst_52 : f32 to vector<16x1xf32>
    %140 = arith.divf %138, %139 : vector<16x1xf32>
    %141 = vector.broadcast %133 : vector<16x1xf32> to vector<16x128xf32>
    %142 = arith.subf %129, %141 : vector<16x128xf32>
    %cst_53 = arith.constant 9.99999974E-6 : f32
    %143 = vector.broadcast %cst_53 : f32 to vector<16x1xf32>
    %144 = arith.addf %140, %143 : vector<16x1xf32>
    %145 = math.rsqrt %144 : vector<16x1xf32>
    %146 = vector.broadcast %145 : vector<16x1xf32> to vector<16x128xf32>
    %147 = arith.mulf %142, %146 : vector<16x128xf32>
    %c2 = arith.constant 2 : index
    %c0_54 = arith.constant 0 : index
    %148 = vector.load %arg4[%c2, %c0_54] : memref<8x128xf32, #tpu.memory_space<vmem>>, vector<1x128xf32>
    %149 = vector.broadcast %148 : vector<1x128xf32> to vector<16x128xf32>
    %150 = arith.mulf %147, %149 : vector<16x128xf32>
    %c3 = arith.constant 3 : index
    %c0_55 = arith.constant 0 : index
    %151 = vector.load %arg4[%c3, %c0_55] : memref<8x128xf32, #tpu.memory_space<vmem>>, vector<1x128xf32>
    %152 = vector.broadcast %151 : vector<1x128xf32> to vector<16x128xf32>
    %153 = arith.addf %150, %152 : vector<16x128xf32>
    %154 = arith.truncf %153 : vector<16x128xf32> to vector<16x128xbf16>
    %c0_56 = arith.constant 0 : index
    %c512 = arith.constant 512 : index
    %155 = vector.load %arg5[%c0_56, %c512] : memref<128x2176xbf16, #tpu.memory_space<vmem>>, vector<128x512xbf16>
    %cst_57 = arith.constant dense<0.000000e+00> : vector<16x512xf32>
    %156 = tpu.matmul %154, %155, %cst_57 {dimension_numbers = #tpu.dot_dimension_numbers<[1], [0], [0], [1], [0, 0, 1, 1], [], []>} : vector<16x128xbf16>, vector<128x512xbf16>, vector<16x512xf32> -> vector<16x512xf32>
    %157 = arith.mulf %156, %156 : vector<16x512xf32>
    %158 = arith.mulf %156, %157 : vector<16x512xf32>
    %cst_58 = arith.constant 4.471500e-02 : f32
    %159 = vector.broadcast %cst_58 : f32 to vector<16x512xf32>
    %160 = arith.mulf %159, %158 : vector<16x512xf32>
    %161 = arith.addf %156, %160 : vector<16x512xf32>
    %cst_59 = arith.constant 0.797884583 : f32
    %162 = vector.broadcast %cst_59 : f32 to vector<16x512xf32>
    %163 = arith.mulf %162, %161 : vector<16x512xf32>
    %164 = math.tanh %163 : vector<16x512xf32>
    %cst_60 = arith.constant 1.000000e+00 : f32
    %165 = vector.broadcast %cst_60 : f32 to vector<16x512xf32>
    %166 = arith.addf %165, %164 : vector<16x512xf32>
    %cst_61 = arith.constant 5.000000e-01 : f32
    %167 = vector.broadcast %cst_61 : f32 to vector<16x512xf32>
    %168 = arith.mulf %167, %166 : vector<16x512xf32>
    %169 = arith.mulf %156, %168 : vector<16x512xf32>
    %170 = arith.truncf %169 : vector<16x512xf32> to vector<16x512xbf16>
    %c0_62 = arith.constant 0 : index
    %c0_63 = arith.constant 0 : index
    %171 = vector.load %arg6[%c0_62, %c0_63] : memref<768x128xbf16, #tpu.memory_space<vmem>>, vector<512x128xbf16>
    %cst_64 = arith.constant dense<0.000000e+00> : vector<16x128xf32>
    %172 = tpu.matmul %170, %171, %cst_64 {dimension_numbers = #tpu.dot_dimension_numbers<[1], [0], [0], [1], [0, 0, 1, 1], [], []>} : vector<16x512xbf16>, vector<512x128xbf16>, vector<16x128xf32> -> vector<16x128xf32>
    %173 = arith.addf %129, %172 : vector<16x128xf32>
    %174 = arith.mulf %173, %173 : vector<16x128xf32>
    %cst_65 = arith.constant dense<0.000000e+00> : vector<16xf32>
    %175 = vector.multi_reduction <add>, %174, %cst_65 [1] : vector<16x128xf32> to vector<16xf32>
    %176 = vector.shape_cast %175 : vector<16xf32> to vector<16x1xf32>
    %cst_66 = arith.constant 1.280000e+02 : f32
    %177 = vector.broadcast %cst_66 : f32 to vector<16x1xf32>
    %178 = arith.divf %176, %177 : vector<16x1xf32>
    %cst_67 = arith.constant 9.99999997E-7 : f32
    %179 = vector.broadcast %cst_67 : f32 to vector<16x1xf32>
    %180 = arith.addf %178, %179 : vector<16x1xf32>
    %181 = math.rsqrt %180 : vector<16x1xf32>
    %182 = vector.broadcast %181 : vector<16x1xf32> to vector<16x128xf32>
    %183 = arith.mulf %173, %182 : vector<16x128xf32>
    %c4 = arith.constant 4 : index
    %c0_68 = arith.constant 0 : index
    %184 = vector.load %arg4[%c4, %c0_68] : memref<8x128xf32, #tpu.memory_space<vmem>>, vector<1x128xf32>
    %185 = vector.broadcast %184 : vector<1x128xf32> to vector<16x128xf32>
    %186 = arith.mulf %183, %185 : vector<16x128xf32>
    %187 = arith.truncf %186 : vector<16x128xf32> to vector<16x128xbf16>
    %c0_69 = arith.constant 0 : index
    %c1152 = arith.constant 1152 : index
    %188 = vector.load %arg5[%c0_69, %c1152] : memref<128x2176xbf16, #tpu.memory_space<vmem>>, vector<128x384xbf16>
    %cst_70 = arith.constant dense<0.000000e+00> : vector<16x384xf32>
    %189 = tpu.matmul %187, %188, %cst_70 {dimension_numbers = #tpu.dot_dimension_numbers<[1], [0], [0], [1], [0, 0, 1, 1], [], []>} : vector<16x128xbf16>, vector<128x384xbf16>, vector<16x384xf32> -> vector<16x384xf32>
    %c0_71 = arith.constant 0 : index
    %c1024 = arith.constant 1024 : index
    %190 = vector.load %arg5[%c0_71, %c1024] : memref<128x2176xbf16, #tpu.memory_space<vmem>>, vector<128x128xbf16>
    %191 = vector.extract_strided_slice %189 {offsets = [0, 0], sizes = [16, 128], strides = [1, 1]} : vector<16x384xf32> to vector<16x128xf32>
    %192 = arith.truncf %191 : vector<16x128xf32> to vector<16x128xbf16>
    %193 = vector.extract_strided_slice %189 {offsets = [0, 128], sizes = [16, 128], strides = [1, 1]} : vector<16x384xf32> to vector<16x128xf32>
    %194 = arith.truncf %193 : vector<16x128xf32> to vector<16x128xbf16>
    %195 = vector.extract_strided_slice %189 {offsets = [0, 256], sizes = [16, 128], strides = [1, 1]} : vector<16x384xf32> to vector<16x128xf32>
    %196 = arith.truncf %195 : vector<16x128xf32> to vector<16x128xbf16>
    %197 = arith.extf %192 : vector<16x128xbf16> to vector<16x128xf32>
    %198 = arith.mulf %197, %6 : vector<16x128xf32>
    %cst_72 = arith.constant dense<0.000000e+00> : vector<16x128xf32>
    %199 = tpu.matmul %192, %190, %cst_72 {dimension_numbers = #tpu.dot_dimension_numbers<[1], [0], [0], [1], [0, 0, 1, 1], [], []>} : vector<16x128xbf16>, vector<128x128xbf16>, vector<16x128xf32> -> vector<16x128xf32>
    %200 = arith.mulf %199, %7 : vector<16x128xf32>
    %201 = arith.addf %198, %200 : vector<16x128xf32>
    %202 = arith.truncf %201 : vector<16x128xf32> to vector<16x128xbf16>
    %203 = arith.extf %194 : vector<16x128xbf16> to vector<16x128xf32>
    %204 = arith.mulf %203, %6 : vector<16x128xf32>
    %cst_73 = arith.constant dense<0.000000e+00> : vector<16x128xf32>
    %205 = tpu.matmul %194, %190, %cst_73 {dimension_numbers = #tpu.dot_dimension_numbers<[1], [0], [0], [1], [0, 0, 1, 1], [], []>} : vector<16x128xbf16>, vector<128x128xbf16>, vector<16x128xf32> -> vector<16x128xf32>
    %206 = arith.mulf %205, %7 : vector<16x128xf32>
    %207 = arith.addf %204, %206 : vector<16x128xf32>
    %208 = arith.truncf %207 : vector<16x128xf32> to vector<16x128xbf16>
    %cst_74 = arith.constant 0.000000e+00 : f32
    %209 = vector.broadcast %cst_74 : f32 to vector<16x128xf32>
    %210 = vector.extract_strided_slice %202 {offsets = [0, 0], sizes = [16, 32], strides = [1, 1]} : vector<16x128xbf16> to vector<16x32xbf16>
    %211 = vector.extract_strided_slice %208 {offsets = [0, 0], sizes = [16, 32], strides = [1, 1]} : vector<16x128xbf16> to vector<16x32xbf16>
    %cst_75 = arith.constant dense<0.000000e+00> : vector<16x16xf32>
    %212 = tpu.matmul %210, %211, %cst_75 {dimension_numbers = #tpu.dot_dimension_numbers<[1], [1], [0], [0], [0, 0, 1, 0], [], []>} : vector<16x32xbf16>, vector<16x32xbf16>, vector<16x16xf32> -> vector<16x16xf32>
    %213 = arith.addf %212, %4 : vector<16x16xf32>
    %cst_76 = arith.constant dense<0xFF800000> : vector<16xf32>
    %214 = vector.multi_reduction <maximumf>, %213, %cst_76 [1] : vector<16x16xf32> to vector<16xf32>
    %215 = vector.shape_cast %214 : vector<16xf32> to vector<16x1xf32>
    %216 = vector.broadcast %215 : vector<16x1xf32> to vector<16x16xf32>
    %217 = arith.subf %213, %216 : vector<16x16xf32>
    %218 = math.exp %217 : vector<16x16xf32>
    %cst_77 = arith.constant dense<0.000000e+00> : vector<16xf32>
    %219 = vector.multi_reduction <add>, %218, %cst_77 [1] : vector<16x16xf32> to vector<16xf32>
    %220 = vector.shape_cast %219 : vector<16xf32> to vector<16x1xf32>
    %221 = tpu.reciprocal %220 {approx = true} : vector<16x1xf32> -> vector<16x1xf32>
    %222 = vector.broadcast %221 : vector<16x1xf32> to vector<16x16xf32>
    %223 = arith.mulf %218, %222 : vector<16x16xf32>
    %224 = arith.truncf %223 : vector<16x16xf32> to vector<16x16xbf16>
    %225 = vector.extract_strided_slice %196 {offsets = [0, 0], sizes = [16, 32], strides = [1, 1]} : vector<16x128xbf16> to vector<16x32xbf16>
    %cst_78 = arith.constant dense<0.000000e+00> : vector<16x32xf32>
    %226 = tpu.matmul %224, %225, %cst_78 {dimension_numbers = #tpu.dot_dimension_numbers<[1], [0], [0], [1], [0, 0, 1, 1], [], []>} : vector<16x16xbf16>, vector<16x32xbf16>, vector<16x32xf32> -> vector<16x32xf32>
    %227 = arith.truncf %226 : vector<16x32xf32> to vector<16x32xbf16>
    %c0_79 = arith.constant 0 : index
    %c1536 = arith.constant 1536 : index
    %228 = vector.load %arg5[%c0_79, %c1536] : memref<128x2176xbf16, #tpu.memory_space<vmem>>, vector<32x128xbf16>
    %cst_80 = arith.constant dense<0.000000e+00> : vector<16x128xf32>
    %229 = tpu.matmul %227, %228, %cst_80 {dimension_numbers = #tpu.dot_dimension_numbers<[1], [0], [0], [1], [0, 0, 1, 1], [], []>} : vector<16x32xbf16>, vector<32x128xbf16>, vector<16x128xf32> -> vector<16x128xf32>
    %230 = arith.addf %209, %229 : vector<16x128xf32>
    %231 = vector.extract_strided_slice %202 {offsets = [0, 32], sizes = [16, 32], strides = [1, 1]} : vector<16x128xbf16> to vector<16x32xbf16>
    %232 = vector.extract_strided_slice %208 {offsets = [0, 32], sizes = [16, 32], strides = [1, 1]} : vector<16x128xbf16> to vector<16x32xbf16>
    %cst_81 = arith.constant dense<0.000000e+00> : vector<16x16xf32>
    %233 = tpu.matmul %231, %232, %cst_81 {dimension_numbers = #tpu.dot_dimension_numbers<[1], [1], [0], [0], [0, 0, 1, 0], [], []>} : vector<16x32xbf16>, vector<16x32xbf16>, vector<16x16xf32> -> vector<16x16xf32>
    %234 = arith.addf %233, %4 : vector<16x16xf32>
    %cst_82 = arith.constant dense<0xFF800000> : vector<16xf32>
    %235 = vector.multi_reduction <maximumf>, %234, %cst_82 [1] : vector<16x16xf32> to vector<16xf32>
    %236 = vector.shape_cast %235 : vector<16xf32> to vector<16x1xf32>
    %237 = vector.broadcast %236 : vector<16x1xf32> to vector<16x16xf32>
    %238 = arith.subf %234, %237 : vector<16x16xf32>
    %239 = math.exp %238 : vector<16x16xf32>
    %cst_83 = arith.constant dense<0.000000e+00> : vector<16xf32>
    %240 = vector.multi_reduction <add>, %239, %cst_83 [1] : vector<16x16xf32> to vector<16xf32>
    %241 = vector.shape_cast %240 : vector<16xf32> to vector<16x1xf32>
    %242 = tpu.reciprocal %241 {approx = true} : vector<16x1xf32> -> vector<16x1xf32>
    %243 = vector.broadcast %242 : vector<16x1xf32> to vector<16x16xf32>
    %244 = arith.mulf %239, %243 : vector<16x16xf32>
    %245 = arith.truncf %244 : vector<16x16xf32> to vector<16x16xbf16>
    %246 = vector.extract_strided_slice %196 {offsets = [0, 32], sizes = [16, 32], strides = [1, 1]} : vector<16x128xbf16> to vector<16x32xbf16>
    %cst_84 = arith.constant dense<0.000000e+00> : vector<16x32xf32>
    %247 = tpu.matmul %245, %246, %cst_84 {dimension_numbers = #tpu.dot_dimension_numbers<[1], [0], [0], [1], [0, 0, 1, 1], [], []>} : vector<16x16xbf16>, vector<16x32xbf16>, vector<16x32xf32> -> vector<16x32xf32>
    %248 = arith.truncf %247 : vector<16x32xf32> to vector<16x32xbf16>
    %c32_85 = arith.constant 32 : index
    %c1536_86 = arith.constant 1536 : index
    %249 = vector.load %arg5[%c32_85, %c1536_86] : memref<128x2176xbf16, #tpu.memory_space<vmem>>, vector<32x128xbf16>
    %cst_87 = arith.constant dense<0.000000e+00> : vector<16x128xf32>
    %250 = tpu.matmul %248, %249, %cst_87 {dimension_numbers = #tpu.dot_dimension_numbers<[1], [0], [0], [1], [0, 0, 1, 1], [], []>} : vector<16x32xbf16>, vector<32x128xbf16>, vector<16x128xf32> -> vector<16x128xf32>
    %251 = arith.addf %230, %250 : vector<16x128xf32>
    %252 = vector.extract_strided_slice %202 {offsets = [0, 64], sizes = [16, 32], strides = [1, 1]} : vector<16x128xbf16> to vector<16x32xbf16>
    %253 = vector.extract_strided_slice %208 {offsets = [0, 64], sizes = [16, 32], strides = [1, 1]} : vector<16x128xbf16> to vector<16x32xbf16>
    %cst_88 = arith.constant dense<0.000000e+00> : vector<16x16xf32>
    %254 = tpu.matmul %252, %253, %cst_88 {dimension_numbers = #tpu.dot_dimension_numbers<[1], [1], [0], [0], [0, 0, 1, 0], [], []>} : vector<16x32xbf16>, vector<16x32xbf16>, vector<16x16xf32> -> vector<16x16xf32>
    %255 = arith.addf %254, %4 : vector<16x16xf32>
    %cst_89 = arith.constant dense<0xFF800000> : vector<16xf32>
    %256 = vector.multi_reduction <maximumf>, %255, %cst_89 [1] : vector<16x16xf32> to vector<16xf32>
    %257 = vector.shape_cast %256 : vector<16xf32> to vector<16x1xf32>
    %258 = vector.broadcast %257 : vector<16x1xf32> to vector<16x16xf32>
    %259 = arith.subf %255, %258 : vector<16x16xf32>
    %260 = math.exp %259 : vector<16x16xf32>
    %cst_90 = arith.constant dense<0.000000e+00> : vector<16xf32>
    %261 = vector.multi_reduction <add>, %260, %cst_90 [1] : vector<16x16xf32> to vector<16xf32>
    %262 = vector.shape_cast %261 : vector<16xf32> to vector<16x1xf32>
    %263 = tpu.reciprocal %262 {approx = true} : vector<16x1xf32> -> vector<16x1xf32>
    %264 = vector.broadcast %263 : vector<16x1xf32> to vector<16x16xf32>
    %265 = arith.mulf %260, %264 : vector<16x16xf32>
    %266 = arith.truncf %265 : vector<16x16xf32> to vector<16x16xbf16>
    %267 = vector.extract_strided_slice %196 {offsets = [0, 64], sizes = [16, 32], strides = [1, 1]} : vector<16x128xbf16> to vector<16x32xbf16>
    %cst_91 = arith.constant dense<0.000000e+00> : vector<16x32xf32>
    %268 = tpu.matmul %266, %267, %cst_91 {dimension_numbers = #tpu.dot_dimension_numbers<[1], [0], [0], [1], [0, 0, 1, 1], [], []>} : vector<16x16xbf16>, vector<16x32xbf16>, vector<16x32xf32> -> vector<16x32xf32>
    %269 = arith.truncf %268 : vector<16x32xf32> to vector<16x32xbf16>
    %c64_92 = arith.constant 64 : index
    %c1536_93 = arith.constant 1536 : index
    %270 = vector.load %arg5[%c64_92, %c1536_93] : memref<128x2176xbf16, #tpu.memory_space<vmem>>, vector<32x128xbf16>
    %cst_94 = arith.constant dense<0.000000e+00> : vector<16x128xf32>
    %271 = tpu.matmul %269, %270, %cst_94 {dimension_numbers = #tpu.dot_dimension_numbers<[1], [0], [0], [1], [0, 0, 1, 1], [], []>} : vector<16x32xbf16>, vector<32x128xbf16>, vector<16x128xf32> -> vector<16x128xf32>
    %272 = arith.addf %251, %271 : vector<16x128xf32>
    %273 = vector.extract_strided_slice %202 {offsets = [0, 96], sizes = [16, 32], strides = [1, 1]} : vector<16x128xbf16> to vector<16x32xbf16>
    %274 = vector.extract_strided_slice %208 {offsets = [0, 96], sizes = [16, 32], strides = [1, 1]} : vector<16x128xbf16> to vector<16x32xbf16>
    %cst_95 = arith.constant dense<0.000000e+00> : vector<16x16xf32>
    %275 = tpu.matmul %273, %274, %cst_95 {dimension_numbers = #tpu.dot_dimension_numbers<[1], [1], [0], [0], [0, 0, 1, 0], [], []>} : vector<16x32xbf16>, vector<16x32xbf16>, vector<16x16xf32> -> vector<16x16xf32>
    %276 = arith.addf %275, %4 : vector<16x16xf32>
    %cst_96 = arith.constant dense<0xFF800000> : vector<16xf32>
    %277 = vector.multi_reduction <maximumf>, %276, %cst_96 [1] : vector<16x16xf32> to vector<16xf32>
    %278 = vector.shape_cast %277 : vector<16xf32> to vector<16x1xf32>
    %279 = vector.broadcast %278 : vector<16x1xf32> to vector<16x16xf32>
    %280 = arith.subf %276, %279 : vector<16x16xf32>
    %281 = math.exp %280 : vector<16x16xf32>
    %cst_97 = arith.constant dense<0.000000e+00> : vector<16xf32>
    %282 = vector.multi_reduction <add>, %281, %cst_97 [1] : vector<16x16xf32> to vector<16xf32>
    %283 = vector.shape_cast %282 : vector<16xf32> to vector<16x1xf32>
    %284 = tpu.reciprocal %283 {approx = true} : vector<16x1xf32> -> vector<16x1xf32>
    %285 = vector.broadcast %284 : vector<16x1xf32> to vector<16x16xf32>
    %286 = arith.mulf %281, %285 : vector<16x16xf32>
    %287 = arith.truncf %286 : vector<16x16xf32> to vector<16x16xbf16>
    %288 = vector.extract_strided_slice %196 {offsets = [0, 96], sizes = [16, 32], strides = [1, 1]} : vector<16x128xbf16> to vector<16x32xbf16>
    %cst_98 = arith.constant dense<0.000000e+00> : vector<16x32xf32>
    %289 = tpu.matmul %287, %288, %cst_98 {dimension_numbers = #tpu.dot_dimension_numbers<[1], [0], [0], [1], [0, 0, 1, 1], [], []>} : vector<16x16xbf16>, vector<16x32xbf16>, vector<16x32xf32> -> vector<16x32xf32>
    %290 = arith.truncf %289 : vector<16x32xf32> to vector<16x32xbf16>
    %c96_99 = arith.constant 96 : index
    %c1536_100 = arith.constant 1536 : index
    %291 = vector.load %arg5[%c96_99, %c1536_100] : memref<128x2176xbf16, #tpu.memory_space<vmem>>, vector<32x128xbf16>
    %cst_101 = arith.constant dense<0.000000e+00> : vector<16x128xf32>
    %292 = tpu.matmul %290, %291, %cst_101 {dimension_numbers = #tpu.dot_dimension_numbers<[1], [0], [0], [1], [0, 0, 1, 1], [], []>} : vector<16x32xbf16>, vector<32x128xbf16>, vector<16x128xf32> -> vector<16x128xf32>
    %293 = arith.addf %272, %292 : vector<16x128xf32>
    %294 = arith.addf %173, %293 : vector<16x128xf32>
    %295 = arith.mulf %294, %294 : vector<16x128xf32>
    %cst_102 = arith.constant dense<0.000000e+00> : vector<16xf32>
    %296 = vector.multi_reduction <add>, %295, %cst_102 [1] : vector<16x128xf32> to vector<16xf32>
    %297 = vector.shape_cast %296 : vector<16xf32> to vector<16x1xf32>
    %cst_103 = arith.constant 1.280000e+02 : f32
    %298 = vector.broadcast %cst_103 : f32 to vector<16x1xf32>
    %299 = arith.divf %297, %298 : vector<16x1xf32>
    %cst_104 = arith.constant 9.99999997E-7 : f32
    %300 = vector.broadcast %cst_104 : f32 to vector<16x1xf32>
    %301 = arith.addf %299, %300 : vector<16x1xf32>
    %302 = math.rsqrt %301 : vector<16x1xf32>
    %303 = vector.broadcast %302 : vector<16x1xf32> to vector<16x128xf32>
    %304 = arith.mulf %294, %303 : vector<16x128xf32>
    %c5 = arith.constant 5 : index
    %c0_105 = arith.constant 0 : index
    %305 = vector.load %arg4[%c5, %c0_105] : memref<8x128xf32, #tpu.memory_space<vmem>>, vector<1x128xf32>
    %306 = vector.broadcast %305 : vector<1x128xf32> to vector<16x128xf32>
    %307 = arith.mulf %304, %306 : vector<16x128xf32>
    %308 = arith.truncf %307 : vector<16x128xf32> to vector<16x128xbf16>
    %c0_106 = arith.constant 0 : index
    %c1664 = arith.constant 1664 : index
    %309 = vector.load %arg5[%c0_106, %c1664] : memref<128x2176xbf16, #tpu.memory_space<vmem>>, vector<128x512xbf16>
    %cst_107 = arith.constant dense<0.000000e+00> : vector<16x512xf32>
    %310 = tpu.matmul %308, %309, %cst_107 {dimension_numbers = #tpu.dot_dimension_numbers<[1], [0], [0], [1], [0, 0, 1, 1], [], []>} : vector<16x128xbf16>, vector<128x512xbf16>, vector<16x512xf32> -> vector<16x512xf32>
    %311 = vector.extract_strided_slice %310 {offsets = [0, 0], sizes = [16, 256], strides = [1, 1]} : vector<16x512xf32> to vector<16x256xf32>
    %312 = arith.negf %311 : vector<16x256xf32>
    %313 = math.exp %312 : vector<16x256xf32>
    %cst_108 = arith.constant 1.000000e+00 : f32
    %314 = vector.broadcast %cst_108 : f32 to vector<16x256xf32>
    %315 = arith.addf %314, %313 : vector<16x256xf32>
    %316 = arith.divf %314, %315 : vector<16x256xf32>
    %317 = arith.mulf %311, %316 : vector<16x256xf32>
    %318 = vector.extract_strided_slice %310 {offsets = [0, 256], sizes = [16, 256], strides = [1, 1]} : vector<16x512xf32> to vector<16x256xf32>
    %319 = arith.mulf %317, %318 : vector<16x256xf32>
    %320 = arith.truncf %319 : vector<16x256xf32> to vector<16x256xbf16>
    %c512_109 = arith.constant 512 : index
    %c0_110 = arith.constant 0 : index
    %321 = vector.load %arg6[%c512_109, %c0_110] : memref<768x128xbf16, #tpu.memory_space<vmem>>, vector<256x128xbf16>
    %cst_111 = arith.constant dense<0.000000e+00> : vector<16x128xf32>
    %322 = tpu.matmul %320, %321, %cst_111 {dimension_numbers = #tpu.dot_dimension_numbers<[1], [0], [0], [1], [0, 0, 1, 1], [], []>} : vector<16x256xbf16>, vector<256x128xbf16>, vector<16x128xf32> -> vector<16x128xf32>
    %323 = arith.addf %294, %322 : vector<16x128xf32>
    %c0_112 = arith.constant 0 : index
    %c0_113 = arith.constant 0 : index
    %324 = vector.load %arg7[%c0_112, %c0_113] : memref<16x128xf32, #tpu.memory_space<vmem>>, vector<16x128xf32>
    tpu.vector_store %arg7[%c0_112, %c0_113], %323 {strides = array<i32>} : memref<16x128xf32, #tpu.memory_space<vmem>>, vector<16x128xf32>,
    return
  }
}

</mosaic_0001>

<llo_original>
// kernel: tpu_custom_call.1
$region0: #{tpu_custom_call.1}
  #allocation0 [shape = 'u32[]', space=smem, size = 0x4, offset = 0x4, fixed_abs, tag = 'smem constant byte address 0x4 - core index']
  #allocation1 [shape = 'u32[72,128]{1,0:T(1,128)}', space=vmem, size = 0x9000, scoped, tag = 'internal scratch']
  %s0 = inlined_call_operand.vmem [shape: f32[16,128], index: 0, kind: input, shape index: {}]
  %s1 = inlined_call_operand.vmem [shape: f32[16,128], index: 1, kind: input, shape index: {}]
  %s2 = inlined_call_operand.vmem [shape: f32[48,16], index: 2, kind: input, shape index: {}]
  %s3 = inlined_call_operand.vmem [shape: f32[32,128], index: 3, kind: input, shape index: {}]
  %s4 = inlined_call_operand.hbm [shape: f32[8,128], index: 4, kind: input, shape index: {}]
  %s5 = inlined_call_operand.hbm [shape: bf16[128,2176], index: 5, kind: input, shape index: {}]
  %s6 = inlined_call_operand.hbm [shape: bf16[768,128], index: 6, kind: input, shape index: {}]
  %s7 = inlined_call_operand.hbm [shape: f32[16,128], index: 7, kind: output, shape index: {}]
  %s8 = sld [smem:[#allocation0]]
  $region50: #{tpu_custom_call.1} parent=0
    _
  %s10 = ssub.s32 1, %s8
  %s11 = scalar_select 0, %s10, %s8
  $region1: #{tpu_custom_call.1} parent=0
    #allocation2 [shape = 'u8[4096]{0}', space=vmem, size = 0x1000, scoped, tag = 'input window, operand 4, single buffered']
    #allocation3 [shape = 's32[1]{0}', space=sflag, size = 0x4, scoped, tag = 'scoped memory for tpu_custom_call.1']
    #allocation4 [shape = 's32[1]{0}', space=sflag, size = 0x4, scoped, tag = 'scoped memory for tpu_custom_call.1']
    #allocation5 [shape = 'u8[557056]{0}', space=vmem, size = 0x88000, scoped, tag = 'input window, operand 5, single buffered']
    #allocation6 [shape = 's32[1]{0}', space=sflag, size = 0x4, scoped, tag = 'scoped memory for tpu_custom_call.1']
    #allocation7 [shape = 'u8[196608]{0}', space=vmem, size = 0x30000, scoped, tag = 'input window, operand 6, single buffered']
    #allocation8 [shape = 'u8[8192]{0}', space=vmem, size = 0x2000, scoped, tag = 'output window, operand 0, single buffered']
    %12 = vsyncpa [#allocation3], 0
    %13 = vsyncpa [#allocation6], 0
    %14 = vsyncpa [#allocation4], 0
    // Predicated region
    $region2: #{tpu_custom_call.1} parent=1 // pred_check
      _
    $region3: #{tpu_custom_call.1} parent=1 // pred_check_branch
      %16 = sbr.rel (0) target = $region5
    $region4: #{tpu_custom_call.1} parent=1 // pred_region
      _
    $region5: #{tpu_custom_call.1} parent=1 // pred_fallthru
      _
    // Predicated region
    $region6: #{tpu_custom_call.1} parent=1 // pred_check
      _
    $region7: #{tpu_custom_call.1} parent=1 // pred_check_branch
      %18 = sbr.rel (0) target = $region9
    $region8: #{tpu_custom_call.1} parent=1 // pred_region
      _
    $region9: #{tpu_custom_call.1} parent=1 // pred_fallthru
      _
    // Predicated region
    $region10: #{tpu_custom_call.1} parent=1 // pred_check
      _
    $region11: #{tpu_custom_call.1} parent=1 // pred_check_branch
      %20 = sbr.rel (0) target = $region13
    $region12: #{tpu_custom_call.1} parent=1 // pred_region
      _
    $region13: #{tpu_custom_call.1} parent=1 // pred_fallthru
      _
    // Predicated region
    $region14: #{tpu_custom_call.1} parent=1 // pred_check
      _
    $region15: #{tpu_custom_call.1} parent=1 // pred_check_branch
      %22 = sbr.rel (0) target = $region17
    $region16: #{tpu_custom_call.1} parent=1 // pred_region
      _
    $region17: #{tpu_custom_call.1} parent=1 // pred_fallthru
      _
    // Predicated region
    $region18: #{tpu_custom_call.1} parent=1 // pred_check
      _
    $region19: #{tpu_custom_call.1} parent=1 // pred_check_branch
      %24 = sbr.rel (0) target = $region21
    $region20: #{tpu_custom_call.1} parent=1 // pred_region
      %26 = vsyncadd [#allocation3], 0
      %s28 = sshll.u32 %s4, 4
      %s29 = int_to_ptr.hbm [resolvable:$true] %s28
      %s30 = sshll.u32 [#allocation2], 4
      %s31 = int_to_ptr.vmem [resolvable:$true] %s30
      %33 = dma.hbm_to_vmem [thread:$0]  %s29, 128, %s31, [#allocation3]
    $region21: #{tpu_custom_call.1} parent=1 // pred_fallthru
      _
    // Predicated region
    $region22: #{tpu_custom_call.1} parent=1 // pred_check
      _
    $region23: #{tpu_custom_call.1} parent=1 // pred_check_branch
      %35 = sbr.rel (0) target = $region25
    $region24: #{tpu_custom_call.1} parent=1 // pred_region
      %37 = vsyncadd [#allocation6], 0
      %s38 = sshll.u32 %s5, 4
      %s39 = int_to_ptr.hbm [resolvable:$true] %s38
      %s40 = sshll.u32 [#allocation5], 4
      %s41 = int_to_ptr.vmem [resolvable:$true] %s40
      %46 = dma.hbm_to_vmem [thread:$0]  %s39, 17408, %s41, [#allocation6], 1088, 1088, 68
    $region25: #{tpu_custom_call.1} parent=1 // pred_fallthru
      _
    // Predicated region
    $region26: #{tpu_custom_call.1} parent=1 // pred_check
      _
    $region27: #{tpu_custom_call.1} parent=1 // pred_check_branch
      %48 = sbr.rel (0) target = $region29
    $region28: #{tpu_custom_call.1} parent=1 // pred_region
      %50 = vsyncadd [#allocation6], 0
      %s51 = sshll.u32 %s6, 4
      %s52 = int_to_ptr.hbm [resolvable:$true] %s51
      %s53 = sshll.u32 [#allocation7], 4
      %s54 = int_to_ptr.vmem [resolvable:$true] %s53
      %59 = dma.hbm_to_vmem [thread:$0]  %s52, 6144, %s54, [#allocation6], 64, 64, 4
    $region29: #{tpu_custom_call.1} parent=1 // pred_fallthru
      _
    // Predicated region
    $region30: #{tpu_custom_call.1} parent=1 // pred_check
      _
    $region31: #{tpu_custom_call.1} parent=1 // pred_check_branch
      %61 = sbr.rel (0) target = $region33
    $region32: #{tpu_custom_call.1} parent=1 // pred_region
      %63 = dma.done [#allocation3], 128
    $region33: #{tpu_custom_call.1} parent=1 // pred_fallthru
      _
    // Predicated region
    $region34: #{tpu_custom_call.1} parent=1 // pred_check
      _
    $region35: #{tpu_custom_call.1} parent=1 // pred_check_branch
      %65 = sbr.rel (0) target = $region37
    $region36: #{tpu_custom_call.1} parent=1 // pred_region
      %67 = dma.done [#allocation6], 17408
    $region37: #{tpu_custom_call.1} parent=1 // pred_fallthru
      _
    // Predicated region
    $region38: #{tpu_custom_call.1} parent=1 // pred_check
      _
    $region39: #{tpu_custom_call.1} parent=1 // pred_check_branch
      %69 = sbr.rel (0) target = $region41
    $region40: #{tpu_custom_call.1} parent=1 // pred_region
      %71 = dma.done [#allocation6], 6144
    $region41: #{tpu_custom_call.1} parent=1 // pred_fallthru
      _
    %v73 = vld [vmem:[%s0] sm:$0xff]
    %v74 = vld [vmem:[%s0 + $0x8] sm:$0xff]
    %v75 = vld [vmem:[%s1] sm:$0xff]
    %v76 = vld [vmem:[%s1 + $0x8] sm:$0xff]
    %v77 = vpack.c.bf16 %v76, %v75
    %v78 = vld [vmem:[%s2] sm:$0xff]
    %v79 = vld [vmem:[%s2 + $0x8] sm:$0xff]
    %v80 = vld [vmem:[%s2 + $0x10] sm:$0xff]
    %v81 = vld [vmem:[%s2 + $0x18] sm:$0xff]
    %v82 = vld [vmem:[%s2 + $0x20] sm:$0xff]
    %v83 = vld [vmem:[%s2 + $0x28] sm:$0xff]
    %v84 = vld [vmem:[%s3] sm:$0xff]
    %v85 = vld [vmem:[%s3 + $0x8] sm:$0xff]
    %v86 = vld [vmem:[%s3 + $0x10] sm:$0xff]
    %v87 = vld [vmem:[%s3 + $0x18] sm:$0xff]
    %88 = vadd.xlane.f32.xlu0 %v73
    %v89 = vpop.xlane.xlu0 %88
    %90 = vadd.xlane.f32.xlu0 %v74
    %v91 = vpop.xlane.xlu0 %90
    %v92 = vrcp.pop 128.0
    %v93 = vmul.f32 128.0, %v92
    %v94 = vsub.f32 1.0, %v93
    %v95 = vmul.f32 %v92, %v94
    %v96 = vadd.f32 %v92, %v95
    %vm97 = vweird.f32 %v92
    %v98 = vsel %vm97, %v92, %v96
    %v99 = vmul.f32 %v89, %v98
    %v100 = vmul.f32 %v91, %v98
    %v101 = vsub.f32 %v73, %v99
    %v102 = vsub.f32 %v74, %v100
    %v103 = vmul.f32 %v101, %v101
    %v104 = vmul.f32 %v102, %v102
    %105 = vadd.xlane.f32.xlu0 %v103
    %v106 = vpop.xlane.xlu0 %105
    %107 = vadd.xlane.f32.xlu0 %v104
    %v108 = vpop.xlane.xlu0 %107
    %v109 = vmul.f32 %v106, %v98
    %v110 = vmul.f32 %v108, %v98
    %v111 = vadd.f32 %v109, 1e-05
    %v112 = vadd.f32 %v110, 1e-05
    %v113 = vrsqrt.pop %v111
    %v114 = vmul.f32 %v113, %v111
    %v115 = vmul.f32 %v114, %v113
    %v116 = vmul.f32 0.5, %v115
    %v117 = vsub.f32 1.5, %v116
    %v118 = vmul.f32 %v113, %v117
    %vm119 = vweird.f32 %v111
    %vm120 = vweird.f32 %v113
    %vm121 = vmor %vm119, %vm120
    %v122 = vsel %vm121, %v113, %v118
    %v123 = vrsqrt.pop %v112
    %v124 = vmul.f32 %v123, %v112
    %v125 = vmul.f32 %v124, %v123
    %v126 = vmul.f32 0.5, %v125
    %v127 = vsub.f32 1.5, %v126
    %v128 = vmul.f32 %v123, %v127
    %vm129 = vweird.f32 %v112
    %vm130 = vweird.f32 %v123
    %vm131 = vmor %vm129, %vm130
    %v132 = vsel %vm131, %v123, %v128
    %v133 = vmul.f32 %v101, %v122
    %v134 = vmul.f32 %v102, %v132
    %v135 = vld [vmem:[#allocation2] sm:$0x1]
    %v136 = vperm.slane %v135, 0
    %v137 = vmul.f32 %v133, %v136
    %v138 = vmul.f32 %v134, %v136
    %v139 = vld [vmem:[#allocation2 + $0x1] sm:$0x1]
    %v140 = vperm.slane %v139, 0
    %v141 = vadd.f32 %v137, %v140
    %v142 = vadd.f32 %v138, %v140
    %v143 = vpack.c.bf16 %v142, %v141
    %v144 = vld [vmem:[#allocation5] sm:$0xf]
    %v145 = vld [vmem:[#allocation5 + $0x44] sm:$0xf]
    %v146 = vld [vmem:[#allocation5 + $0x88] sm:$0xf]
    %v147 = vld [vmem:[#allocation5 + $0xcc] sm:$0xf]
    %v148 = vld [vmem:[#allocation5 + $0x110] sm:$0xf]
    %v149 = vld [vmem:[#allocation5 + $0x154] sm:$0xf]
    %v150 = vld [vmem:[#allocation5 + $0x198] sm:$0xf]
    %v151 = vld [vmem:[#allocation5 + $0x1dc] sm:$0xf]
    %v152 = vld [vmem:[#allocation5 + $0x220] sm:$0xf]
    %v153 = vld [vmem:[#allocation5 + $0x264] sm:$0xf]
    %v154 = vld [vmem:[#allocation5 + $0x2a8] sm:$0xf]
    %v155 = vld [vmem:[#allocation5 + $0x2ec] sm:$0xf]
    %v156 = vld [vmem:[#allocation5 + $0x330] sm:$0xf]
    %v157 = vld [vmem:[#allocation5 + $0x374] sm:$0xf]
    %v158 = vld [vmem:[#allocation5 + $0x3b8] sm:$0xf]
    %v159 = vld [vmem:[#allocation5 + $0x3fc] sm:$0xf]
    %v176 = vunpack.c.l.b16 %v144
    %v177 = vunpack.c.l.b16 %v145
    %v178 = vunpack.c.l.b16 %v146
    %v179 = vunpack.c.l.b16 %v147
    %v180 = vunpack.c.l.b16 %v148
    %v181 = vunpack.c.l.b16 %v149
    %v182 = vunpack.c.l.b16 %v150
    %v183 = vunpack.c.l.b16 %v151
    %v184 = vunpack.c.l.b16 %v152
    %v185 = vunpack.c.l.b16 %v153
    %v186 = vunpack.c.l.b16 %v154
    %v187 = vunpack.c.l.b16 %v155
    %v188 = vunpack.c.l.b16 %v156
    %v189 = vunpack.c.l.b16 %v157
    %v190 = vunpack.c.l.b16 %v158
    %v191 = vunpack.c.l.b16 %v159
    %v192 = vpack.c.b16 %v177, %v176
    %v193 = vpack.c.b16 %v179, %v178
    %v194 = vpack.c.b16 %v181, %v180
    %v195 = vpack.c.b16 %v183, %v182
    %v196 = vpack.c.b16 %v185, %v184
    %v197 = vpack.c.b16 %v187, %v186
    %v198 = vpack.c.b16 %v189, %v188
    %v199 = vpack.c.b16 %v191, %v190
    %208 = vmatpush.bf16.msra.mxu0 %v199
    %209 = vmatpush.bf16.msra.mxu0 %v198
    %210 = vmatpush.bf16.msra.mxu0 %v197
    %211 = vmatpush.bf16.msra.mxu0 %v196
    %212 = vmatpush.bf16.msra.mxu0 %v195
    %213 = vmatpush.bf16.msra.mxu0 %v194
    %214 = vmatpush.bf16.msra.mxu0 %v193
    %215 = vmatpush.bf16.msra.mxu0 %v192
    %216 = vmatmul.bf16.gmra.mxu0 %v143
    %v217 = vpop.f32.mrf.mxu0
    %v218 = vadd.f32 0.0, %v217
    %v219 = vpop.f32.mrf.mxu0
    %v220 = vadd.f32 0.0, %v219
    %221 = vdwg.mxu0
    %v222 = vpack.c.bf16 %v218, %v218
    %v223 = vpack.c.bf16 %v220, %v220
    %v224 = vld [vmem:[#allocation5 + $0x4] sm:$0xff]
    %v225 = vld [vmem:[#allocation5 + $0x48] sm:$0xff]
    %v226 = vld [vmem:[#allocation5 + $0x8c] sm:$0xff]
    %v227 = vld [vmem:[#allocation5 + $0xd0] sm:$0xff]
    %v228 = vld [vmem:[#allocation5 + $0x114] sm:$0xff]
    %v229 = vld [vmem:[#allocation5 + $0x158] sm:$0xff]
    %v230 = vld [vmem:[#allocation5 + $0x19c] sm:$0xff]
    %v231 = vld [vmem:[#allocation5 + $0x1e0] sm:$0xff]
    %v232 = vld [vmem:[#allocation5 + $0x224] sm:$0xff]
    %v233 = vld [vmem:[#allocation5 + $0x268] sm:$0xff]
    %v234 = vld [vmem:[#allocation5 + $0x2ac] sm:$0xff]
    %v235 = vld [vmem:[#allocation5 + $0x2f0] sm:$0xff]
    %v236 = vld [vmem:[#allocation5 + $0x334] sm:$0xff]
    %v237 = vld [vmem:[#allocation5 + $0x378] sm:$0xff]
    %v238 = vld [vmem:[#allocation5 + $0x3bc] sm:$0xff]
    %v239 = vld [vmem:[#allocation5 + $0x400] sm:$0xff]
    %v256 = vunpack.c.l.b16 %v224
    %v257 = vunpack.c.h.b16 %v224
    %v258 = vunpack.c.l.b16 %v225
    %v259 = vunpack.c.h.b16 %v225
    %v260 = vunpack.c.l.b16 %v226
    %v261 = vunpack.c.h.b16 %v226
    %v262 = vunpack.c.l.b16 %v227
    %v263 = vunpack.c.h.b16 %v227
    %v264 = vunpack.c.l.b16 %v228
    %v265 = vunpack.c.h.b16 %v228
    %v266 = vunpack.c.l.b16 %v229
    %v267 = vunpack.c.h.b16 %v229
    %v268 = vunpack.c.l.b16 %v230
    %v269 = vunpack.c.h.b16 %v230
    %v270 = vunpack.c.l.b16 %v231
    %v271 = vunpack.c.h.b16 %v231
    %v272 = vunpack.c.l.b16 %v232
    %v273 = vunpack.c.h.b16 %v232
    %v274 = vunpack.c.l.b16 %v233
    %v275 = vunpack.c.h.b16 %v233
    %v276 = vunpack.c.l.b16 %v234
    %v277 = vunpack.c.h.b16 %v234
    %v278 = vunpack.c.l.b16 %v235
    %v279 = vunpack.c.h.b16 %v235
    %v280 = vunpack.c.l.b16 %v236
    %v281 = vunpack.c.h.b16 %v236
    %v282 = vunpack.c.l.b16 %v237
    %v283 = vunpack.c.h.b16 %v237
    %v284 = vunpack.c.l.b16 %v238
    %v285 = vunpack.c.h.b16 %v238
    %v286 = vunpack.c.l.b16 %v239
    %v287 = vunpack.c.h.b16 %v239
    %v288 = vpack.c.b16 %v258, %v256
    %v289 = vpack.c.b16 %v259, %v257
    %v290 = vpack.c.b16 %v262, %v260
    %v291 = vpack.c.b16 %v263, %v261
    %v292 = vpack.c.b16 %v266, %v264
    %v293 = vpack.c.b16 %v267, %v265
    %v294 = vpack.c.b16 %v270, %v268
    %v295 = vpack.c.b16 %v271, %v269
    %v296 = vpack.c.b16 %v274, %v272
    %v297 = vpack.c.b16 %v275, %v273
    %v298 = vpack.c.b16 %v278, %v276
    %v299 = vpack.c.b16 %v279, %v277
    %v300 = vpack.c.b16 %v282, %v280
    %v301 = vpack.c.b16 %v283, %v281
    %v302 = vpack.c.b16 %v286, %v284
    %v303 = vpack.c.b16 %v287, %v285
    %320 = vmatpush.bf16.msra.mxu0 %v302
    %321 = vmatpush.bf16.msra.mxu0 %v300
    %322 = vmatpush.bf16.msra.mxu0 %v298
    %323 = vmatpush.bf16.msra.mxu0 %v296
    %324 = vmatpush.bf16.msra.mxu0 %v294
    %325 = vmatpush.bf16.msra.mxu0 %v292
    %326 = vmatpush.bf16.msra.mxu0 %v290
    %327 = vmatpush.bf16.msra.mxu0 %v288
    %328 = vmatmul.bf16.gmra.mxu0 %v77
    %v329 = vpop.f32.mrf.mxu0
    %v330 = vadd.f32 0.0, %v329
    %v331 = vpop.f32.mrf.mxu0
    %v332 = vadd.f32 0.0, %v331
    %333 = vdwg.mxu0
    %334 = vmatpush.bf16.msra.mxu0 %v303
    %335 = vmatpush.bf16.msra.mxu0 %v301
    %336 = vmatpush.bf16.msra.mxu0 %v299
    %337 = vmatpush.bf16.msra.mxu0 %v297
    %338 = vmatpush.bf16.msra.mxu0 %v295
    %339 = vmatpush.bf16.msra.mxu0 %v293
    %340 = vmatpush.bf16.msra.mxu0 %v291
    %341 = vmatpush.bf16.msra.mxu0 %v289
    %342 = vmatmul.bf16.gmra.mxu0 %v77
    %v343 = vpop.f32.mrf.mxu0
    %v344 = vadd.f32 0.0, %v343
    %v345 = vpop.f32.mrf.mxu0
    %v346 = vadd.f32 0.0, %v345
    %347 = vdwg.mxu0
    %v348 = vpack.c.bf16 %v330, %v330
    %v349 = vpack.c.bf16 %v332, %v332
    %v350 = vpack.c.bf16 %v344, %v344
    %v351 = vpack.c.bf16 %v346, %v346
    %v354 = vunpack.c.l.b16 %v222
    %v355 = vunpack.c.l.b16 %v223
    %v356 = vpack.c.b16 %v355, %v354
    %v359 = vunpack.c.l.b16 %v348
    %v360 = vunpack.c.l.b16 %v349
    %v361 = vpack.c.b16 %v360, %v359
    %vm362 = vcmask 261120
    %v364 = vsel %vm362, %v356, 0
    %v367 = vsel %vm362, %v361, 0
    %369 = vmatpush.bf16.xpose.msra.mxu0 0
    %370 = vmatpush.bf16.xpose.msra.mxu0 0
    %371 = vmatpush.bf16.xpose.msra.mxu0 0
    %372 = vmatpush.bf16.xpose.msra.mxu0 0
    %373 = vmatpush.bf16.xpose.msra.mxu0 0
    %374 = vmatpush.bf16.xpose.msra.mxu0 0
    %375 = vmatpush.bf16.xpose.msra.mxu0 0
    %376 = vmatpush.bf16.xpose.msra.mxu0 %v367
    %377 = vmatmul.bf16.gmra.mxu0 %v364
    %v378 = vpop.f32.mrf.mxu0
    %v379 = vadd.f32 %v78, %v378
    %v380 = vpop.f32.mrf.mxu0
    %v381 = vadd.f32 %v79, %v380
    %382 = vdwg.mxu0
    %vm383 = vcmask 130048
    %v384 = vsel %vm383, %v379, -inf
    %385 = vmax.xlane.f32.xlu0 %v384
    %v386 = vpop.xlane.xlu0 %385
    %v387 = vsel %vm383, %v381, -inf
    %388 = vmax.xlane.f32.xlu0 %v387
    %v389 = vpop.xlane.xlu0 %388
    %v390 = vsub.f32 %v379, %v386
    %v391 = vsub.f32 %v381, %v389
    %v392 = vmul.f32 %v390, 1.442695
    %v393 = vpow.pop %v392
    %v394 = vmul.f32 %v391, 1.442695
    %v395 = vpow.pop %v394
    %v396 = vsel %vm383, %v393, 0.0
    %397 = vadd.xlane.f32.xlu0 %v396
    %v398 = vpop.xlane.xlu0 %397
    %v399 = vsel %vm383, %v395, 0.0
    %400 = vadd.xlane.f32.xlu0 %v399
    %v401 = vpop.xlane.xlu0 %400
    %v402 = vrcp.pop %v398
    %v403 = vrcp.pop %v401
    %v404 = vmul.f32 %v393, %v402
    %v405 = vmul.f32 %v395, %v403
    %v406 = vpack.c.bf16 %v405, %v404
    %v409 = vunpack.c.l.b16 %v350
    %v410 = vunpack.c.l.b16 %v351
    %v411 = vpack.c.b16 %v410, %v409
    %v414 = vsel %vm383, %v406, 0
    %416 = vmatpush.bf16.msra.mxu0 0
    %417 = vmatpush.bf16.msra.mxu0 0
    %418 = vmatpush.bf16.msra.mxu0 0
    %419 = vmatpush.bf16.msra.mxu0 0
    %420 = vmatpush.bf16.msra.mxu0 0
    %421 = vmatpush.bf16.msra.mxu0 0
    %422 = vmatpush.bf16.msra.mxu0 0
    %423 = vmatpush.bf16.msra.mxu0 %v411
    %424 = vmatmul.bf16.gmra.mxu0 %v414
    %v425 = vpop.f32.mrf.mxu0
    %v426 = vadd.f32 0.0, %v425
    %v427 = vpop.f32.mrf.mxu0
    %v428 = vadd.f32 0.0, %v427
    %429 = vdwg.mxu0
    %v430 = vpack.c.bf16 %v428, %v426
    %v431 = vld [vmem:[#allocation5 + $0xc] sm:$0xf]
    %v432 = vld [vmem:[#allocation5 + $0x50] sm:$0xf]
    %v433 = vld [vmem:[#allocation5 + $0x94] sm:$0xf]
    %v434 = vld [vmem:[#allocation5 + $0xd8] sm:$0xf]
    %435 = vrot.lane.b32.xlu0 %v356, 96
    %v436 = vpop.permute.xlu0 %435
    %437 = vrot.lane.b32.xlu0 %v361, 96
    %v438 = vpop.permute.xlu0 %437
    %v440 = vsel %vm362, %v436, 0
    %v443 = vsel %vm362, %v438, 0
    %445 = vmatpush.bf16.xpose.msra.mxu0 0
    %446 = vmatpush.bf16.xpose.msra.mxu0 0
    %447 = vmatpush.bf16.xpose.msra.mxu0 0
    %448 = vmatpush.bf16.xpose.msra.mxu0 0
    %449 = vmatpush.bf16.xpose.msra.mxu0 0
    %450 = vmatpush.bf16.xpose.msra.mxu0 0
    %451 = vmatpush.bf16.xpose.msra.mxu0 0
    %452 = vmatpush.bf16.xpose.msra.mxu0 %v443
    %453 = vmatmul.bf16.gmra.mxu0 %v440
    %v454 = vpop.f32.mrf.mxu0
    %v455 = vadd.f32 %v78, %v454
    %v456 = vpop.f32.mrf.mxu0
    %v457 = vadd.f32 %v79, %v456
    %458 = vdwg.mxu0
    %v459 = vsel %vm383, %v455, -inf
    %460 = vmax.xlane.f32.xlu0 %v459
    %v461 = vpop.xlane.xlu0 %460
    %v462 = vsel %vm383, %v457, -inf
    %463 = vmax.xlane.f32.xlu0 %v462
    %v464 = vpop.xlane.xlu0 %463
    %v465 = vsub.f32 %v455, %v461
    %v466 = vsub.f32 %v457, %v464
    %v467 = vmul.f32 %v465, 1.442695
    %v468 = vpow.pop %v467
    %v469 = vmul.f32 %v466, 1.442695
    %v470 = vpow.pop %v469
    %v471 = vsel %vm383, %v468, 0.0
    %472 = vadd.xlane.f32.xlu0 %v471
    %v473 = vpop.xlane.xlu0 %472
    %v474 = vsel %vm383, %v470, 0.0
    %475 = vadd.xlane.f32.xlu0 %v474
    %v476 = vpop.xlane.xlu0 %475
    %v477 = vrcp.pop %v473
    %v478 = vrcp.pop %v476
    %v479 = vmul.f32 %v468, %v477
    %v480 = vmul.f32 %v470, %v478
    %v481 = vpack.c.bf16 %v480, %v479
    %482 = vrot.lane.b32.xlu0 %v411, 96
    %v483 = vpop.permute.xlu0 %482
    %v486 = vsel %vm383, %v481, 0
    %488 = vmatpush.bf16.msra.mxu0 0
    %489 = vmatpush.bf16.msra.mxu0 0
    %490 = vmatpush.bf16.msra.mxu0 0
    %491 = vmatpush.bf16.msra.mxu0 0
    %492 = vmatpush.bf16.msra.mxu0 0
    %493 = vmatpush.bf16.msra.mxu0 0
    %494 = vmatpush.bf16.msra.mxu0 0
    %495 = vmatpush.bf16.msra.mxu0 %v483
    %496 = vmatmul.bf16.gmra.mxu0 %v486
    %v497 = vpop.f32.mrf.mxu0
    %v498 = vadd.f32 0.0, %v497
    %v499 = vpop.f32.mrf.mxu0
    %v500 = vadd.f32 0.0, %v499
    %501 = vdwg.mxu0
    %v502 = vpack.c.bf16 %v500, %v498
    %v503 = vld [vmem:[#allocation5 + $0x11c] sm:$0xf]
    %v504 = vld [vmem:[#allocation5 + $0x160] sm:$0xf]
    %v505 = vld [vmem:[#allocation5 + $0x1a4] sm:$0xf]
    %v506 = vld [vmem:[#allocation5 + $0x1e8] sm:$0xf]
    %v511 = vunpack.c.l.b16 %v503
    %v512 = vunpack.c.l.b16 %v504
    %v513 = vunpack.c.l.b16 %v505
    %v514 = vunpack.c.l.b16 %v506
    %v515 = vpack.c.b16 %v512, %v511
    %v516 = vpack.c.b16 %v514, %v513
    %v520 = vsel %vm362, %v502, 0
    %522 = vmatpush.bf16.msra.mxu0 0
    %523 = vmatpush.bf16.msra.mxu0 0
    %524 = vmatpush.bf16.msra.mxu0 0
    %525 = vmatpush.bf16.msra.mxu0 0
    %526 = vmatpush.bf16.msra.mxu0 0
    %527 = vmatpush.bf16.msra.mxu0 0
    %528 = vmatpush.bf16.msra.mxu0 %v516
    %529 = vmatpush.bf16.msra.mxu0 %v515
    %530 = vmatmul.bf16.gmra.mxu0 %v520
    %v531 = vpop.f32.mrf.mxu0
    %v532 = vadd.f32 0.0, %v531
    %v533 = vpop.f32.mrf.mxu0
    %v534 = vadd.f32 0.0, %v533
    %535 = vdwg.mxu0
    %v540 = vunpack.c.l.b16 %v431
    %v541 = vunpack.c.l.b16 %v432
    %v542 = vunpack.c.l.b16 %v433
    %v543 = vunpack.c.l.b16 %v434
    %v544 = vpack.c.b16 %v541, %v540
    %v545 = vpack.c.b16 %v543, %v542
    %v549 = vsel %vm362, %v430, 0
    %551 = vmatpush.bf16.msra.mxu0 0
    %552 = vmatpush.bf16.msra.mxu0 0
    %553 = vmatpush.bf16.msra.mxu0 0
    %554 = vmatpush.bf16.msra.mxu0 0
    %555 = vmatpush.bf16.msra.mxu0 0
    %556 = vmatpush.bf16.msra.mxu0 0
    %557 = vmatpush.bf16.msra.mxu0 %v545
    %558 = vmatpush.bf16.msra.mxu0 %v544
    %559 = vmatmul.bf16.gmra.mxu0 %v549
    %v560 = vpop.f32.mrf.mxu0
    %v561 = vadd.f32 %v532, %v560
    %v562 = vpop.f32.mrf.mxu0
    %v563 = vadd.f32 %v534, %v562
    %564 = vdwg.mxu0
    %565 = vrot.lane.b32.xlu0 %v356, 64
    %v566 = vpop.permute.xlu0 %565
    %567 = vrot.lane.b32.xlu0 %v361, 64
    %v568 = vpop.permute.xlu0 %567
    %v570 = vsel %vm362, %v566, 0
    %v573 = vsel %vm362, %v568, 0
    %575 = vmatpush.bf16.xpose.msra.mxu0 0
    %576 = vmatpush.bf16.xpose.msra.mxu0 0
    %577 = vmatpush.bf16.xpose.msra.mxu0 0
    %578 = vmatpush.bf16.xpose.msra.mxu0 0
    %579 = vmatpush.bf16.xpose.msra.mxu0 0
    %580 = vmatpush.bf16.xpose.msra.mxu0 0
    %581 = vmatpush.bf16.xpose.msra.mxu0 0
    %582 = vmatpush.bf16.xpose.msra.mxu0 %v573
    %583 = vmatmul.bf16.gmra.mxu0 %v570
    %v584 = vpop.f32.mrf.mxu0
    %v585 = vadd.f32 %v78, %v584
    %v586 = vpop.f32.mrf.mxu0
    %v587 = vadd.f32 %v79, %v586
    %588 = vdwg.mxu0
    %v589 = vsel %vm383, %v585, -inf
    %590 = vmax.xlane.f32.xlu0 %v589
    %v591 = vpop.xlane.xlu0 %590
    %v592 = vsel %vm383, %v587, -inf
    %593 = vmax.xlane.f32.xlu0 %v592
    %v594 = vpop.xlane.xlu0 %593
    %v595 = vsub.f32 %v585, %v591
    %v596 = vsub.f32 %v587, %v594
    %v597 = vmul.f32 %v595, 1.442695
    %v598 = vpow.pop %v597
    %v599 = vmul.f32 %v596, 1.442695
    %v600 = vpow.pop %v599
    %v601 = vsel %vm383, %v598, 0.0
    %602 = vadd.xlane.f32.xlu0 %v601
    %v603 = vpop.xlane.xlu0 %602
    %v604 = vsel %vm383, %v600, 0.0
    %605 = vadd.xlane.f32.xlu0 %v604
    %v606 = vpop.xlane.xlu0 %605
    %v607 = vrcp.pop %v603
    %v608 = vrcp.pop %v606
    %v609 = vmul.f32 %v598, %v607
    %v610 = vmul.f32 %v600, %v608
    %v611 = vpack.c.bf16 %v610, %v609
    %612 = vrot.lane.b32.xlu0 %v411, 64
    %v613 = vpop.permute.xlu0 %612
    %v616 = vsel %vm383, %v611, 0
    %618 = vmatpush.bf16.msra.mxu0 0
    %619 = vmatpush.bf16.msra.mxu0 0
    %620 = vmatpush.bf16.msra.mxu0 0
    %621 = vmatpush.bf16.msra.mxu0 0
    %622 = vmatpush.bf16.msra.mxu0 0
    %623 = vmatpush.bf16.msra.mxu0 0
    %624 = vmatpush.bf16.msra.mxu0 0
    %625 = vmatpush.bf16.msra.mxu0 %v613
    %626 = vmatmul.bf16.gmra.mxu0 %v616
    %v627 = vpop.f32.mrf.mxu0
    %v628 = vadd.f32 0.0, %v627
    %v629 = vpop.f32.mrf.mxu0
    %v630 = vadd.f32 0.0, %v629
    %631 = vdwg.mxu0
    %v632 = vpack.c.bf16 %v630, %v628
    %v633 = vld [vmem:[#allocation5 + $0x22c] sm:$0xf]
    %v634 = vld [vmem:[#allocation5 + $0x270] sm:$0xf]
    %v635 = vld [vmem:[#allocation5 + $0x2b4] sm:$0xf]
    %v636 = vld [vmem:[#allocation5 + $0x2f8] sm:$0xf]
    %v641 = vunpack.c.l.b16 %v633
    %v642 = vunpack.c.l.b16 %v634
    %v643 = vunpack.c.l.b16 %v635
    %v644 = vunpack.c.l.b16 %v636
    %v645 = vpack.c.b16 %v642, %v641
    %v646 = vpack.c.b16 %v644, %v643
    %v650 = vsel %vm362, %v632, 0
    %652 = vmatpush.bf16.msra.mxu0 0
    %653 = vmatpush.bf16.msra.mxu0 0
    %654 = vmatpush.bf16.msra.mxu0 0
    %655 = vmatpush.bf16.msra.mxu0 0
    %656 = vmatpush.bf16.msra.mxu0 0
    %657 = vmatpush.bf16.msra.mxu0 0
    %658 = vmatpush.bf16.msra.mxu0 %v646
    %659 = vmatpush.bf16.msra.mxu0 %v645
    %660 = vmatmul.bf16.gmra.mxu0 %v650
    %v661 = vpop.f32.mrf.mxu0
    %v662 = vadd.f32 0.0, %v661
    %v663 = vpop.f32.mrf.mxu0
    %v664 = vadd.f32 0.0, %v663
    %665 = vdwg.mxu0
    %v666 = vadd.f32 %v561, %v662
    %v667 = vadd.f32 %v563, %v664
    %668 = vrot.lane.b32.xlu0 %v356, 32
    %v669 = vpop.permute.xlu0 %668
    %670 = vrot.lane.b32.xlu0 %v361, 32
    %v671 = vpop.permute.xlu0 %670
    %v673 = vsel %vm362, %v669, 0
    %v676 = vsel %vm362, %v671, 0
    %678 = vmatpush.bf16.xpose.msra.mxu0 0
    %679 = vmatpush.bf16.xpose.msra.mxu0 0
    %680 = vmatpush.bf16.xpose.msra.mxu0 0
    %681 = vmatpush.bf16.xpose.msra.mxu0 0
    %682 = vmatpush.bf16.xpose.msra.mxu0 0
    %683 = vmatpush.bf16.xpose.msra.mxu0 0
    %684 = vmatpush.bf16.xpose.msra.mxu0 0
    %685 = vmatpush.bf16.xpose.msra.mxu0 %v676
    %686 = vmatmul.bf16.gmra.mxu0 %v673
    %v687 = vpop.f32.mrf.mxu0
    %v688 = vadd.f32 %v78, %v687
    %v689 = vpop.f32.mrf.mxu0
    %v690 = vadd.f32 %v79, %v689
    %691 = vdwg.mxu0
    %v692 = vsel %vm383, %v688, -inf
    %693 = vmax.xlane.f32.xlu0 %v692
    %v694 = vpop.xlane.xlu0 %693
    %v695 = vsel %vm383, %v690, -inf
    %696 = vmax.xlane.f32.xlu0 %v695
    %v697 = vpop.xlane.xlu0 %696
    %v698 = vsub.f32 %v688, %v694
    %v699 = vsub.f32 %v690, %v697
    %v700 = vmul.f32 %v698, 1.442695
    %v701 = vpow.pop %v700
    %v702 = vmul.f32 %v699, 1.442695
    %v703 = vpow.pop %v702
    %v704 = vsel %vm383, %v701, 0.0
    %705 = vadd.xlane.f32.xlu0 %v704
    %v706 = vpop.xlane.xlu0 %705
    %v707 = vsel %vm383, %v703, 0.0
    %708 = vadd.xlane.f32.xlu0 %v707
    %v709 = vpop.xlane.xlu0 %708
    %v710 = vrcp.pop %v706
    %v711 = vrcp.pop %v709
    %v712 = vmul.f32 %v701, %v710
    %v713 = vmul.f32 %v703, %v711
    %v714 = vpack.c.bf16 %v713, %v712
    %715 = vrot.lane.b32.xlu0 %v411, 32
    %v716 = vpop.permute.xlu0 %715
    %v719 = vsel %vm383, %v714, 0
    %721 = vmatpush.bf16.msra.mxu0 0
    %722 = vmatpush.bf16.msra.mxu0 0
    %723 = vmatpush.bf16.msra.mxu0 0
    %724 = vmatpush.bf16.msra.mxu0 0
    %725 = vmatpush.bf16.msra.mxu0 0
    %726 = vmatpush.bf16.msra.mxu0 0
    %727 = vmatpush.bf16.msra.mxu0 0
    %728 = vmatpush.bf16.msra.mxu0 %v716
    %729 = vmatmul.bf16.gmra.mxu0 %v719
    %v730 = vpop.f32.mrf.mxu0
    %v731 = vadd.f32 0.0, %v730
    %v732 = vpop.f32.mrf.mxu0
    %v733 = vadd.f32 0.0, %v732
    %734 = vdwg.mxu0
    %v735 = vpack.c.bf16 %v733, %v731
    %v736 = vld [vmem:[#allocation5 + $0x33c] sm:$0xf]
    %v737 = vld [vmem:[#allocation5 + $0x380] sm:$0xf]
    %v738 = vld [vmem:[#allocation5 + $0x3c4] sm:$0xf]
    %v739 = vld [vmem:[#allocation5 + $0x408] sm:$0xf]
    %v744 = vunpack.c.l.b16 %v736
    %v745 = vunpack.c.l.b16 %v737
    %v746 = vunpack.c.l.b16 %v738
    %v747 = vunpack.c.l.b16 %v739
    %v748 = vpack.c.b16 %v745, %v744
    %v749 = vpack.c.b16 %v747, %v746
    %v753 = vsel %vm362, %v735, 0
    %755 = vmatpush.bf16.msra.mxu0 0
    %756 = vmatpush.bf16.msra.mxu0 0
    %757 = vmatpush.bf16.msra.mxu0 0
    %758 = vmatpush.bf16.msra.mxu0 0
    %759 = vmatpush.bf16.msra.mxu0 0
    %760 = vmatpush.bf16.msra.mxu0 0
    %761 = vmatpush.bf16.msra.mxu0 %v749
    %762 = vmatpush.bf16.msra.mxu0 %v748
    %763 = vmatmul.bf16.gmra.mxu0 %v753
    %v764 = vpop.f32.mrf.mxu0
    %v765 = vadd.f32 0.0, %v764
    %v766 = vpop.f32.mrf.mxu0
    %v767 = vadd.f32 0.0, %v766
    %768 = vdwg.mxu0
    %v769 = vadd.f32 %v666, %v765
    %v770 = vadd.f32 %v667, %v767
    %772 = vset.pattern.permute.xlu0 0
    %773 = vperm.xlu0 %772, %v82
    %v774 = vpop.permute.xlu0 %773
    %777 = vset.pattern.permute.xlu0 0
    %778 = vperm.xlu0 %777, %v83
    %v779 = vpop.permute.xlu0 %778
    %v781 = vmul.f32 %v774, %v769
    %v782 = vmul.f32 %v779, %v770
    %v783 = vadd.f32 %v73, %v781
    %v784 = vadd.f32 %v74, %v782
    %785 = vadd.xlane.f32.xlu0 %v783
    %v786 = vpop.xlane.xlu0 %785
    %787 = vadd.xlane.f32.xlu0 %v784
    %v788 = vpop.xlane.xlu0 %787
    %v789 = vmul.f32 %v786, %v98
    %v790 = vmul.f32 %v788, %v98
    %v791 = vsub.f32 %v783, %v789
    %v792 = vsub.f32 %v784, %v790
    %v793 = vmul.f32 %v791, %v791
    %v794 = vmul.f32 %v792, %v792
    %795 = vadd.xlane.f32.xlu0 %v793
    %v796 = vpop.xlane.xlu0 %795
    %797 = vadd.xlane.f32.xlu0 %v794
    %v798 = vpop.xlane.xlu0 %797
    %v799 = vmul.f32 %v796, %v98
    %v800 = vmul.f32 %v798, %v98
    %v801 = vadd.f32 %v799, 1e-05
    %v802 = vadd.f32 %v800, 1e-05
    %v803 = vrsqrt.pop %v801
    %v804 = vmul.f32 %v803, %v801
    %v805 = vmul.f32 %v804, %v803
    %v806 = vmul.f32 0.5, %v805
    %v807 = vsub.f32 1.5, %v806
    %v808 = vmul.f32 %v803, %v807
    %vm809 = vweird.f32 %v801
    %vm810 = vweird.f32 %v803
    %vm811 = vmor %vm809, %vm810
    %v812 = vsel %vm811, %v803, %v808
    %v813 = vrsqrt.pop %v802
    %v814 = vmul.f32 %v813, %v802
    %v815 = vmul.f32 %v814, %v813
    %v816 = vmul.f32 0.5, %v815
    %v817 = vsub.f32 1.5, %v816
    %v818 = vmul.f32 %v813, %v817
    %vm819 = vweird.f32 %v802
    %vm820 = vweird.f32 %v813
    %vm821 = vmor %vm819, %vm820
    %v822 = vsel %vm821, %v813, %v818
    %v823 = vmul.f32 %v791, %v812
    %v824 = vmul.f32 %v792, %v822
    %v825 = vld [vmem:[#allocation2 + $0x2] sm:$0x1]
    %v826 = vperm.slane %v825, 0
    %v827 = vmul.f32 %v823, %v826
    %v828 = vmul.f32 %v824, %v826
    %v829 = vld [vmem:[#allocation2 + $0x3] sm:$0x1]
    %v830 = vperm.slane %v829, 0
    %v831 = vadd.f32 %v827, %v830
    %v832 = vadd.f32 %v828, %v830
    %v833 = vpack.c.bf16 %v832, %v831
    %v834 = vld [vmem:[#allocation5 + $0x10] sm:$0xff]
    %v835 = vld [vmem:[#allocation5 + $0x18] sm:$0xff]
    %v836 = vld [vmem:[#allocation5 + $0x54] sm:$0xff]
    %v837 = vld [vmem:[#allocation5 + $0x5c] sm:$0xff]
    %v838 = vld [vmem:[#allocation5 + $0x98] sm:$0xff]
    %v839 = vld [vmem:[#allocation5 + $0xa0] sm:$0xff]
    %v840 = vld [vmem:[#allocation5 + $0xdc] sm:$0xff]
    %v841 = vld [vmem:[#allocation5 + $0xe4] sm:$0xff]
    %v842 = vld [vmem:[#allocation5 + $0x120] sm:$0xff]
    %v843 = vld [vmem:[#allocation5 + $0x128] sm:$0xff]
    %v844 = vld [vmem:[#allocation5 + $0x164] sm:$0xff]
    %v845 = vld [vmem:[#allocation5 + $0x16c] sm:$0xff]
    %v846 = vld [vmem:[#allocation5 + $0x1a8] sm:$0xff]
    %v847 = vld [vmem:[#allocation5 + $0x1b0] sm:$0xff]
    %v848 = vld [vmem:[#allocation5 + $0x1ec] sm:$0xff]
    %v849 = vld [vmem:[#allocation5 + $0x1f4] sm:$0xff]
    %v850 = vld [vmem:[#allocation5 + $0x230] sm:$0xff]
    %v851 = vld [vmem:[#allocation5 + $0x238] sm:$0xff]
    %v852 = vld [vmem:[#allocation5 + $0x274] sm:$0xff]
    %v853 = vld [vmem:[#allocation5 + $0x27c] sm:$0xff]
    %v854 = vld [vmem:[#allocation5 + $0x2b8] sm:$0xff]
    %v855 = vld [vmem:[#allocation5 + $0x2c0] sm:$0xff]
    %v856 = vld [vmem:[#allocation5 + $0x2fc] sm:$0xff]
    %v857 = vld [vmem:[#allocation5 + $0x304] sm:$0xff]
    %v858 = vld [vmem:[#allocation5 + $0x340] sm:$0xff]
    %v859 = vld [vmem:[#allocation5 + $0x348] sm:$0xff]
    %v860 = vld [vmem:[#allocation5 + $0x384] sm:$0xff]
    %v861 = vld [vmem:[#allocation5 + $0x38c] sm:$0xff]
    %v862 = vld [vmem:[#allocation5 + $0x3c8] sm:$0xff]
    %v863 = vld [vmem:[#allocation5 + $0x3d0] sm:$0xff]
    %v864 = vld [vmem:[#allocation5 + $0x40c] sm:$0xff]
    %v865 = vld [vmem:[#allocation5 + $0x414] sm:$0xff]
    %v898 = vunpack.c.l.b16 %v834
    %v899 = vunpack.c.h.b16 %v834
    %v900 = vunpack.c.l.b16 %v835
    %v901 = vunpack.c.h.b16 %v835
    %v902 = vunpack.c.l.b16 %v836
    %v903 = vunpack.c.h.b16 %v836
    %v904 = vunpack.c.l.b16 %v837
    %v905 = vunpack.c.h.b16 %v837
    %v906 = vunpack.c.l.b16 %v838
    %v907 = vunpack.c.h.b16 %v838
    %v908 = vunpack.c.l.b16 %v839
    %v909 = vunpack.c.h.b16 %v839
    %v910 = vunpack.c.l.b16 %v840
    %v911 = vunpack.c.h.b16 %v840
    %v912 = vunpack.c.l.b16 %v841
    %v913 = vunpack.c.h.b16 %v841
    %v914 = vunpack.c.l.b16 %v842
    %v915 = vunpack.c.h.b16 %v842
    %v916 = vunpack.c.l.b16 %v843
    %v917 = vunpack.c.h.b16 %v843
    %v918 = vunpack.c.l.b16 %v844
    %v919 = vunpack.c.h.b16 %v844
    %v920 = vunpack.c.l.b16 %v845
    %v921 = vunpack.c.h.b16 %v845
    %v922 = vunpack.c.l.b16 %v846
    %v923 = vunpack.c.h.b16 %v846
    %v924 = vunpack.c.l.b16 %v847
    %v925 = vunpack.c.h.b16 %v847
    %v926 = vunpack.c.l.b16 %v848
    %v927 = vunpack.c.h.b16 %v848
    %v928 = vunpack.c.l.b16 %v849
    %v929 = vunpack.c.h.b16 %v849
    %v930 = vunpack.c.l.b16 %v850
    %v931 = vunpack.c.h.b16 %v850
    %v932 = vunpack.c.l.b16 %v851
    %v933 = vunpack.c.h.b16 %v851
    %v934 = vunpack.c.l.b16 %v852
    %v935 = vunpack.c.h.b16 %v852
    %v936 = vunpack.c.l.b16 %v853
    %v937 = vunpack.c.h.b16 %v853
    %v938 = vunpack.c.l.b16 %v854
    %v939 = vunpack.c.h.b16 %v854
    %v940 = vunpack.c.l.b16 %v855
    %v941 = vunpack.c.h.b16 %v855
    %v942 = vunpack.c.l.b16 %v856
    %v943 = vunpack.c.h.b16 %v856
    %v944 = vunpack.c.l.b16 %v857
    %v945 = vunpack.c.h.b16 %v857
    %v946 = vunpack.c.l.b16 %v858
    %v947 = vunpack.c.h.b16 %v858
    %v948 = vunpack.c.l.b16 %v859
    %v949 = vunpack.c.h.b16 %v859
    %v950 = vunpack.c.l.b16 %v860
    %v951 = vunpack.c.h.b16 %v860
    %v952 = vunpack.c.l.b16 %v861
    %v953 = vunpack.c.h.b16 %v861
    %v954 = vunpack.c.l.b16 %v862
    %v955 = vunpack.c.h.b16 %v862
    %v956 = vunpack.c.l.b16 %v863
    %v957 = vunpack.c.h.b16 %v863
    %v958 = vunpack.c.l.b16 %v864
    %v959 = vunpack.c.h.b16 %v864
    %v960 = vunpack.c.l.b16 %v865
    %v961 = vunpack.c.h.b16 %v865
    %v962 = vpack.c.b16 %v902, %v898
    %v963 = vpack.c.b16 %v903, %v899
    %v964 = vpack.c.b16 %v904, %v900
    %v965 = vpack.c.b16 %v905, %v901
    %v966 = vpack.c.b16 %v910, %v906
    %v967 = vpack.c.b16 %v911, %v907
    %v968 = vpack.c.b16 %v912, %v908
    %v969 = vpack.c.b16 %v913, %v909
    %v970 = vpack.c.b16 %v918, %v914
    %v971 = vpack.c.b16 %v919, %v915
    %v972 = vpack.c.b16 %v920, %v916
    %v973 = vpack.c.b16 %v921, %v917
    %v974 = vpack.c.b16 %v926, %v922
    %v975 = vpack.c.b16 %v927, %v923
    %v976 = vpack.c.b16 %v928, %v924
    %v977 = vpack.c.b16 %v929, %v925
    %v978 = vpack.c.b16 %v934, %v930
    %v979 = vpack.c.b16 %v935, %v931
    %v980 = vpack.c.b16 %v936, %v932
    %v981 = vpack.c.b16 %v937, %v933
    %v982 = vpack.c.b16 %v942, %v938
    %v983 = vpack.c.b16 %v943, %v939
    %v984 = vpack.c.b16 %v944, %v940
    %v985 = vpack.c.b16 %v945, %v941
    %v986 = vpack.c.b16 %v950, %v946
    %v987 = vpack.c.b16 %v951, %v947
    %v988 = vpack.c.b16 %v952, %v948
    %v989 = vpack.c.b16 %v953, %v949
    %v990 = vpack.c.b16 %v958, %v954
    %v991 = vpack.c.b16 %v959, %v955
    %v992 = vpack.c.b16 %v960, %v956
    %v993 = vpack.c.b16 %v961, %v957
    %1026 = vmatpush.bf16.msra.mxu0 %v990
    %1027 = vmatpush.bf16.msra.mxu0 %v986
    %1028 = vmatpush.bf16.msra.mxu0 %v982
    %1029 = vmatpush.bf16.msra.mxu0 %v978
    %1030 = vmatpush.bf16.msra.mxu0 %v974
    %1031 = vmatpush.bf16.msra.mxu0 %v970
    %1032 = vmatpush.bf16.msra.mxu0 %v966
    %1033 = vmatpush.bf16.msra.mxu0 %v962
    %1034 = vmatmul.bf16.gmra.mxu0 %v833
    %v1035 = vpop.f32.mrf.mxu0
    %v1036 = vadd.f32 0.0, %v1035
    %v1037 = vpop.f32.mrf.mxu0
    %v1038 = vadd.f32 0.0, %v1037
    %1039 = vdwg.mxu0
    %1040 = vmatpush.bf16.msra.mxu0 %v991
    %1041 = vmatpush.bf16.msra.mxu0 %v987
    %1042 = vmatpush.bf16.msra.mxu0 %v983
    %1043 = vmatpush.bf16.msra.mxu0 %v979
    %1044 = vmatpush.bf16.msra.mxu0 %v975
    %1045 = vmatpush.bf16.msra.mxu0 %v971
    %1046 = vmatpush.bf16.msra.mxu0 %v967
    %1047 = vmatpush.bf16.msra.mxu0 %v963
    %1048 = vmatmul.bf16.gmra.mxu0 %v833
    %v1049 = vpop.f32.mrf.mxu0
    %v1050 = vadd.f32 0.0, %v1049
    %v1051 = vpop.f32.mrf.mxu0
    %v1052 = vadd.f32 0.0, %v1051
    %1053 = vdwg.mxu0
    %1054 = vmatpush.bf16.msra.mxu0 %v992
    %1055 = vmatpush.bf16.msra.mxu0 %v988
    %1056 = vmatpush.bf16.msra.mxu0 %v984
    %1057 = vmatpush.bf16.msra.mxu0 %v980
    %1058 = vmatpush.bf16.msra.mxu0 %v976
    %1059 = vmatpush.bf16.msra.mxu0 %v972
    %1060 = vmatpush.bf16.msra.mxu0 %v968
    %1061 = vmatpush.bf16.msra.mxu0 %v964
    %1062 = vmatmul.bf16.gmra.mxu0 %v833
    %v1063 = vpop.f32.mrf.mxu0
    %v1064 = vadd.f32 0.0, %v1063
    %v1065 = vpop.f32.mrf.mxu0
    %v1066 = vadd.f32 0.0, %v1065
    %1067 = vdwg.mxu0
    %1068 = vmatpush.bf16.msra.mxu0 %v993
    %1069 = vmatpush.bf16.msra.mxu0 %v989
    %1070 = vmatpush.bf16.msra.mxu0 %v985
    %1071 = vmatpush.bf16.msra.mxu0 %v981
    %1072 = vmatpush.bf16.msra.mxu0 %v977
    %1073 = vmatpush.bf16.msra.mxu0 %v973
    %1074 = vmatpush.bf16.msra.mxu0 %v969
    %1075 = vmatpush.bf16.msra.mxu0 %v965
    %1076 = vmatmul.bf16.gmra.mxu0 %v833
    %v1077 = vpop.f32.mrf.mxu0
    %v1078 = vadd.f32 0.0, %v1077
    %v1079 = vpop.f32.mrf.mxu0
    %v1080 = vadd.f32 0.0, %v1079
    %1081 = vdwg.mxu0
    %v1082 = vmul.f32 %v1036, %v1036
    %v1083 = vmul.f32 %v1050, %v1050
    %v1084 = vmul.f32 %v1064, %v1064
    %v1085 = vmul.f32 %v1078, %v1078
    %v1086 = vmul.f32 %v1038, %v1038
    %v1087 = vmul.f32 %v1052, %v1052
    %v1088 = vmul.f32 %v1066, %v1066
    %v1089 = vmul.f32 %v1080, %v1080
    %v1090 = vmul.f32 %v1036, %v1082
    %v1091 = vmul.f32 %v1050, %v1083
    %v1092 = vmul.f32 %v1064, %v1084
    %v1093 = vmul.f32 %v1078, %v1085
    %v1094 = vmul.f32 %v1038, %v1086
    %v1095 = vmul.f32 %v1052, %v1087
    %v1096 = vmul.f32 %v1066, %v1088
    %v1097 = vmul.f32 %v1080, %v1089
    %v1098 = vmul.f32 %v1090, 0.044715
    %v1099 = vmul.f32 %v1091, 0.044715
    %v1100 = vmul.f32 %v1092, 0.044715
    %v1101 = vmul.f32 %v1093, 0.044715
    %v1102 = vmul.f32 %v1094, 0.044715
    %v1103 = vmul.f32 %v1095, 0.044715
    %v1104 = vmul.f32 %v1096, 0.044715
    %v1105 = vmul.f32 %v1097, 0.044715
    %v1106 = vadd.f32 %v1036, %v1098
    %v1107 = vadd.f32 %v1050, %v1099
    %v1108 = vadd.f32 %v1064, %v1100
    %v1109 = vadd.f32 %v1078, %v1101
    %v1110 = vadd.f32 %v1038, %v1102
    %v1111 = vadd.f32 %v1052, %v1103
    %v1112 = vadd.f32 %v1066, %v1104
    %v1113 = vadd.f32 %v1080, %v1105
    %v1114 = vmul.f32 %v1106, 0.7978846
    %v1115 = vmul.f32 %v1107, 0.7978846
    %v1116 = vmul.f32 %v1108, 0.7978846
    %v1117 = vmul.f32 %v1109, 0.7978846
    %v1118 = vmul.f32 %v1110, 0.7978846
    %v1119 = vmul.f32 %v1111, 0.7978846
    %v1120 = vmul.f32 %v1112, 0.7978846
    %v1121 = vmul.f32 %v1113, 0.7978846
    %v1122 = vtanh.pop %v1114
    %v1123 = vtanh.pop %v1115
    %v1124 = vtanh.pop %v1116
    %v1125 = vtanh.pop %v1117
    %v1126 = vtanh.pop %v1118
    %v1127 = vtanh.pop %v1119
    %v1128 = vtanh.pop %v1120
    %v1129 = vtanh.pop %v1121
    %v1130 = vadd.f32 %v1122, 1.0
    %v1131 = vadd.f32 %v1123, 1.0
    %v1132 = vadd.f32 %v1124, 1.0
    %v1133 = vadd.f32 %v1125, 1.0
    %v1134 = vadd.f32 %v1126, 1.0
    %v1135 = vadd.f32 %v1127, 1.0
    %v1136 = vadd.f32 %v1128, 1.0
    %v1137 = vadd.f32 %v1129, 1.0
    %v1138 = vmul.f32 %v1130, 0.5
    %v1139 = vmul.f32 %v1131, 0.5
    %v1140 = vmul.f32 %v1132, 0.5
    %v1141 = vmul.f32 %v1133, 0.5
    %v1142 = vmul.f32 %v1134, 0.5
    %v1143 = vmul.f32 %v1135, 0.5
    %v1144 = vmul.f32 %v1136, 0.5
    %v1145 = vmul.f32 %v1137, 0.5
    %v1146 = vmul.f32 %v1036, %v1138
    %v1147 = vmul.f32 %v1050, %v1139
    %v1148 = vmul.f32 %v1064, %v1140
    %v1149 = vmul.f32 %v1078, %v1141
    %v1150 = vmul.f32 %v1038, %v1142
    %v1151 = vmul.f32 %v1052, %v1143
    %v1152 = vmul.f32 %v1066, %v1144
    %v1153 = vmul.f32 %v1080, %v1145
    %v1154 = vpack.c.bf16 %v1150, %v1146
    %v1155 = vpack.c.bf16 %v1151, %v1147
    %v1156 = vpack.c.bf16 %v1152, %v1148
    %v1157 = vpack.c.bf16 %v1153, %v1149
    %v1158 = vld [vmem:[#allocation7] sm:$0xf]
    %v1159 = vld [vmem:[#allocation7 + $0x4] sm:$0xf]
    %v1160 = vld [vmem:[#allocation7 + $0x8] sm:$0xf]
    %v1161 = vld [vmem:[#allocation7 + $0xc] sm:$0xf]
    %v1162 = vld [vmem:[#allocation7 + $0x10] sm:$0xf]
    %v1163 = vld [vmem:[#allocation7 + $0x14] sm:$0xf]
    %v1164 = vld [vmem:[#allocation7 + $0x18] sm:$0xf]
    %v1165 = vld [vmem:[#allocation7 + $0x1c] sm:$0xf]
    %v1166 = vld [vmem:[#allocation7 + $0x20] sm:$0xf]
    %v1167 = vld [vmem:[#allocation7 + $0x24] sm:$0xf]
    %v1168 = vld [vmem:[#allocation7 + $0x28] sm:$0xf]
    %v1169 = vld [vmem:[#allocation7 + $0x2c] sm:$0xf]
    %v1170 = vld [vmem:[#allocation7 + $0x30] sm:$0xf]
    %v1171 = vld [vmem:[#allocation7 + $0x34] sm:$0xf]
    %v1172 = vld [vmem:[#allocation7 + $0x38] sm:$0xf]
    %v1173 = vld [vmem:[#allocation7 + $0x3c] sm:$0xf]
    %v1174 = vld [vmem:[#allocation7 + $0x40] sm:$0xf]
    %v1175 = vld [vmem:[#allocation7 + $0x44] sm:$0xf]
    %v1176 = vld [vmem:[#allocation7 + $0x48] sm:$0xf]
    %v1177 = vld [vmem:[#allocation7 + $0x4c] sm:$0xf]
    %v1178 = vld [vmem:[#allocation7 + $0x50] sm:$0xf]
    %v1179 = vld [vmem:[#allocation7 + $0x54] sm:$0xf]
    %v1180 = vld [vmem:[#allocation7 + $0x58] sm:$0xf]
    %v1181 = vld [vmem:[#allocation7 + $0x5c] sm:$0xf]
    %v1182 = vld [vmem:[#allocation7 + $0x60] sm:$0xf]
    %v1183 = vld [vmem:[#allocation7 + $0x64] sm:$0xf]
    %v1184 = vld [vmem:[#allocation7 + $0x68] sm:$0xf]
    %v1185 = vld [vmem:[#allocation7 + $0x6c] sm:$0xf]
    %v1186 = vld [vmem:[#allocation7 + $0x70] sm:$0xf]
    %v1187 = vld [vmem:[#allocation7 + $0x74] sm:$0xf]
    %v1188 = vld [vmem:[#allocation7 + $0x78] sm:$0xf]
    %v1189 = vld [vmem:[#allocation7 + $0x7c] sm:$0xf]
    %v1190 = vld [vmem:[#allocation7 + $0x80] sm:$0xf]
    %v1191 = vld [vmem:[#allocation7 + $0x84] sm:$0xf]
    %v1192 = vld [vmem:[#allocation7 + $0x88] sm:$0xf]
    %v1193 = vld [vmem:[#allocation7 + $0x8c] sm:$0xf]
    %v1194 = vld [vmem:[#allocation7 + $0x90] sm:$0xf]
    %v1195 = vld [vmem:[#allocation7 + $0x94] sm:$0xf]
    %v1196 = vld [vmem:[#allocation7 + $0x98] sm:$0xf]
    %v1197 = vld [vmem:[#allocation7 + $0x9c] sm:$0xf]
    %v1198 = vld [vmem:[#allocation7 + $0xa0] sm:$0xf]
    %v1199 = vld [vmem:[#allocation7 + $0xa4] sm:$0xf]
    %v1200 = vld [vmem:[#allocation7 + $0xa8] sm:$0xf]
    %v1201 = vld [vmem:[#allocation7 + $0xac] sm:$0xf]
    %v1202 = vld [vmem:[#allocation7 + $0xb0] sm:$0xf]
    %v1203 = vld [vmem:[#allocation7 + $0xb4] sm:$0xf]
    %v1204 = vld [vmem:[#allocation7 + $0xb8] sm:$0xf]
    %v1205 = vld [vmem:[#allocation7 + $0xbc] sm:$0xf]
    %v1206 = vld [vmem:[#allocation7 + $0xc0] sm:$0xf]
    %v1207 = vld [vmem:[#allocation7 + $0xc4] sm:$0xf]
    %v1208 = vld [vmem:[#allocation7 + $0xc8] sm:$0xf]
    %v1209 = vld [vmem:[#allocation7 + $0xcc] sm:$0xf]
    %v1210 = vld [vmem:[#allocation7 + $0xd0] sm:$0xf]
    %v1211 = vld [vmem:[#allocation7 + $0xd4] sm:$0xf]
    %v1212 = vld [vmem:[#allocation7 + $0xd8] sm:$0xf]
    %v1213 = vld [vmem:[#allocation7 + $0xdc] sm:$0xf]
    %v1214 = vld [vmem:[#allocation7 + $0xe0] sm:$0xf]
    %v1215 = vld [vmem:[#allocation7 + $0xe4] sm:$0xf]
    %v1216 = vld [vmem:[#allocation7 + $0xe8] sm:$0xf]
    %v1217 = vld [vmem:[#allocation7 + $0xec] sm:$0xf]
    %v1218 = vld [vmem:[#allocation7 + $0xf0] sm:$0xf]
    %v1219 = vld [vmem:[#allocation7 + $0xf4] sm:$0xf]
    %v1220 = vld [vmem:[#allocation7 + $0xf8] sm:$0xf]
    %v1221 = vld [vmem:[#allocation7 + $0xfc] sm:$0xf]
    %v1286 = vunpack.c.l.b16 %v1158
    %v1287 = vunpack.c.l.b16 %v1159
    %v1288 = vunpack.c.l.b16 %v1160
    %v1289 = vunpack.c.l.b16 %v1161
    %v1290 = vunpack.c.l.b16 %v1162
    %v1291 = vunpack.c.l.b16 %v1163
    %v1292 = vunpack.c.l.b16 %v1164
    %v1293 = vunpack.c.l.b16 %v1165
    %v1294 = vunpack.c.l.b16 %v1166
    %v1295 = vunpack.c.l.b16 %v1167
    %v1296 = vunpack.c.l.b16 %v1168
    %v1297 = vunpack.c.l.b16 %v1169
    %v1298 = vunpack.c.l.b16 %v1170
    %v1299 = vunpack.c.l.b16 %v1171
    %v1300 = vunpack.c.l.b16 %v1172
    %v1301 = vunpack.c.l.b16 %v1173
    %v1302 = vunpack.c.l.b16 %v1174
    %v1303 = vunpack.c.l.b16 %v1175
    %v1304 = vunpack.c.l.b16 %v1176
    %v1305 = vunpack.c.l.b16 %v1177
    %v1306 = vunpack.c.l.b16 %v1178
    %v1307 = vunpack.c.l.b16 %v1179
    %v1308 = vunpack.c.l.b16 %v1180
    %v1309 = vunpack.c.l.b16 %v1181
    %v1310 = vunpack.c.l.b16 %v1182
    %v1311 = vunpack.c.l.b16 %v1183
    %v1312 = vunpack.c.l.b16 %v1184
    %v1313 = vunpack.c.l.b16 %v1185
    %v1314 = vunpack.c.l.b16 %v1186
    %v1315 = vunpack.c.l.b16 %v1187
    %v1316 = vunpack.c.l.b16 %v1188
    %v1317 = vunpack.c.l.b16 %v1189
    %v1318 = vunpack.c.l.b16 %v1190
    %v1319 = vunpack.c.l.b16 %v1191
    %v1320 = vunpack.c.l.b16 %v1192
    %v1321 = vunpack.c.l.b16 %v1193
    %v1322 = vunpack.c.l.b16 %v1194
    %v1323 = vunpack.c.l.b16 %v1195
    %v1324 = vunpack.c.l.b16 %v1196
    %v1325 = vunpack.c.l.b16 %v1197
    %v1326 = vunpack.c.l.b16 %v1198
    %v1327 = vunpack.c.l.b16 %v1199
    %v1328 = vunpack.c.l.b16 %v1200
    %v1329 = vunpack.c.l.b16 %v1201
    %v1330 = vunpack.c.l.b16 %v1202
    %v1331 = vunpack.c.l.b16 %v1203
    %v1332 = vunpack.c.l.b16 %v1204
    %v1333 = vunpack.c.l.b16 %v1205
    %v1334 = vunpack.c.l.b16 %v1206
    %v1335 = vunpack.c.l.b16 %v1207
    %v1336 = vunpack.c.l.b16 %v1208
    %v1337 = vunpack.c.l.b16 %v1209
    %v1338 = vunpack.c.l.b16 %v1210
    %v1339 = vunpack.c.l.b16 %v1211
    %v1340 = vunpack.c.l.b16 %v1212
    %v1341 = vunpack.c.l.b16 %v1213
    %v1342 = vunpack.c.l.b16 %v1214
    %v1343 = vunpack.c.l.b16 %v1215
    %v1344 = vunpack.c.l.b16 %v1216
    %v1345 = vunpack.c.l.b16 %v1217
    %v1346 = vunpack.c.l.b16 %v1218
    %v1347 = vunpack.c.l.b16 %v1219
    %v1348 = vunpack.c.l.b16 %v1220
    %v1349 = vunpack.c.l.b16 %v1221
    %v1350 = vpack.c.b16 %v1287, %v1286
    %v1351 = vpack.c.b16 %v1289, %v1288
    %v1352 = vpack.c.b16 %v1291, %v1290
    %v1353 = vpack.c.b16 %v1293, %v1292
    %v1354 = vpack.c.b16 %v1295, %v1294
    %v1355 = vpack.c.b16 %v1297, %v1296
    %v1356 = vpack.c.b16 %v1299, %v1298
    %v1357 = vpack.c.b16 %v1301, %v1300
    %v1358 = vpack.c.b16 %v1303, %v1302
    %v1359 = vpack.c.b16 %v1305, %v1304
    %v1360 = vpack.c.b16 %v1307, %v1306
    %v1361 = vpack.c.b16 %v1309, %v1308
    %v1362 = vpack.c.b16 %v1311, %v1310
    %v1363 = vpack.c.b16 %v1313, %v1312
    %v1364 = vpack.c.b16 %v1315, %v1314
    %v1365 = vpack.c.b16 %v1317, %v1316
    %v1366 = vpack.c.b16 %v1319, %v1318
    %v1367 = vpack.c.b16 %v1321, %v1320
    %v1368 = vpack.c.b16 %v1323, %v1322
    %v1369 = vpack.c.b16 %v1325, %v1324
    %v1370 = vpack.c.b16 %v1327, %v1326
    %v1371 = vpack.c.b16 %v1329, %v1328
    %v1372 = vpack.c.b16 %v1331, %v1330
    %v1373 = vpack.c.b16 %v1333, %v1332
    %v1374 = vpack.c.b16 %v1335, %v1334
    %v1375 = vpack.c.b16 %v1337, %v1336
    %v1376 = vpack.c.b16 %v1339, %v1338
    %v1377 = vpack.c.b16 %v1341, %v1340
    %v1378 = vpack.c.b16 %v1343, %v1342
    %v1379 = vpack.c.b16 %v1345, %v1344
    %v1380 = vpack.c.b16 %v1347, %v1346
    %v1381 = vpack.c.b16 %v1349, %v1348
    %1414 = vmatpush.bf16.msra.mxu0 %v1357
    %1415 = vmatpush.bf16.msra.mxu0 %v1356
    %1416 = vmatpush.bf16.msra.mxu0 %v1355
    %1417 = vmatpush.bf16.msra.mxu0 %v1354
    %1418 = vmatpush.bf16.msra.mxu0 %v1353
    %1419 = vmatpush.bf16.msra.mxu0 %v1352
    %1420 = vmatpush.bf16.msra.mxu0 %v1351
    %1421 = vmatpush.bf16.msra.mxu0 %v1350
    %1422 = vmatmul.bf16.gmra.mxu0 %v1154
    %v1423 = vpop.f32.mrf.mxu0
    %v1424 = vadd.f32 0.0, %v1423
    %v1425 = vpop.f32.mrf.mxu0
    %v1426 = vadd.f32 0.0, %v1425
    %1427 = vdwg.mxu0
    %1428 = vmatpush.bf16.msra.mxu0 %v1365
    %1429 = vmatpush.bf16.msra.mxu0 %v1364
    %1430 = vmatpush.bf16.msra.mxu0 %v1363
    %1431 = vmatpush.bf16.msra.mxu0 %v1362
    %1432 = vmatpush.bf16.msra.mxu0 %v1361
    %1433 = vmatpush.bf16.msra.mxu0 %v1360
    %1434 = vmatpush.bf16.msra.mxu0 %v1359
    %1435 = vmatpush.bf16.msra.mxu0 %v1358
    %1436 = vmatmul.bf16.gmra.mxu0 %v1155
    %v1437 = vpop.f32.mrf.mxu0
    %v1438 = vadd.f32 %v1424, %v1437
    %v1439 = vpop.f32.mrf.mxu0
    %v1440 = vadd.f32 %v1426, %v1439
    %1441 = vdwg.mxu0
    %1442 = vmatpush.bf16.msra.mxu0 %v1373
    %1443 = vmatpush.bf16.msra.mxu0 %v1372
    %1444 = vmatpush.bf16.msra.mxu0 %v1371
    %1445 = vmatpush.bf16.msra.mxu0 %v1370
    %1446 = vmatpush.bf16.msra.mxu0 %v1369
    %1447 = vmatpush.bf16.msra.mxu0 %v1368
    %1448 = vmatpush.bf16.msra.mxu0 %v1367
    %1449 = vmatpush.bf16.msra.mxu0 %v1366
    %1450 = vmatmul.bf16.gmra.mxu0 %v1156
    %v1451 = vpop.f32.mrf.mxu0
    %v1452 = vadd.f32 %v1438, %v1451
    %v1453 = vpop.f32.mrf.mxu0
    %v1454 = vadd.f32 %v1440, %v1453
    %1455 = vdwg.mxu0
    %1456 = vmatpush.bf16.msra.mxu0 %v1381
    %1457 = vmatpush.bf16.msra.mxu0 %v1380
    %1458 = vmatpush.bf16.msra.mxu0 %v1379
    %1459 = vmatpush.bf16.msra.mxu0 %v1378
    %1460 = vmatpush.bf16.msra.mxu0 %v1377
    %1461 = vmatpush.bf16.msra.mxu0 %v1376
    %1462 = vmatpush.bf16.msra.mxu0 %v1375
    %1463 = vmatpush.bf16.msra.mxu0 %v1374
    %1464 = vmatmul.bf16.gmra.mxu0 %v1157
    %v1465 = vpop.f32.mrf.mxu0
    %v1466 = vadd.f32 %v1452, %v1465
    %v1467 = vpop.f32.mrf.mxu0
    %v1468 = vadd.f32 %v1454, %v1467
    %1469 = vdwg.mxu0
    %v1470 = vadd.f32 %v783, %v1466
    %v1471 = vadd.f32 %v784, %v1468
    %v1472 = vmul.f32 %v1470, %v1470
    %v1473 = vmul.f32 %v1471, %v1471
    %1474 = vadd.xlane.f32.xlu0 %v1472
    %v1475 = vpop.xlane.xlu0 %1474
    %1476 = vadd.xlane.f32.xlu0 %v1473
    %v1477 = vpop.xlane.xlu0 %1476
    %v1478 = vmul.f32 %v1475, %v98
    %v1479 = vmul.f32 %v1477, %v98
    %v1480 = vadd.f32 %v1478, 1e-06
    %v1481 = vadd.f32 %v1479, 1e-06
    %v1482 = vrsqrt.pop %v1480
    %v1483 = vmul.f32 %v1482, %v1480
    %v1484 = vmul.f32 %v1483, %v1482
    %v1485 = vmul.f32 0.5, %v1484
    %v1486 = vsub.f32 1.5, %v1485
    %v1487 = vmul.f32 %v1482, %v1486
    %vm1488 = vweird.f32 %v1480
    %vm1489 = vweird.f32 %v1482
    %vm1490 = vmor %vm1488, %vm1489
    %v1491 = vsel %vm1490, %v1482, %v1487
    %v1492 = vrsqrt.pop %v1481
    %v1493 = vmul.f32 %v1492, %v1481
    %v1494 = vmul.f32 %v1493, %v1492
    %v1495 = vmul.f32 0.5, %v1494
    %v1496 = vsub.f32 1.5, %v1495
    %v1497 = vmul.f32 %v1492, %v1496
    %vm1498 = vweird.f32 %v1481
    %vm1499 = vweird.f32 %v1492
    %vm1500 = vmor %vm1498, %vm1499
    %v1501 = vsel %vm1500, %v1492, %v1497
    %v1502 = vmul.f32 %v1470, %v1491
    %v1503 = vmul.f32 %v1471, %v1501
    %v1504 = vld [vmem:[#allocation2 + $0x4] sm:$0x1]
    %v1505 = vperm.slane %v1504, 0
    %v1506 = vmul.f32 %v1502, %v1505
    %v1507 = vmul.f32 %v1503, %v1505
    %v1508 = vpack.c.bf16 %v1507, %v1506
    %v1509 = vld [vmem:[#allocation5 + $0x24] sm:$0xff]
    %v1510 = vld [vmem:[#allocation5 + $0x2c] sm:$0xf]
    %v1511 = vld [vmem:[#allocation5 + $0x68] sm:$0xff]
    %v1512 = vld [vmem:[#allocation5 + $0x70] sm:$0xf]
    %v1513 = vld [vmem:[#allocation5 + $0xac] sm:$0xff]
    %v1514 = vld [vmem:[#allocation5 + $0xb4] sm:$0xf]
    %v1515 = vld [vmem:[#allocation5 + $0xf0] sm:$0xff]
    %v1516 = vld [vmem:[#allocation5 + $0xf8] sm:$0xf]
    %v1517 = vld [vmem:[#allocation5 + $0x134] sm:$0xff]
    %v1518 = vld [vmem:[#allocation5 + $0x13c] sm:$0xf]
    %v1519 = vld [vmem:[#allocation5 + $0x178] sm:$0xff]
    %v1520 = vld [vmem:[#allocation5 + $0x180] sm:$0xf]
    %v1521 = vld [vmem:[#allocation5 + $0x1bc] sm:$0xff]
    %v1522 = vld [vmem:[#allocation5 + $0x1c4] sm:$0xf]
    %v1523 = vld [vmem:[#allocation5 + $0x200] sm:$0xff]
    %v1524 = vld [vmem:[#allocation5 + $0x208] sm:$0xf]
    %v1525 = vld [vmem:[#allocation5 + $0x244] sm:$0xff]
    %v1526 = vld [vmem:[#allocation5 + $0x24c] sm:$0xf]
    %v1527 = vld [vmem:[#allocation5 + $0x288] sm:$0xff]
    %v1528 = vld [vmem:[#allocation5 + $0x290] sm:$0xf]
    %v1529 = vld [vmem:[#allocation5 + $0x2cc] sm:$0xff]
    %v1530 = vld [vmem:[#allocation5 + $0x2d4] sm:$0xf]
    %v1531 = vld [vmem:[#allocation5 + $0x310] sm:$0xff]
    %v1532 = vld [vmem:[#allocation5 + $0x318] sm:$0xf]
    %v1533 = vld [vmem:[#allocation5 + $0x354] sm:$0xff]
    %v1534 = vld [vmem:[#allocation5 + $0x35c] sm:$0xf]
    %v1535 = vld [vmem:[#allocation5 + $0x398] sm:$0xff]
    %v1536 = vld [vmem:[#allocation5 + $0x3a0] sm:$0xf]
    %v1537 = vld [vmem:[#allocation5 + $0x3dc] sm:$0xff]
    %v1538 = vld [vmem:[#allocation5 + $0x3e4] sm:$0xf]
    %v1539 = vld [vmem:[#allocation5 + $0x420] sm:$0xff]
    %v1540 = vld [vmem:[#allocation5 + $0x428] sm:$0xf]
    %v1573 = vunpack.c.l.b16 %v1509
    %v1574 = vunpack.c.h.b16 %v1509
    %v1575 = vunpack.c.l.b16 %v1510
    %v1576 = vunpack.c.l.b16 %v1511
    %v1577 = vunpack.c.h.b16 %v1511
    %v1578 = vunpack.c.l.b16 %v1512
    %v1579 = vunpack.c.l.b16 %v1513
    %v1580 = vunpack.c.h.b16 %v1513
    %v1581 = vunpack.c.l.b16 %v1514
    %v1582 = vunpack.c.l.b16 %v1515
    %v1583 = vunpack.c.h.b16 %v1515
    %v1584 = vunpack.c.l.b16 %v1516
    %v1585 = vunpack.c.l.b16 %v1517
    %v1586 = vunpack.c.h.b16 %v1517
    %v1587 = vunpack.c.l.b16 %v1518
    %v1588 = vunpack.c.l.b16 %v1519
    %v1589 = vunpack.c.h.b16 %v1519
    %v1590 = vunpack.c.l.b16 %v1520
    %v1591 = vunpack.c.l.b16 %v1521
    %v1592 = vunpack.c.h.b16 %v1521
    %v1593 = vunpack.c.l.b16 %v1522
    %v1594 = vunpack.c.l.b16 %v1523
    %v1595 = vunpack.c.h.b16 %v1523
    %v1596 = vunpack.c.l.b16 %v1524
    %v1597 = vunpack.c.l.b16 %v1525
    %v1598 = vunpack.c.h.b16 %v1525
    %v1599 = vunpack.c.l.b16 %v1526
    %v1600 = vunpack.c.l.b16 %v1527
    %v1601 = vunpack.c.h.b16 %v1527
    %v1602 = vunpack.c.l.b16 %v1528
    %v1603 = vunpack.c.l.b16 %v1529
    %v1604 = vunpack.c.h.b16 %v1529
    %v1605 = vunpack.c.l.b16 %v1530
    %v1606 = vunpack.c.l.b16 %v1531
    %v1607 = vunpack.c.h.b16 %v1531
    %v1608 = vunpack.c.l.b16 %v1532
    %v1609 = vunpack.c.l.b16 %v1533
    %v1610 = vunpack.c.h.b16 %v1533
    %v1611 = vunpack.c.l.b16 %v1534
    %v1612 = vunpack.c.l.b16 %v1535
    %v1613 = vunpack.c.h.b16 %v1535
    %v1614 = vunpack.c.l.b16 %v1536
    %v1615 = vunpack.c.l.b16 %v1537
    %v1616 = vunpack.c.h.b16 %v1537
    %v1617 = vunpack.c.l.b16 %v1538
    %v1618 = vunpack.c.l.b16 %v1539
    %v1619 = vunpack.c.h.b16 %v1539
    %v1620 = vunpack.c.l.b16 %v1540
    %v1621 = vpack.c.b16 %v1576, %v1573
    %v1622 = vpack.c.b16 %v1577, %v1574
    %v1623 = vpack.c.b16 %v1578, %v1575
    %v1624 = vpack.c.b16 %v1582, %v1579
    %v1625 = vpack.c.b16 %v1583, %v1580
    %v1626 = vpack.c.b16 %v1584, %v1581
    %v1627 = vpack.c.b16 %v1588, %v1585
    %v1628 = vpack.c.b16 %v1589, %v1586
    %v1629 = vpack.c.b16 %v1590, %v1587
    %v1630 = vpack.c.b16 %v1594, %v1591
    %v1631 = vpack.c.b16 %v1595, %v1592
    %v1632 = vpack.c.b16 %v1596, %v1593
    %v1633 = vpack.c.b16 %v1600, %v1597
    %v1634 = vpack.c.b16 %v1601, %v1598
    %v1635 = vpack.c.b16 %v1602, %v1599
    %v1636 = vpack.c.b16 %v1606, %v1603
    %v1637 = vpack.c.b16 %v1607, %v1604
    %v1638 = vpack.c.b16 %v1608, %v1605
    %v1639 = vpack.c.b16 %v1612, %v1609
    %v1640 = vpack.c.b16 %v1613, %v1610
    %v1641 = vpack.c.b16 %v1614, %v1611
    %v1642 = vpack.c.b16 %v1618, %v1615
    %v1643 = vpack.c.b16 %v1619, %v1616
    %v1644 = vpack.c.b16 %v1620, %v1617
    %1669 = vmatpush.bf16.msra.mxu0 %v1642
    %1670 = vmatpush.bf16.msra.mxu0 %v1639
    %1671 = vmatpush.bf16.msra.mxu0 %v1636
    %1672 = vmatpush.bf16.msra.mxu0 %v1633
    %1673 = vmatpush.bf16.msra.mxu0 %v1630
    %1674 = vmatpush.bf16.msra.mxu0 %v1627
    %1675 = vmatpush.bf16.msra.mxu0 %v1624
    %1676 = vmatpush.bf16.msra.mxu0 %v1621
    %1677 = vmatmul.bf16.gmra.mxu0 %v1508
    %v1678 = vpop.f32.mrf.mxu0
    %v1679 = vadd.f32 0.0, %v1678
    %v1680 = vpop.f32.mrf.mxu0
    %v1681 = vadd.f32 0.0, %v1680
    %1682 = vdwg.mxu0
    %1683 = vmatpush.bf16.msra.mxu0 %v1643
    %1684 = vmatpush.bf16.msra.mxu0 %v1640
    %1685 = vmatpush.bf16.msra.mxu0 %v1637
    %1686 = vmatpush.bf16.msra.mxu0 %v1634
    %1687 = vmatpush.bf16.msra.mxu0 %v1631
    %1688 = vmatpush.bf16.msra.mxu0 %v1628
    %1689 = vmatpush.bf16.msra.mxu0 %v1625
    %1690 = vmatpush.bf16.msra.mxu0 %v1622
    %1691 = vmatmul.bf16.gmra.mxu0 %v1508
    %v1692 = vpop.f32.mrf.mxu0
    %v1693 = vadd.f32 0.0, %v1692
    %v1694 = vpop.f32.mrf.mxu0
    %v1695 = vadd.f32 0.0, %v1694
    %1696 = vdwg.mxu0
    %1697 = vmatpush.bf16.msra.mxu0 %v1644
    %1698 = vmatpush.bf16.msra.mxu0 %v1641
    %1699 = vmatpush.bf16.msra.mxu0 %v1638
    %1700 = vmatpush.bf16.msra.mxu0 %v1635
    %1701 = vmatpush.bf16.msra.mxu0 %v1632
    %1702 = vmatpush.bf16.msra.mxu0 %v1629
    %1703 = vmatpush.bf16.msra.mxu0 %v1626
    %1704 = vmatpush.bf16.msra.mxu0 %v1623
    %1705 = vmatmul.bf16.gmra.mxu0 %v1508
    %v1706 = vpop.f32.mrf.mxu0
    %v1707 = vadd.f32 0.0, %v1706
    %v1708 = vpop.f32.mrf.mxu0
    %v1709 = vadd.f32 0.0, %v1708
    %1710 = vdwg.mxu0
    %v1711 = vld [vmem:[#allocation5 + $0x20] sm:$0xf]
    %v1712 = vld [vmem:[#allocation5 + $0x64] sm:$0xf]
    %v1713 = vld [vmem:[#allocation5 + $0xa8] sm:$0xf]
    %v1714 = vld [vmem:[#allocation5 + $0xec] sm:$0xf]
    %v1715 = vld [vmem:[#allocation5 + $0x130] sm:$0xf]
    %v1716 = vld [vmem:[#allocation5 + $0x174] sm:$0xf]
    %v1717 = vld [vmem:[#allocation5 + $0x1b8] sm:$0xf]
    %v1718 = vld [vmem:[#allocation5 + $0x1fc] sm:$0xf]
    %v1719 = vld [vmem:[#allocation5 + $0x240] sm:$0xf]
    %v1720 = vld [vmem:[#allocation5 + $0x284] sm:$0xf]
    %v1721 = vld [vmem:[#allocation5 + $0x2c8] sm:$0xf]
    %v1722 = vld [vmem:[#allocation5 + $0x30c] sm:$0xf]
    %v1723 = vld [vmem:[#allocation5 + $0x350] sm:$0xf]
    %v1724 = vld [vmem:[#allocation5 + $0x394] sm:$0xf]
    %v1725 = vld [vmem:[#allocation5 + $0x3d8] sm:$0xf]
    %v1726 = vld [vmem:[#allocation5 + $0x41c] sm:$0xf]
    %v1727 = vpack.c.bf16 %v1679, %v1679
    %v1728 = vpack.c.bf16 %v1681, %v1681
    %v1729 = vpack.c.bf16 %v1693, %v1693
    %v1730 = vpack.c.bf16 %v1695, %v1695
    %v1731 = vpack.c.bf16 %v1707, %v1707
    %v1732 = vpack.c.bf16 %v1709, %v1709
    %v1733 = vunpack.c.l.bf16 %v1727
    %v1734 = vunpack.c.l.bf16 %v1728
    %v1735 = vmul.f32 %v1733, %v84
    %v1736 = vmul.f32 %v1734, %v85
    %v1739 = vunpack.c.l.b16 %v1727
    %v1740 = vunpack.c.l.b16 %v1728
    %v1741 = vpack.c.b16 %v1740, %v1739
    %v1759 = vunpack.c.l.b16 %v1711
    %v1760 = vunpack.c.l.b16 %v1712
    %v1761 = vunpack.c.l.b16 %v1713
    %v1762 = vunpack.c.l.b16 %v1714
    %v1763 = vunpack.c.l.b16 %v1715
    %v1764 = vunpack.c.l.b16 %v1716
    %v1765 = vunpack.c.l.b16 %v1717
    %v1766 = vunpack.c.l.b16 %v1718
    %v1767 = vunpack.c.l.b16 %v1719
    %v1768 = vunpack.c.l.b16 %v1720
    %v1769 = vunpack.c.l.b16 %v1721
    %v1770 = vunpack.c.l.b16 %v1722
    %v1771 = vunpack.c.l.b16 %v1723
    %v1772 = vunpack.c.l.b16 %v1724
    %v1773 = vunpack.c.l.b16 %v1725
    %v1774 = vunpack.c.l.b16 %v1726
    %v1775 = vpack.c.b16 %v1760, %v1759
    %v1776 = vpack.c.b16 %v1762, %v1761
    %v1777 = vpack.c.b16 %v1764, %v1763
    %v1778 = vpack.c.b16 %v1766, %v1765
    %v1779 = vpack.c.b16 %v1768, %v1767
    %v1780 = vpack.c.b16 %v1770, %v1769
    %v1781 = vpack.c.b16 %v1772, %v1771
    %v1782 = vpack.c.b16 %v1774, %v1773
    %1791 = vmatpush.bf16.msra.mxu0 %v1782
    %1792 = vmatpush.bf16.msra.mxu0 %v1781
    %1793 = vmatpush.bf16.msra.mxu0 %v1780
    %1794 = vmatpush.bf16.msra.mxu0 %v1779
    %1795 = vmatpush.bf16.msra.mxu0 %v1778
    %1796 = vmatpush.bf16.msra.mxu0 %v1777
    %1797 = vmatpush.bf16.msra.mxu0 %v1776
    %1798 = vmatpush.bf16.msra.mxu0 %v1775
    %1799 = vmatmul.bf16.gmra.mxu0 %v1741
    %v1800 = vpop.f32.mrf.mxu0
    %v1801 = vadd.f32 0.0, %v1800
    %v1802 = vpop.f32.mrf.mxu0
    %v1803 = vadd.f32 0.0, %v1802
    %1804 = vdwg.mxu0
    %v1805 = vmul.f32 %v1801, %v86
    %v1806 = vmul.f32 %v1803, %v87
    %v1807 = vadd.f32 %v1735, %v1805
    %v1808 = vadd.f32 %v1736, %v1806
    %v1809 = vpack.c.bf16 %v1807, %v1807
    %v1810 = vpack.c.bf16 %v1808, %v1808
    %v1811 = vunpack.c.l.bf16 %v1729
    %v1812 = vunpack.c.l.bf16 %v1730
    %v1813 = vmul.f32 %v1811, %v84
    %v1814 = vmul.f32 %v1812, %v85
    %v1817 = vunpack.c.l.b16 %v1729
    %v1818 = vunpack.c.l.b16 %v1730
    %v1819 = vpack.c.b16 %v1818, %v1817
    %1821 = vmatpush.bf16.msra.mxu0 %v1782
    %1822 = vmatpush.bf16.msra.mxu0 %v1781
    %1823 = vmatpush.bf16.msra.mxu0 %v1780
    %1824 = vmatpush.bf16.msra.mxu0 %v1779
    %1825 = vmatpush.bf16.msra.mxu0 %v1778
    %1826 = vmatpush.bf16.msra.mxu0 %v1777
    %1827 = vmatpush.bf16.msra.mxu0 %v1776
    %1828 = vmatpush.bf16.msra.mxu0 %v1775
    %1829 = vmatmul.bf16.gmra.mxu0 %v1819
    %v1830 = vpop.f32.mrf.mxu0
    %v1831 = vadd.f32 0.0, %v1830
    %v1832 = vpop.f32.mrf.mxu0
    %v1833 = vadd.f32 0.0, %v1832
    %1834 = vdwg.mxu0
    %v1835 = vmul.f32 %v1831, %v86
    %v1836 = vmul.f32 %v1833, %v87
    %v1837 = vadd.f32 %v1813, %v1835
    %v1838 = vadd.f32 %v1814, %v1836
    %v1839 = vpack.c.bf16 %v1837, %v1837
    %v1840 = vpack.c.bf16 %v1838, %v1838
    %v1843 = vunpack.c.l.b16 %v1809
    %v1844 = vunpack.c.l.b16 %v1810
    %v1845 = vpack.c.b16 %v1844, %v1843
    %v1848 = vunpack.c.l.b16 %v1839
    %v1849 = vunpack.c.l.b16 %v1840
    %v1850 = vpack.c.b16 %v1849, %v1848
    %v1852 = vsel %vm362, %v1845, 0
    %v1855 = vsel %vm362, %v1850, 0
    %1857 = vmatpush.bf16.xpose.msra.mxu0 0
    %1858 = vmatpush.bf16.xpose.msra.mxu0 0
    %1859 = vmatpush.bf16.xpose.msra.mxu0 0
    %1860 = vmatpush.bf16.xpose.msra.mxu0 0
    %1861 = vmatpush.bf16.xpose.msra.mxu0 0
    %1862 = vmatpush.bf16.xpose.msra.mxu0 0
    %1863 = vmatpush.bf16.xpose.msra.mxu0 0
    %1864 = vmatpush.bf16.xpose.msra.mxu0 %v1855
    %1865 = vmatmul.bf16.gmra.mxu0 %v1852
    %v1866 = vpop.f32.mrf.mxu0
    %v1867 = vadd.f32 %v80, %v1866
    %v1868 = vpop.f32.mrf.mxu0
    %v1869 = vadd.f32 %v81, %v1868
    %1870 = vdwg.mxu0
    %v1871 = vsel %vm383, %v1867, -inf
    %1872 = vmax.xlane.f32.xlu0 %v1871
    %v1873 = vpop.xlane.xlu0 %1872
    %v1874 = vsel %vm383, %v1869, -inf
    %1875 = vmax.xlane.f32.xlu0 %v1874
    %v1876 = vpop.xlane.xlu0 %1875
    %v1877 = vsub.f32 %v1867, %v1873
    %v1878 = vsub.f32 %v1869, %v1876
    %v1879 = vmul.f32 %v1877, 1.442695
    %v1880 = vpow.pop %v1879
    %v1881 = vmul.f32 %v1878, 1.442695
    %v1882 = vpow.pop %v1881
    %v1883 = vsel %vm383, %v1880, 0.0
    %1884 = vadd.xlane.f32.xlu0 %v1883
    %v1885 = vpop.xlane.xlu0 %1884
    %v1886 = vsel %vm383, %v1882, 0.0
    %1887 = vadd.xlane.f32.xlu0 %v1886
    %v1888 = vpop.xlane.xlu0 %1887
    %v1889 = vrcp.pop %v1885
    %v1890 = vrcp.pop %v1888
    %v1891 = vmul.f32 %v1880, %v1889
    %v1892 = vmul.f32 %v1882, %v1890
    %v1893 = vpack.c.bf16 %v1892, %v1891
    %v1896 = vunpack.c.l.b16 %v1731
    %v1897 = vunpack.c.l.b16 %v1732
    %v1898 = vpack.c.b16 %v1897, %v1896
    %v1901 = vsel %vm383, %v1893, 0
    %1903 = vmatpush.bf16.msra.mxu0 0
    %1904 = vmatpush.bf16.msra.mxu0 0
    %1905 = vmatpush.bf16.msra.mxu0 0
    %1906 = vmatpush.bf16.msra.mxu0 0
    %1907 = vmatpush.bf16.msra.mxu0 0
    %1908 = vmatpush.bf16.msra.mxu0 0
    %1909 = vmatpush.bf16.msra.mxu0 0
    %1910 = vmatpush.bf16.msra.mxu0 %v1898
    %1911 = vmatmul.bf16.gmra.mxu0 %v1901
    %v1912 = vpop.f32.mrf.mxu0
    %v1913 = vadd.f32 0.0, %v1912
    %v1914 = vpop.f32.mrf.mxu0
    %v1915 = vadd.f32 0.0, %v1914
    %1916 = vdwg.mxu0
    %v1917 = vpack.c.bf16 %v1915, %v1913
    %v1918 = vld [vmem:[#allocation5 + $0x30] sm:$0xf]
    %v1919 = vld [vmem:[#allocation5 + $0x74] sm:$0xf]
    %v1920 = vld [vmem:[#allocation5 + $0xb8] sm:$0xf]
    %v1921 = vld [vmem:[#allocation5 + $0xfc] sm:$0xf]
    %1922 = vrot.lane.b32.xlu0 %v1845, 96
    %v1923 = vpop.permute.xlu0 %1922
    %1924 = vrot.lane.b32.xlu0 %v1850, 96
    %v1925 = vpop.permute.xlu0 %1924
    %v1927 = vsel %vm362, %v1923, 0
    %v1930 = vsel %vm362, %v1925, 0
    %1932 = vmatpush.bf16.xpose.msra.mxu0 0
    %1933 = vmatpush.bf16.xpose.msra.mxu0 0
    %1934 = vmatpush.bf16.xpose.msra.mxu0 0
    %1935 = vmatpush.bf16.xpose.msra.mxu0 0
    %1936 = vmatpush.bf16.xpose.msra.mxu0 0
    %1937 = vmatpush.bf16.xpose.msra.mxu0 0
    %1938 = vmatpush.bf16.xpose.msra.mxu0 0
    %1939 = vmatpush.bf16.xpose.msra.mxu0 %v1930
    %1940 = vmatmul.bf16.gmra.mxu0 %v1927
    %v1941 = vpop.f32.mrf.mxu0
    %v1942 = vadd.f32 %v80, %v1941
    %v1943 = vpop.f32.mrf.mxu0
    %v1944 = vadd.f32 %v81, %v1943
    %1945 = vdwg.mxu0
    %v1946 = vsel %vm383, %v1942, -inf
    %1947 = vmax.xlane.f32.xlu0 %v1946
    %v1948 = vpop.xlane.xlu0 %1947
    %v1949 = vsel %vm383, %v1944, -inf
    %1950 = vmax.xlane.f32.xlu0 %v1949
    %v1951 = vpop.xlane.xlu0 %1950
    %v1952 = vsub.f32 %v1942, %v1948
    %v1953 = vsub.f32 %v1944, %v1951
    %v1954 = vmul.f32 %v1952, 1.442695
    %v1955 = vpow.pop %v1954
    %v1956 = vmul.f32 %v1953, 1.442695
    %v1957 = vpow.pop %v1956
    %v1958 = vsel %vm383, %v1955, 0.0
    %1959 = vadd.xlane.f32.xlu0 %v1958
    %v1960 = vpop.xlane.xlu0 %1959
    %v1961 = vsel %vm383, %v1957, 0.0
    %1962 = vadd.xlane.f32.xlu0 %v1961
    %v1963 = vpop.xlane.xlu0 %1962
    %v1964 = vrcp.pop %v1960
    %v1965 = vrcp.pop %v1963
    %v1966 = vmul.f32 %v1955, %v1964
    %v1967 = vmul.f32 %v1957, %v1965
    %v1968 = vpack.c.bf16 %v1967, %v1966
    %1969 = vrot.lane.b32.xlu0 %v1898, 96
    %v1970 = vpop.permute.xlu0 %1969
    %v1973 = vsel %vm383, %v1968, 0
    %1975 = vmatpush.bf16.msra.mxu0 0
    %1976 = vmatpush.bf16.msra.mxu0 0
    %1977 = vmatpush.bf16.msra.mxu0 0
    %1978 = vmatpush.bf16.msra.mxu0 0
    %1979 = vmatpush.bf16.msra.mxu0 0
    %1980 = vmatpush.bf16.msra.mxu0 0
    %1981 = vmatpush.bf16.msra.mxu0 0
    %1982 = vmatpush.bf16.msra.mxu0 %v1970
    %1983 = vmatmul.bf16.gmra.mxu0 %v1973
    %v1984 = vpop.f32.mrf.mxu0
    %v1985 = vadd.f32 0.0, %v1984
    %v1986 = vpop.f32.mrf.mxu0
    %v1987 = vadd.f32 0.0, %v1986
    %1988 = vdwg.mxu0
    %v1989 = vpack.c.bf16 %v1987, %v1985
    %v1990 = vld [vmem:[#allocation5 + $0x140] sm:$0xf]
    %v1991 = vld [vmem:[#allocation5 + $0x184] sm:$0xf]
    %v1992 = vld [vmem:[#allocation5 + $0x1c8] sm:$0xf]
    %v1993 = vld [vmem:[#allocation5 + $0x20c] sm:$0xf]
    %v1998 = vunpack.c.l.b16 %v1990
    %v1999 = vunpack.c.l.b16 %v1991
    %v2000 = vunpack.c.l.b16 %v1992
    %v2001 = vunpack.c.l.b16 %v1993
    %v2002 = vpack.c.b16 %v1999, %v1998
    %v2003 = vpack.c.b16 %v2001, %v2000
    %v2007 = vsel %vm362, %v1989, 0
    %2009 = vmatpush.bf16.msra.mxu0 0
    %2010 = vmatpush.bf16.msra.mxu0 0
    %2011 = vmatpush.bf16.msra.mxu0 0
    %2012 = vmatpush.bf16.msra.mxu0 0
    %2013 = vmatpush.bf16.msra.mxu0 0
    %2014 = vmatpush.bf16.msra.mxu0 0
    %2015 = vmatpush.bf16.msra.mxu0 %v2003
    %2016 = vmatpush.bf16.msra.mxu0 %v2002
    %2017 = vmatmul.bf16.gmra.mxu0 %v2007
    %v2018 = vpop.f32.mrf.mxu0
    %v2019 = vadd.f32 0.0, %v2018
    %v2020 = vpop.f32.mrf.mxu0
    %v2021 = vadd.f32 0.0, %v2020
    %2022 = vdwg.mxu0
    %v2027 = vunpack.c.l.b16 %v1918
    %v2028 = vunpack.c.l.b16 %v1919
    %v2029 = vunpack.c.l.b16 %v1920
    %v2030 = vunpack.c.l.b16 %v1921
    %v2031 = vpack.c.b16 %v2028, %v2027
    %v2032 = vpack.c.b16 %v2030, %v2029
    %v2036 = vsel %vm362, %v1917, 0
    %2038 = vmatpush.bf16.msra.mxu0 0
    %2039 = vmatpush.bf16.msra.mxu0 0
    %2040 = vmatpush.bf16.msra.mxu0 0
    %2041 = vmatpush.bf16.msra.mxu0 0
    %2042 = vmatpush.bf16.msra.mxu0 0
    %2043 = vmatpush.bf16.msra.mxu0 0
    %2044 = vmatpush.bf16.msra.mxu0 %v2032
    %2045 = vmatpush.bf16.msra.mxu0 %v2031
    %2046 = vmatmul.bf16.gmra.mxu0 %v2036
    %v2047 = vpop.f32.mrf.mxu0
    %v2048 = vadd.f32 %v2019, %v2047
    %v2049 = vpop.f32.mrf.mxu0
    %v2050 = vadd.f32 %v2021, %v2049
    %2051 = vdwg.mxu0
    %2052 = vrot.lane.b32.xlu0 %v1845, 64
    %v2053 = vpop.permute.xlu0 %2052
    %2054 = vrot.lane.b32.xlu0 %v1850, 64
    %v2055 = vpop.permute.xlu0 %2054
    %v2057 = vsel %vm362, %v2053, 0
    %v2060 = vsel %vm362, %v2055, 0
    %2062 = vmatpush.bf16.xpose.msra.mxu0 0
    %2063 = vmatpush.bf16.xpose.msra.mxu0 0
    %2064 = vmatpush.bf16.xpose.msra.mxu0 0
    %2065 = vmatpush.bf16.xpose.msra.mxu0 0
    %2066 = vmatpush.bf16.xpose.msra.mxu0 0
    %2067 = vmatpush.bf16.xpose.msra.mxu0 0
    %2068 = vmatpush.bf16.xpose.msra.mxu0 0
    %2069 = vmatpush.bf16.xpose.msra.mxu0 %v2060
    %2070 = vmatmul.bf16.gmra.mxu0 %v2057
    %v2071 = vpop.f32.mrf.mxu0
    %v2072 = vadd.f32 %v80, %v2071
    %v2073 = vpop.f32.mrf.mxu0
    %v2074 = vadd.f32 %v81, %v2073
    %2075 = vdwg.mxu0
    %v2076 = vsel %vm383, %v2072, -inf
    %2077 = vmax.xlane.f32.xlu0 %v2076
    %v2078 = vpop.xlane.xlu0 %2077
    %v2079 = vsel %vm383, %v2074, -inf
    %2080 = vmax.xlane.f32.xlu0 %v2079
    %v2081 = vpop.xlane.xlu0 %2080
    %v2082 = vsub.f32 %v2072, %v2078
    %v2083 = vsub.f32 %v2074, %v2081
    %v2084 = vmul.f32 %v2082, 1.442695
    %v2085 = vpow.pop %v2084
    %v2086 = vmul.f32 %v2083, 1.442695
    %v2087 = vpow.pop %v2086
    %v2088 = vsel %vm383, %v2085, 0.0
    %2089 = vadd.xlane.f32.xlu0 %v2088
    %v2090 = vpop.xlane.xlu0 %2089
    %v2091 = vsel %vm383, %v2087, 0.0
    %2092 = vadd.xlane.f32.xlu0 %v2091
    %v2093 = vpop.xlane.xlu0 %2092
    %v2094 = vrcp.pop %v2090
    %v2095 = vrcp.pop %v2093
    %v2096 = vmul.f32 %v2085, %v2094
    %v2097 = vmul.f32 %v2087, %v2095
    %v2098 = vpack.c.bf16 %v2097, %v2096
    %2099 = vrot.lane.b32.xlu0 %v1898, 64
    %v2100 = vpop.permute.xlu0 %2099
    %v2103 = vsel %vm383, %v2098, 0
    %2105 = vmatpush.bf16.msra.mxu0 0
    %2106 = vmatpush.bf16.msra.mxu0 0
    %2107 = vmatpush.bf16.msra.mxu0 0
    %2108 = vmatpush.bf16.msra.mxu0 0
    %2109 = vmatpush.bf16.msra.mxu0 0
    %2110 = vmatpush.bf16.msra.mxu0 0
    %2111 = vmatpush.bf16.msra.mxu0 0
    %2112 = vmatpush.bf16.msra.mxu0 %v2100
    %2113 = vmatmul.bf16.gmra.mxu0 %v2103
    %v2114 = vpop.f32.mrf.mxu0
    %v2115 = vadd.f32 0.0, %v2114
    %v2116 = vpop.f32.mrf.mxu0
    %v2117 = vadd.f32 0.0, %v2116
    %2118 = vdwg.mxu0
    %v2119 = vpack.c.bf16 %v2117, %v2115
    %v2120 = vld [vmem:[#allocation5 + $0x250] sm:$0xf]
    %v2121 = vld [vmem:[#allocation5 + $0x294] sm:$0xf]
    %v2122 = vld [vmem:[#allocation5 + $0x2d8] sm:$0xf]
    %v2123 = vld [vmem:[#allocation5 + $0x31c] sm:$0xf]
    %v2128 = vunpack.c.l.b16 %v2120
    %v2129 = vunpack.c.l.b16 %v2121
    %v2130 = vunpack.c.l.b16 %v2122
    %v2131 = vunpack.c.l.b16 %v2123
    %v2132 = vpack.c.b16 %v2129, %v2128
    %v2133 = vpack.c.b16 %v2131, %v2130
    %v2137 = vsel %vm362, %v2119, 0
    %2139 = vmatpush.bf16.msra.mxu0 0
    %2140 = vmatpush.bf16.msra.mxu0 0
    %2141 = vmatpush.bf16.msra.mxu0 0
    %2142 = vmatpush.bf16.msra.mxu0 0
    %2143 = vmatpush.bf16.msra.mxu0 0
    %2144 = vmatpush.bf16.msra.mxu0 0
    %2145 = vmatpush.bf16.msra.mxu0 %v2133
    %2146 = vmatpush.bf16.msra.mxu0 %v2132
    %2147 = vmatmul.bf16.gmra.mxu0 %v2137
    %v2148 = vpop.f32.mrf.mxu0
    %v2149 = vadd.f32 0.0, %v2148
    %v2150 = vpop.f32.mrf.mxu0
    %v2151 = vadd.f32 0.0, %v2150
    %2152 = vdwg.mxu0
    %v2153 = vadd.f32 %v2048, %v2149
    %v2154 = vadd.f32 %v2050, %v2151
    %2155 = vrot.lane.b32.xlu0 %v1845, 32
    %v2156 = vpop.permute.xlu0 %2155
    %2157 = vrot.lane.b32.xlu0 %v1850, 32
    %v2158 = vpop.permute.xlu0 %2157
    %v2160 = vsel %vm362, %v2156, 0
    %v2163 = vsel %vm362, %v2158, 0
    %2165 = vmatpush.bf16.xpose.msra.mxu0 0
    %2166 = vmatpush.bf16.xpose.msra.mxu0 0
    %2167 = vmatpush.bf16.xpose.msra.mxu0 0
    %2168 = vmatpush.bf16.xpose.msra.mxu0 0
    %2169 = vmatpush.bf16.xpose.msra.mxu0 0
    %2170 = vmatpush.bf16.xpose.msra.mxu0 0
    %2171 = vmatpush.bf16.xpose.msra.mxu0 0
    %2172 = vmatpush.bf16.xpose.msra.mxu0 %v2163
    %2173 = vmatmul.bf16.gmra.mxu0 %v2160
    %v2174 = vpop.f32.mrf.mxu0
    %v2175 = vadd.f32 %v80, %v2174
    %v2176 = vpop.f32.mrf.mxu0
    %v2177 = vadd.f32 %v81, %v2176
    %2178 = vdwg.mxu0
    %v2179 = vsel %vm383, %v2175, -inf
    %2180 = vmax.xlane.f32.xlu0 %v2179
    %v2181 = vpop.xlane.xlu0 %2180
    %v2182 = vsel %vm383, %v2177, -inf
    %2183 = vmax.xlane.f32.xlu0 %v2182
    %v2184 = vpop.xlane.xlu0 %2183
    %v2185 = vsub.f32 %v2175, %v2181
    %v2186 = vsub.f32 %v2177, %v2184
    %v2187 = vmul.f32 %v2185, 1.442695
    %v2188 = vpow.pop %v2187
    %v2189 = vmul.f32 %v2186, 1.442695
    %v2190 = vpow.pop %v2189
    %v2191 = vsel %vm383, %v2188, 0.0
    %2192 = vadd.xlane.f32.xlu0 %v2191
    %v2193 = vpop.xlane.xlu0 %2192
    %v2194 = vsel %vm383, %v2190, 0.0
    %2195 = vadd.xlane.f32.xlu0 %v2194
    %v2196 = vpop.xlane.xlu0 %2195
    %v2197 = vrcp.pop %v2193
    %v2198 = vrcp.pop %v2196
    %v2199 = vmul.f32 %v2188, %v2197
    %v2200 = vmul.f32 %v2190, %v2198
    %v2201 = vpack.c.bf16 %v2200, %v2199
    %2202 = vrot.lane.b32.xlu0 %v1898, 32
    %v2203 = vpop.permute.xlu0 %2202
    %v2206 = vsel %vm383, %v2201, 0
    %2208 = vmatpush.bf16.msra.mxu0 0
    %2209 = vmatpush.bf16.msra.mxu0 0
    %2210 = vmatpush.bf16.msra.mxu0 0
    %2211 = vmatpush.bf16.msra.mxu0 0
    %2212 = vmatpush.bf16.msra.mxu0 0
    %2213 = vmatpush.bf16.msra.mxu0 0
    %2214 = vmatpush.bf16.msra.mxu0 0
    %2215 = vmatpush.bf16.msra.mxu0 %v2203
    %2216 = vmatmul.bf16.gmra.mxu0 %v2206
    %v2217 = vpop.f32.mrf.mxu0
    %v2218 = vadd.f32 0.0, %v2217
    %v2219 = vpop.f32.mrf.mxu0
    %v2220 = vadd.f32 0.0, %v2219
    %2221 = vdwg.mxu0
    %v2222 = vpack.c.bf16 %v2220, %v2218
    %v2223 = vld [vmem:[#allocation5 + $0x360] sm:$0xf]
    %v2224 = vld [vmem:[#allocation5 + $0x3a4] sm:$0xf]
    %v2225 = vld [vmem:[#allocation5 + $0x3e8] sm:$0xf]
    %v2226 = vld [vmem:[#allocation5 + $0x42c] sm:$0xf]
    %v2231 = vunpack.c.l.b16 %v2223
    %v2232 = vunpack.c.l.b16 %v2224
    %v2233 = vunpack.c.l.b16 %v2225
    %v2234 = vunpack.c.l.b16 %v2226
    %v2235 = vpack.c.b16 %v2232, %v2231
    %v2236 = vpack.c.b16 %v2234, %v2233
    %v2240 = vsel %vm362, %v2222, 0
    %2242 = vmatpush.bf16.msra.mxu0 0
    %2243 = vmatpush.bf16.msra.mxu0 0
    %2244 = vmatpush.bf16.msra.mxu0 0
    %2245 = vmatpush.bf16.msra.mxu0 0
    %2246 = vmatpush.bf16.msra.mxu0 0
    %2247 = vmatpush.bf16.msra.mxu0 0
    %2248 = vmatpush.bf16.msra.mxu0 %v2236
    %2249 = vmatpush.bf16.msra.mxu0 %v2235
    %2250 = vmatmul.bf16.gmra.mxu0 %v2240
    %v2251 = vpop.f32.mrf.mxu0
    %v2252 = vadd.f32 0.0, %v2251
    %v2253 = vpop.f32.mrf.mxu0
    %v2254 = vadd.f32 0.0, %v2253
    %2255 = vdwg.mxu0
    %v2256 = vadd.f32 %v2153, %v2252
    %v2257 = vadd.f32 %v2154, %v2254
    %v2258 = vadd.f32 %v1470, %v2256
    %v2259 = vadd.f32 %v1471, %v2257
    %v2260 = vmul.f32 %v2258, %v2258
    %v2261 = vmul.f32 %v2259, %v2259
    %2262 = vadd.xlane.f32.xlu0 %v2260
    %v2263 = vpop.xlane.xlu0 %2262
    %2264 = vadd.xlane.f32.xlu0 %v2261
    %v2265 = vpop.xlane.xlu0 %2264
    %v2266 = vmul.f32 %v2263, %v98
    %v2267 = vmul.f32 %v2265, %v98
    %v2268 = vadd.f32 %v2266, 1e-06
    %v2269 = vadd.f32 %v2267, 1e-06
    %v2270 = vrsqrt.pop %v2268
    %v2271 = vmul.f32 %v2270, %v2268
    %v2272 = vmul.f32 %v2271, %v2270
    %v2273 = vmul.f32 0.5, %v2272
    %v2274 = vsub.f32 1.5, %v2273
    %v2275 = vmul.f32 %v2270, %v2274
    %vm2276 = vweird.f32 %v2268
    %vm2277 = vweird.f32 %v2270
    %vm2278 = vmor %vm2276, %vm2277
    %v2279 = vsel %vm2278, %v2270, %v2275
    %v2280 = vrsqrt.pop %v2269
    %v2281 = vmul.f32 %v2280, %v2269
    %v2282 = vmul.f32 %v2281, %v2280
    %v2283 = vmul.f32 0.5, %v2282
    %v2284 = vsub.f32 1.5, %v2283
    %v2285 = vmul.f32 %v2280, %v2284
    %vm2286 = vweird.f32 %v2269
    %vm2287 = vweird.f32 %v2280
    %vm2288 = vmor %vm2286, %vm2287
    %v2289 = vsel %vm2288, %v2280, %v2285
    %v2290 = vmul.f32 %v2258, %v2279
    %v2291 = vmul.f32 %v2259, %v2289
    %v2292 = vld [vmem:[#allocation2 + $0x5] sm:$0x1]
    %v2293 = vperm.slane %v2292, 0
    %v2294 = vmul.f32 %v2290, %v2293
    %v2295 = vmul.f32 %v2291, %v2293
    %v2296 = vpack.c.bf16 %v2295, %v2294
    %v2297 = vld [vmem:[#allocation5 + $0x34] sm:$0xff]
    %v2298 = vld [vmem:[#allocation5 + $0x3c] sm:$0xff]
    %v2299 = vld [vmem:[#allocation5 + $0x78] sm:$0xff]
    %v2300 = vld [vmem:[#allocation5 + $0x80] sm:$0xff]
    %v2301 = vld [vmem:[#allocation5 + $0xbc] sm:$0xff]
    %v2302 = vld [vmem:[#allocation5 + $0xc4] sm:$0xff]
    %v2303 = vld [vmem:[#allocation5 + $0x100] sm:$0xff]
    %v2304 = vld [vmem:[#allocation5 + $0x108] sm:$0xff]
    %v2305 = vld [vmem:[#allocation5 + $0x144] sm:$0xff]
    %v2306 = vld [vmem:[#allocation5 + $0x14c] sm:$0xff]
    %v2307 = vld [vmem:[#allocation5 + $0x188] sm:$0xff]
    %v2308 = vld [vmem:[#allocation5 + $0x190] sm:$0xff]
    %v2309 = vld [vmem:[#allocation5 + $0x1cc] sm:$0xff]
    %v2310 = vld [vmem:[#allocation5 + $0x1d4] sm:$0xff]
    %v2311 = vld [vmem:[#allocation5 + $0x210] sm:$0xff]
    %v2312 = vld [vmem:[#allocation5 + $0x218] sm:$0xff]
    %v2313 = vld [vmem:[#allocation5 + $0x254] sm:$0xff]
    %v2314 = vld [vmem:[#allocation5 + $0x25c] sm:$0xff]
    %v2315 = vld [vmem:[#allocation5 + $0x298] sm:$0xff]
    %v2316 = vld [vmem:[#allocation5 + $0x2a0] sm:$0xff]
    %v2317 = vld [vmem:[#allocation5 + $0x2dc] sm:$0xff]
    %v2318 = vld [vmem:[#allocation5 + $0x2e4] sm:$0xff]
    %v2319 = vld [vmem:[#allocation5 + $0x320] sm:$0xff]
    %v2320 = vld [vmem:[#allocation5 + $0x328] sm:$0xff]
    %v2321 = vld [vmem:[#allocation5 + $0x364] sm:$0xff]
    %v2322 = vld [vmem:[#allocation5 + $0x36c] sm:$0xff]
    %v2323 = vld [vmem:[#allocation5 + $0x3a8] sm:$0xff]
    %v2324 = vld [vmem:[#allocation5 + $0x3b0] sm:$0xff]
    %v2325 = vld [vmem:[#allocation5 + $0x3ec] sm:$0xff]
    %v2326 = vld [vmem:[#allocation5 + $0x3f4] sm:$0xff]
    %v2327 = vld [vmem:[#allocation5 + $0x430] sm:$0xff]
    %v2328 = vld [vmem:[#allocation5 + $0x438] sm:$0xff]
    %v2361 = vunpack.c.l.b16 %v2297
    %v2362 = vunpack.c.h.b16 %v2297
    %v2363 = vunpack.c.l.b16 %v2298
    %v2364 = vunpack.c.h.b16 %v2298
    %v2365 = vunpack.c.l.b16 %v2299
    %v2366 = vunpack.c.h.b16 %v2299
    %v2367 = vunpack.c.l.b16 %v2300
    %v2368 = vunpack.c.h.b16 %v2300
    %v2369 = vunpack.c.l.b16 %v2301
    %v2370 = vunpack.c.h.b16 %v2301
    %v2371 = vunpack.c.l.b16 %v2302
    %v2372 = vunpack.c.h.b16 %v2302
    %v2373 = vunpack.c.l.b16 %v2303
    %v2374 = vunpack.c.h.b16 %v2303
    %v2375 = vunpack.c.l.b16 %v2304
    %v2376 = vunpack.c.h.b16 %v2304
    %v2377 = vunpack.c.l.b16 %v2305
    %v2378 = vunpack.c.h.b16 %v2305
    %v2379 = vunpack.c.l.b16 %v2306
    %v2380 = vunpack.c.h.b16 %v2306
    %v2381 = vunpack.c.l.b16 %v2307
    %v2382 = vunpack.c.h.b16 %v2307
    %v2383 = vunpack.c.l.b16 %v2308
    %v2384 = vunpack.c.h.b16 %v2308
    %v2385 = vunpack.c.l.b16 %v2309
    %v2386 = vunpack.c.h.b16 %v2309
    %v2387 = vunpack.c.l.b16 %v2310
    %v2388 = vunpack.c.h.b16 %v2310
    %v2389 = vunpack.c.l.b16 %v2311
    %v2390 = vunpack.c.h.b16 %v2311
    %v2391 = vunpack.c.l.b16 %v2312
    %v2392 = vunpack.c.h.b16 %v2312
    %v2393 = vunpack.c.l.b16 %v2313
    %v2394 = vunpack.c.h.b16 %v2313
    %v2395 = vunpack.c.l.b16 %v2314
    %v2396 = vunpack.c.h.b16 %v2314
    %v2397 = vunpack.c.l.b16 %v2315
    %v2398 = vunpack.c.h.b16 %v2315
    %v2399 = vunpack.c.l.b16 %v2316
    %v2400 = vunpack.c.h.b16 %v2316
    %v2401 = vunpack.c.l.b16 %v2317
    %v2402 = vunpack.c.h.b16 %v2317
    %v2403 = vunpack.c.l.b16 %v2318
    %v2404 = vunpack.c.h.b16 %v2318
    %v2405 = vunpack.c.l.b16 %v2319
    %v2406 = vunpack.c.h.b16 %v2319
    %v2407 = vunpack.c.l.b16 %v2320
    %v2408 = vunpack.c.h.b16 %v2320
    %v2409 = vunpack.c.l.b16 %v2321
    %v2410 = vunpack.c.h.b16 %v2321
    %v2411 = vunpack.c.l.b16 %v2322
    %v2412 = vunpack.c.h.b16 %v2322
    %v2413 = vunpack.c.l.b16 %v2323
    %v2414 = vunpack.c.h.b16 %v2323
    %v2415 = vunpack.c.l.b16 %v2324
    %v2416 = vunpack.c.h.b16 %v2324
    %v2417 = vunpack.c.l.b16 %v2325
    %v2418 = vunpack.c.h.b16 %v2325
    %v2419 = vunpack.c.l.b16 %v2326
    %v2420 = vunpack.c.h.b16 %v2326
    %v2421 = vunpack.c.l.b16 %v2327
    %v2422 = vunpack.c.h.b16 %v2327
    %v2423 = vunpack.c.l.b16 %v2328
    %v2424 = vunpack.c.h.b16 %v2328
    %v2425 = vpack.c.b16 %v2365, %v2361
    %v2426 = vpack.c.b16 %v2366, %v2362
    %v2427 = vpack.c.b16 %v2367, %v2363
    %v2428 = vpack.c.b16 %v2368, %v2364
    %v2429 = vpack.c.b16 %v2373, %v2369
    %v2430 = vpack.c.b16 %v2374, %v2370
    %v2431 = vpack.c.b16 %v2375, %v2371
    %v2432 = vpack.c.b16 %v2376, %v2372
    %v2433 = vpack.c.b16 %v2381, %v2377
    %v2434 = vpack.c.b16 %v2382, %v2378
    %v2435 = vpack.c.b16 %v2383, %v2379
    %v2436 = vpack.c.b16 %v2384, %v2380
    %v2437 = vpack.c.b16 %v2389, %v2385
    %v2438 = vpack.c.b16 %v2390, %v2386
    %v2439 = vpack.c.b16 %v2391, %v2387
    %v2440 = vpack.c.b16 %v2392, %v2388
    %v2441 = vpack.c.b16 %v2397, %v2393
    %v2442 = vpack.c.b16 %v2398, %v2394
    %v2443 = vpack.c.b16 %v2399, %v2395
    %v2444 = vpack.c.b16 %v2400, %v2396
    %v2445 = vpack.c.b16 %v2405, %v2401
    %v2446 = vpack.c.b16 %v2406, %v2402
    %v2447 = vpack.c.b16 %v2407, %v2403
    %v2448 = vpack.c.b16 %v2408, %v2404
    %v2449 = vpack.c.b16 %v2413, %v2409
    %v2450 = vpack.c.b16 %v2414, %v2410
    %v2451 = vpack.c.b16 %v2415, %v2411
    %v2452 = vpack.c.b16 %v2416, %v2412
    %v2453 = vpack.c.b16 %v2421, %v2417
    %v2454 = vpack.c.b16 %v2422, %v2418
    %v2455 = vpack.c.b16 %v2423, %v2419
    %v2456 = vpack.c.b16 %v2424, %v2420
    %2489 = vmatpush.bf16.msra.mxu0 %v2453
    %2490 = vmatpush.bf16.msra.mxu0 %v2449
    %2491 = vmatpush.bf16.msra.mxu0 %v2445
    %2492 = vmatpush.bf16.msra.mxu0 %v2441
    %2493 = vmatpush.bf16.msra.mxu0 %v2437
    %2494 = vmatpush.bf16.msra.mxu0 %v2433
    %2495 = vmatpush.bf16.msra.mxu0 %v2429
    %2496 = vmatpush.bf16.msra.mxu0 %v2425
    %2497 = vmatmul.bf16.gmra.mxu0 %v2296
    %v2498 = vpop.f32.mrf.mxu0
    %v2499 = vadd.f32 0.0, %v2498
    %v2500 = vpop.f32.mrf.mxu0
    %v2501 = vadd.f32 0.0, %v2500
    %2502 = vdwg.mxu0
    %2503 = vmatpush.bf16.msra.mxu0 %v2454
    %2504 = vmatpush.bf16.msra.mxu0 %v2450
    %2505 = vmatpush.bf16.msra.mxu0 %v2446
    %2506 = vmatpush.bf16.msra.mxu0 %v2442
    %2507 = vmatpush.bf16.msra.mxu0 %v2438
    %2508 = vmatpush.bf16.msra.mxu0 %v2434
    %2509 = vmatpush.bf16.msra.mxu0 %v2430
    %2510 = vmatpush.bf16.msra.mxu0 %v2426
    %2511 = vmatmul.bf16.gmra.mxu0 %v2296
    %v2512 = vpop.f32.mrf.mxu0
    %v2513 = vadd.f32 0.0, %v2512
    %v2514 = vpop.f32.mrf.mxu0
    %v2515 = vadd.f32 0.0, %v2514
    %2516 = vdwg.mxu0
    %2517 = vmatpush.bf16.msra.mxu0 %v2455
    %2518 = vmatpush.bf16.msra.mxu0 %v2451
    %2519 = vmatpush.bf16.msra.mxu0 %v2447
    %2520 = vmatpush.bf16.msra.mxu0 %v2443
    %2521 = vmatpush.bf16.msra.mxu0 %v2439
    %2522 = vmatpush.bf16.msra.mxu0 %v2435
    %2523 = vmatpush.bf16.msra.mxu0 %v2431
    %2524 = vmatpush.bf16.msra.mxu0 %v2427
    %2525 = vmatmul.bf16.gmra.mxu0 %v2296
    %v2526 = vpop.f32.mrf.mxu0
    %v2527 = vadd.f32 0.0, %v2526
    %v2528 = vpop.f32.mrf.mxu0
    %v2529 = vadd.f32 0.0, %v2528
    %2530 = vdwg.mxu0
    %2531 = vmatpush.bf16.msra.mxu0 %v2456
    %2532 = vmatpush.bf16.msra.mxu0 %v2452
    %2533 = vmatpush.bf16.msra.mxu0 %v2448
    %2534 = vmatpush.bf16.msra.mxu0 %v2444
    %2535 = vmatpush.bf16.msra.mxu0 %v2440
    %2536 = vmatpush.bf16.msra.mxu0 %v2436
    %2537 = vmatpush.bf16.msra.mxu0 %v2432
    %2538 = vmatpush.bf16.msra.mxu0 %v2428
    %2539 = vmatmul.bf16.gmra.mxu0 %v2296
    %v2540 = vpop.f32.mrf.mxu0
    %v2541 = vadd.f32 0.0, %v2540
    %v2542 = vpop.f32.mrf.mxu0
    %v2543 = vadd.f32 0.0, %v2542
    %2544 = vdwg.mxu0
    %v2545 = vxor.u32 %v2499, 2147483648
    %v2546 = vxor.u32 %v2513, 2147483648
    %v2547 = vxor.u32 %v2501, 2147483648
    %v2548 = vxor.u32 %v2515, 2147483648
    %v2549 = vmul.f32 %v2545, 1.442695
    %v2550 = vpow.pop %v2549
    %v2551 = vmul.f32 %v2546, 1.442695
    %v2552 = vpow.pop %v2551
    %v2553 = vmul.f32 %v2547, 1.442695
    %v2554 = vpow.pop %v2553
    %v2555 = vmul.f32 %v2548, 1.442695
    %v2556 = vpow.pop %v2555
    %v2557 = vadd.f32 %v2550, 1.0
    %v2558 = vadd.f32 %v2552, 1.0
    %v2559 = vadd.f32 %v2554, 1.0
    %v2560 = vadd.f32 %v2556, 1.0
    %v2561 = vrcp.pop %v2557
    %v2562 = vmul.f32 %v2557, %v2561
    %v2563 = vsub.f32 1.0, %v2562
    %v2564 = vmul.f32 %v2561, %v2563
    %v2565 = vadd.f32 %v2561, %v2564
    %vm2566 = vweird.f32 %v2557
    %vm2567 = vweird.f32 %v2561
    %vm2568 = vmor %vm2566, %vm2567
    %v2569 = vsel %vm2568, %v2561, %v2565
    %v2570 = vand.u32 2147483647, %v2557
    %vm2571 = vcmp.eq.f32.partialorder %v2570, 8.507059e+37
    %v2572 = vand.u32 %v2557, 2147483648
    %v2573 = vor.u32 1.1754944e-38, %v2572
    %v2574 = vsel %vm2571, %v2573, %v2569
    %v2575 = vmul.f32 1.0, %v2574
    %v2576 = vrcp.pop %v2558
    %v2577 = vmul.f32 %v2558, %v2576
    %v2578 = vsub.f32 1.0, %v2577
    %v2579 = vmul.f32 %v2576, %v2578
    %v2580 = vadd.f32 %v2576, %v2579
    %vm2581 = vweird.f32 %v2558
    %vm2582 = vweird.f32 %v2576
    %vm2583 = vmor %vm2581, %vm2582
    %v2584 = vsel %vm2583, %v2576, %v2580
    %v2585 = vand.u32 2147483647, %v2558
    %vm2586 = vcmp.eq.f32.partialorder %v2585, 8.507059e+37
    %v2587 = vand.u32 %v2558, 2147483648
    %v2588 = vor.u32 1.1754944e-38, %v2587
    %v2589 = vsel %vm2586, %v2588, %v2584
    %v2590 = vmul.f32 1.0, %v2589
    %v2591 = vrcp.pop %v2559
    %v2592 = vmul.f32 %v2559, %v2591
    %v2593 = vsub.f32 1.0, %v2592
    %v2594 = vmul.f32 %v2591, %v2593
    %v2595 = vadd.f32 %v2591, %v2594
    %vm2596 = vweird.f32 %v2559
    %vm2597 = vweird.f32 %v2591
    %vm2598 = vmor %vm2596, %vm2597
    %v2599 = vsel %vm2598, %v2591, %v2595
    %v2600 = vand.u32 2147483647, %v2559
    %vm2601 = vcmp.eq.f32.partialorder %v2600, 8.507059e+37
    %v2602 = vand.u32 %v2559, 2147483648
    %v2603 = vor.u32 1.1754944e-38, %v2602
    %v2604 = vsel %vm2601, %v2603, %v2599
    %v2605 = vmul.f32 1.0, %v2604
    %v2606 = vrcp.pop %v2560
    %v2607 = vmul.f32 %v2560, %v2606
    %v2608 = vsub.f32 1.0, %v2607
    %v2609 = vmul.f32 %v2606, %v2608
    %v2610 = vadd.f32 %v2606, %v2609
    %vm2611 = vweird.f32 %v2560
    %vm2612 = vweird.f32 %v2606
    %vm2613 = vmor %vm2611, %vm2612
    %v2614 = vsel %vm2613, %v2606, %v2610
    %v2615 = vand.u32 2147483647, %v2560
    %vm2616 = vcmp.eq.f32.partialorder %v2615, 8.507059e+37
    %v2617 = vand.u32 %v2560, 2147483648
    %v2618 = vor.u32 1.1754944e-38, %v2617
    %v2619 = vsel %vm2616, %v2618, %v2614
    %v2620 = vmul.f32 1.0, %v2619
    %v2621 = vmul.f32 %v2499, %v2575
    %v2622 = vmul.f32 %v2513, %v2590
    %v2623 = vmul.f32 %v2501, %v2605
    %v2624 = vmul.f32 %v2515, %v2620
    %v2625 = vmul.f32 %v2621, %v2527
    %v2626 = vmul.f32 %v2622, %v2541
    %v2627 = vmul.f32 %v2623, %v2529
    %v2628 = vmul.f32 %v2624, %v2543
    %v2629 = vpack.c.bf16 %v2627, %v2625
    %v2630 = vpack.c.bf16 %v2628, %v2626
    %v2631 = vld [vmem:[#allocation7 + $0x100] sm:$0xf]
    %v2632 = vld [vmem:[#allocation7 + $0x104] sm:$0xf]
    %v2633 = vld [vmem:[#allocation7 + $0x108] sm:$0xf]
    %v2634 = vld [vmem:[#allocation7 + $0x10c] sm:$0xf]
    %v2635 = vld [vmem:[#allocation7 + $0x110] sm:$0xf]
    %v2636 = vld [vmem:[#allocation7 + $0x114] sm:$0xf]
    %v2637 = vld [vmem:[#allocation7 + $0x118] sm:$0xf]
    %v2638 = vld [vmem:[#allocation7 + $0x11c] sm:$0xf]
    %v2639 = vld [vmem:[#allocation7 + $0x120] sm:$0xf]
    %v2640 = vld [vmem:[#allocation7 + $0x124] sm:$0xf]
    %v2641 = vld [vmem:[#allocation7 + $0x128] sm:$0xf]
    %v2642 = vld [vmem:[#allocation7 + $0x12c] sm:$0xf]
    %v2643 = vld [vmem:[#allocation7 + $0x130] sm:$0xf]
    %v2644 = vld [vmem:[#allocation7 + $0x134] sm:$0xf]
    %v2645 = vld [vmem:[#allocation7 + $0x138] sm:$0xf]
    %v2646 = vld [vmem:[#allocation7 + $0x13c] sm:$0xf]
    %v2647 = vld [vmem:[#allocation7 + $0x140] sm:$0xf]
    %v2648 = vld [vmem:[#allocation7 + $0x144] sm:$0xf]
    %v2649 = vld [vmem:[#allocation7 + $0x148] sm:$0xf]
    %v2650 = vld [vmem:[#allocation7 + $0x14c] sm:$0xf]
    %v2651 = vld [vmem:[#allocation7 + $0x150] sm:$0xf]
    %v2652 = vld [vmem:[#allocation7 + $0x154] sm:$0xf]
    %v2653 = vld [vmem:[#allocation7 + $0x158] sm:$0xf]
    %v2654 = vld [vmem:[#allocation7 + $0x15c] sm:$0xf]
    %v2655 = vld [vmem:[#allocation7 + $0x160] sm:$0xf]
    %v2656 = vld [vmem:[#allocation7 + $0x164] sm:$0xf]
    %v2657 = vld [vmem:[#allocation7 + $0x168] sm:$0xf]
    %v2658 = vld [vmem:[#allocation7 + $0x16c] sm:$0xf]
    %v2659 = vld [vmem:[#allocation7 + $0x170] sm:$0xf]
    %v2660 = vld [vmem:[#allocation7 + $0x174] sm:$0xf]
    %v2661 = vld [vmem:[#allocation7 + $0x178] sm:$0xf]
    %v2662 = vld [vmem:[#allocation7 + $0x17c] sm:$0xf]
    %v2695 = vunpack.c.l.b16 %v2631
    %v2696 = vunpack.c.l.b16 %v2632
    %v2697 = vunpack.c.l.b16 %v2633
    %v2698 = vunpack.c.l.b16 %v2634
    %v2699 = vunpack.c.l.b16 %v2635
    %v2700 = vunpack.c.l.b16 %v2636
    %v2701 = vunpack.c.l.b16 %v2637
    %v2702 = vunpack.c.l.b16 %v2638
    %v2703 = vunpack.c.l.b16 %v2639
    %v2704 = vunpack.c.l.b16 %v2640
    %v2705 = vunpack.c.l.b16 %v2641
    %v2706 = vunpack.c.l.b16 %v2642
    %v2707 = vunpack.c.l.b16 %v2643
    %v2708 = vunpack.c.l.b16 %v2644
    %v2709 = vunpack.c.l.b16 %v2645
    %v2710 = vunpack.c.l.b16 %v2646
    %v2711 = vunpack.c.l.b16 %v2647
    %v2712 = vunpack.c.l.b16 %v2648
    %v2713 = vunpack.c.l.b16 %v2649
    %v2714 = vunpack.c.l.b16 %v2650
    %v2715 = vunpack.c.l.b16 %v2651
    %v2716 = vunpack.c.l.b16 %v2652
    %v2717 = vunpack.c.l.b16 %v2653
    %v2718 = vunpack.c.l.b16 %v2654
    %v2719 = vunpack.c.l.b16 %v2655
    %v2720 = vunpack.c.l.b16 %v2656
    %v2721 = vunpack.c.l.b16 %v2657
    %v2722 = vunpack.c.l.b16 %v2658
    %v2723 = vunpack.c.l.b16 %v2659
    %v2724 = vunpack.c.l.b16 %v2660
    %v2725 = vunpack.c.l.b16 %v2661
    %v2726 = vunpack.c.l.b16 %v2662
    %v2727 = vpack.c.b16 %v2696, %v2695
    %v2728 = vpack.c.b16 %v2698, %v2697
    %v2729 = vpack.c.b16 %v2700, %v2699
    %v2730 = vpack.c.b16 %v2702, %v2701
    %v2731 = vpack.c.b16 %v2704, %v2703
    %v2732 = vpack.c.b16 %v2706, %v2705
    %v2733 = vpack.c.b16 %v2708, %v2707
    %v2734 = vpack.c.b16 %v2710, %v2709
    %v2735 = vpack.c.b16 %v2712, %v2711
    %v2736 = vpack.c.b16 %v2714, %v2713
    %v2737 = vpack.c.b16 %v2716, %v2715
    %v2738 = vpack.c.b16 %v2718, %v2717
    %v2739 = vpack.c.b16 %v2720, %v2719
    %v2740 = vpack.c.b16 %v2722, %v2721
    %v2741 = vpack.c.b16 %v2724, %v2723
    %v2742 = vpack.c.b16 %v2726, %v2725
    %2759 = vmatpush.bf16.msra.mxu0 %v2734
    %2760 = vmatpush.bf16.msra.mxu0 %v2733
    %2761 = vmatpush.bf16.msra.mxu0 %v2732
    %2762 = vmatpush.bf16.msra.mxu0 %v2731
    %2763 = vmatpush.bf16.msra.mxu0 %v2730
    %2764 = vmatpush.bf16.msra.mxu0 %v2729
    %2765 = vmatpush.bf16.msra.mxu0 %v2728
    %2766 = vmatpush.bf16.msra.mxu0 %v2727
    %2767 = vmatmul.bf16.gmra.mxu0 %v2629
    %v2768 = vpop.f32.mrf.mxu0
    %v2769 = vadd.f32 0.0, %v2768
    %v2770 = vpop.f32.mrf.mxu0
    %v2771 = vadd.f32 0.0, %v2770
    %2772 = vdwg.mxu0
    %2773 = vmatpush.bf16.msra.mxu0 %v2742
    %2774 = vmatpush.bf16.msra.mxu0 %v2741
    %2775 = vmatpush.bf16.msra.mxu0 %v2740
    %2776 = vmatpush.bf16.msra.mxu0 %v2739
    %2777 = vmatpush.bf16.msra.mxu0 %v2738
    %2778 = vmatpush.bf16.msra.mxu0 %v2737
    %2779 = vmatpush.bf16.msra.mxu0 %v2736
    %2780 = vmatpush.bf16.msra.mxu0 %v2735
    %2781 = vmatmul.bf16.gmra.mxu0 %v2630
    %v2782 = vpop.f32.mrf.mxu0
    %v2783 = vadd.f32 %v2769, %v2782
    %v2784 = vpop.f32.mrf.mxu0
    %v2785 = vadd.f32 %v2771, %v2784
    %2786 = vdwg.mxu0
    %v2787 = vadd.f32 %v2258, %v2783
    %v2788 = vadd.f32 %v2259, %v2785
    %2789 = vst [vmem:[#allocation8] sm:$0xff] %v2787
    %2790 = vst [vmem:[#allocation8 + $0x8] sm:$0xff] %v2788
    // Predicated region
    $region42: #{tpu_custom_call.1} parent=1 // pred_check
      _
    $region43: #{tpu_custom_call.1} parent=1 // pred_check_branch
      %2792 = sbr.rel (0) target = $region45
    $region44: #{tpu_custom_call.1} parent=1 // pred_region
      %2794 = vsyncadd [#allocation4], 0
      %s2795 = sshll.u32 [#allocation8], 4
      %s2796 = int_to_ptr.vmem [resolvable:$true] %s2795
      %s2797 = sshll.u32 %s7, 4
      %s2798 = int_to_ptr.hbm [resolvable:$true] %s2797
      %2803 = dma.vmem_to_hbm [thread:$0]  %s2796, 256, %s2798, [#allocation4], 128, 128, 8
    $region45: #{tpu_custom_call.1} parent=1 // pred_fallthru
      _
    // Predicated region
    $region46: #{tpu_custom_call.1} parent=1 // pred_check
      _
    $region47: #{tpu_custom_call.1} parent=1 // pred_check_branch
      %2805 = sbr.rel (0) target = $region49
    $region48: #{tpu_custom_call.1} parent=1 // pred_region
      %2807 = dma.done [#allocation4], 256
    $region49: #{tpu_custom_call.1} parent=1 // pred_fallthru
      _
    %2808 = vsyncpa [#allocation3], 1
    %2809 = vsyncpa [#allocation6], 1
    %2810 = vsyncpa [#allocation4], 1

</llo_original>
